<compile_context>
chip_gen: v5e
topology: v5e:2x2
jax: 0.10.0
libtpu: 0.0.40
codegen_flags: <defaults>
</compile_context>

<pallas_src>
import jax
import jax.numpy as jnp
from jax.experimental import pallas as pl
from jax.experimental.pallas import tpu as pltpu

_BN_EPS = 1e-5
_LANES = 128
_K = 5            # conv kernel size
_S = _K + 1       # 6x6 super-window = 2x2 pool of 5x5 conv windows


def _round_up(x, m):
    return -(-x // m) * m


# ---------------------------------------------------------------------------
# Generation-gated VMEM budgets & tile selection
# ---------------------------------------------------------------------------
def _vmem_budgets():
    """(per-kernel tile budget, scoped-vmem limit) gated on the TPU generation."""
    try:
        cap = int(pltpu.get_tpu_info().vmem_capacity_bytes)
    except Exception:
        cap = 64 << 20                        # v7x-safe fallback
    budget = min(cap // 8, 16 << 20)          # working-set target for M tiles
    limit = min(cap // 2, 64 << 20)           # handed to Mosaic via CompilerParams
    return int(budget), int(limit)


def _pick_tile(m, row_bytes, budget, gran=16, max_tile=1024):
    """Row-tile: multiple of `gran`, fits `budget` double-buffered, preferably an
    exact divisor of m (no row padding) that yields >= 2 grid steps (software
    pipelining + both v7x TensorCores)."""
    limit = (max(budget, 0) // max(row_bytes, 1)) // gran * gran
    limit = max(gran, min(max_tile, limit))
    best = 0
    t = gran
    hi = min(limit, m // 2)
    while t <= hi:
        if m % t == 0:
            best = t
        t += gran
    if best:
        return best
    mg = _round_up(m, gran)
    t = min(limit, mg)
    if mg >= 2 * gran:
        t = min(t, _round_up(-(-mg // 2), gran))
    return max(t, gran)


# ---------------------------------------------------------------------------
# Pallas kernels
# ---------------------------------------------------------------------------
def _conv_pool_kernel(p_ref, w_ref, b_ref, o_ref):
    """Fused conv(5x5) + folded-BN + bias + ReLU + maxpool(2x2) as ONE GEMM.

    p_ref : (tm, Kp)     bf16 stride-2 im2col patches of 6x6 windows, rows=(n,ph,pw)
    w_ref : (Kp, 4*128)  bf16 BN-folded super-kernel weights; one 128-lane group
                         per 2x2-pool parity (output channels zero-padded to 128)
    b_ref : (1, 128)     f32  BN-folded bias (shared across parities)
    o_ref : (tm, 128)    bf16 pooled activations
    """
    y = jnp.dot(p_ref[...], w_ref[...], preferred_element_type=jnp.float32)  # (tm, 512)
    m = y[:, 0:_LANES]
    for p in range(1, 4):                       # max over the 4 pool parities
        m = jnp.maximum(m, y[:, p * _LANES:(p + 1) * _LANES])
    # bias + ReLU deferred past the pool max (exact: max is monotone, bias shared)
    o_ref[...] = jnp.maximum(m + b_ref[...], 0.0).astype(o_ref.dtype)


def _predictor_kernel(x_ref, w1_ref, b1_ref, w2_ref, b2_ref, w3_ref, b3_ref, o_ref):
    """fc1+BN+ReLU -> fc2+BN+ReLU -> fc3; intermediates never leave the chip."""
    h = jnp.dot(x_ref[...], w1_ref[...], preferred_element_type=jnp.float32)
    h = jnp.maximum(h + b1_ref[...], 0.0)
    h = jnp.dot(h.astype(jnp.bfloat16), w2_ref[...], preferred_element_type=jnp.float32)
    h = jnp.maximum(h + b2_ref[...], 0.0)
    h = jnp.dot(h.astype(jnp.bfloat16), w3_ref[...], preferred_element_type=jnp.float32)
    o_ref[...] = h + b3_ref[...]


# ---------------------------------------------------------------------------
# Kernel wrappers
# ---------------------------------------------------------------------------
def _conv_bn_relu_pool(x_nhwc, w_g, b_g, *, budget, vmem_limit):
    """x_nhwc: (N, H, W, C); w_g: (K_pad, 512) super-kernel weight, b_g: (1, 128).
    Returns bf16 pooled activations (N, (H-4)//2, (W-4)//2, 128)."""
    n, hh, ww, c = x_nhwc.shape
    ph, pw = (hh - _K + 1) // 2, (ww - _K + 1) // 2
    kk = _S * _S * c
    kk_pad = w_g.shape[0]
    m = n * ph * pw

    # Single stride-2 im2col over 6x6 super-windows (covers conv 5x5 + pool 2x2),
    # built directly in bf16 and pre-padded in K: no separate pad/cast passes.
    x = x_nhwc.astype(jnp.bfloat16)
    cols = [x[:, i:i + 2 * (ph - 1) + 1:2, j:j + 2 * (pw - 1) + 1:2, :]
            for i in range(_S) for j in range(_S)]
    if kk_pad > kk:
        cols.append(jnp.zeros((n, ph, pw, kk_pad - kk), jnp.bfloat16))
    patches = jnp.concatenate(cols, axis=-1).reshape(m, kk_pad)

    w_bytes = 2 * w_g.size * 2 + 2 * b_g.size * 4
    row_bytes = 2 * kk_pad * 2 + 2 * _LANES * 2 + 4 * _LANES * 4
    tm = _pick_tile(m, row_bytes, budget - w_bytes)
    m_pad = _round_up(m, tm)
    if m_pad != m:
        patches = jnp.pad(patches, ((0, m_pad - m), (0, 0)))

    out = pl.pallas_call(
        _conv_pool_kernel,
        out_shape=jax.ShapeDtypeStruct((m_pad, _LANES), jnp.bfloat16),
        grid=(m_pad // tm,),
        in_specs=[pl.BlockSpec((tm, kk_pad), lambda i: (i, 0)),
                  pl.BlockSpec((kk_pad, 4 * _LANES), lambda i: (0, 0)),
                  pl.BlockSpec((1, _LANES), lambda i: (0, 0))],
        out_specs=pl.BlockSpec((tm, _LANES), lambda i: (i, 0)),
        compiler_params=pltpu.CompilerParams(
            dimension_semantics=("parallel",),
            vmem_limit_bytes=vmem_limit),
    )(patches, w_g, b_g)
    return out[:m].reshape(n, ph, pw, _LANES)


def _predictor(feat, w1, b1, w2, b2, w3, b3, *, budget, vmem_limit):
    """feat: (N, 2048) bf16 padded NHWC-flat features -> logits (N, 10)."""
    n, kk = feat.shape
    w_bytes = 2 * 2 * (w1.size + w2.size + w3.size)
    row_bytes = 2 * kk * 2 + 2 * _LANES * 4 + 3 * _LANES * 4
    tm = _pick_tile(n, row_bytes, budget - w_bytes)
    n_pad = _round_up(n, tm)
    x = feat if n_pad == n else jnp.pad(feat, ((0, n_pad - n), (0, 0)))
    out = pl.pallas_call(
        _predictor_kernel,
        out_shape=jax.ShapeDtypeStruct((n_pad, _LANES), jnp.float32),
        grid=(n_pad // tm,),
        in_specs=[
            pl.BlockSpec((tm, kk), lambda i: (i, 0)),
            pl.BlockSpec((kk, _LANES), lambda i: (0, 0)),
            pl.BlockSpec((1, _LANES), lambda i: (0, 0)),
            pl.BlockSpec((_LANES, _LANES), lambda i: (0, 0)),
            pl.BlockSpec((1, _LANES), lambda i: (0, 0)),
            pl.BlockSpec((_LANES, _LANES), lambda i: (0, 0)),
            pl.BlockSpec((1, _LANES), lambda i: (0, 0)),
        ],
        out_specs=pl.BlockSpec((tm, _LANES), lambda i: (i, 0)),
        compiler_params=pltpu.CompilerParams(
            dimension_semantics=("parallel",),
            vmem_limit_bytes=vmem_limit),
    )(x, w1, b1, w2, b2, w3, b3)
    return out[:n, :10]


# ---------------------------------------------------------------------------
# Host-side parameter folding (BN fold + super-kernel build + 128-lane padding)
# ---------------------------------------------------------------------------
def _prepare_inference_params(p):
    def bn_scale(g, v):
        return g / jnp.sqrt(v + _BN_EPS)

    def conv_pool_weights(w_t, b_t, g_, be_, m_, v_):
        # w_t: (OC, C, 5, 5) torch layout.  Builds the (K_pad, 4*128) super-kernel:
        # column group p = (dh,dw) holds the conv weight shifted to parity (dh,dw)
        # inside the 6x6 pooled window; rows ordered (i, j, c).
        oc, c = w_t.shape[0], w_t.shape[1]
        s = bn_scale(g_, v_)
        wf = w_t.transpose(2, 3, 1, 0) * s                               # (5,5,C,OC)
        wf = jnp.pad(wf, ((0, 0), (0, 0), (0, 0), (0, _LANES - oc)))     # (5,5,C,128)
        sup = jnp.zeros((2, 2, _S, _S, c, _LANES), jnp.float32)
        for dh in range(2):
            for dw in range(2):
                sup = sup.at[dh, dw, dh:dh + _K, dw:dw + _K].set(wf)
        sup = sup.transpose(2, 3, 4, 0, 1, 5).reshape(_S * _S * c, 4 * _LANES)
        kk_pad = _round_up(_S * _S * c, 8)
        w_g = jnp.pad(sup, ((0, kk_pad - _S * _S * c), (0, 0))).astype(jnp.bfloat16)
        b = (b_t - m_) * s + be_
        b_g = jnp.pad(b, (0, _LANES - oc)).reshape(1, _LANES).astype(jnp.float32)
        return w_g, b_g

    g = {}
    g["c1_w"], g["c1_b"] = conv_pool_weights(
        p["conv1_w"], p["conv1_b"], p["bn1_g"], p["bn1_b"], p["bn1_m"], p["bn1_v"])
    g["c2_w"], g["c2_b"] = conv_pool_weights(
        p["conv2_w"], p["conv2_b"], p["bn2_g"], p["bn2_b"], p["bn2_m"], p["bn2_v"])

    # fc1: torch columns are (c,h,w); activations arrive NHWC-flat as (h,w,c_pad128).
    s = bn_scale(p["bnf1_g"], p["bnf1_v"])
    w = p["fc1_w"].reshape(100, 48, 4, 4).transpose(2, 3, 1, 0) * s       # (4,4,48,100)
    w = jnp.pad(w, ((0, 0), (0, 0), (0, _LANES - 48), (0, _LANES - 100)))
    g["f1_w"] = w.reshape(4 * 4 * _LANES, _LANES).astype(jnp.bfloat16)
    b = (p["fc1_b"] - p["bnf1_m"]) * s + p["bnf1_b"]
    g["f1_b"] = jnp.pad(b, (0, _LANES - 100)).reshape(1, _LANES).astype(jnp.float32)

    # fc2: (100,100) -> (128,128)
    s = bn_scale(p["bnf2_g"], p["bnf2_v"])
    w = p["fc2_w"].T * s[None, :]
    g["f2_w"] = jnp.pad(w, ((0, _LANES - 100), (0, _LANES - 100))).astype(jnp.bfloat16)
    b = (p["fc2_b"] - p["bnf2_m"]) * s + p["bnf2_b"]
    g["f2_b"] = jnp.pad(b, (0, _LANES - 100)).reshape(1, _LANES).astype(jnp.float32)

    # fc3: (10,100) -> (128,128)
    g["f3_w"] = jnp.pad(p["fc3_w"].T, ((0, _LANES - 100), (0, _LANES - 10))).astype(jnp.bfloat16)
    g["f3_b"] = jnp.pad(p["fc3_b"], (0, _LANES - 10)).reshape(1, _LANES).astype(jnp.float32)
    return g


# ---------------------------------------------------------------------------
# CustLeNet forward (usps Feature + Predictor)
# ---------------------------------------------------------------------------
def cust_lenet_forward(params, x):
    """x: (N, 1, 28, 28) NCHW (PyTorch layout) -> logits (N, 10)."""
    g = _prepare_inference_params(params)
    budget, vmem_limit = _vmem_budgets()
    h = jnp.transpose(x, (0, 2, 3, 1))                                    # (N,28,28,1)
    h = _conv_bn_relu_pool(h, g["c1_w"], g["c1_b"],
                           budget=budget, vmem_limit=vmem_limit)          # (N,12,12,128) bf16
    h = _conv_bn_relu_pool(h[..., :32], g["c2_w"], g["c2_b"],
                           budget=budget, vmem_limit=vmem_limit)          # (N,4,4,128) bf16
    h = h.reshape(h.shape[0], 4 * 4 * _LANES)                             # (N,2048) bf16
    return _predictor(h, g["f1_w"], g["f1_b"], g["f2_w"], g["f2_b"],
                      g["f3_w"], g["f3_b"],
                      budget=budget, vmem_limit=vmem_limit)               # (N,10)


# ---------------------------------------------------------------------------
# Deterministic parameter initialization
# ---------------------------------------------------------------------------
def init_params(key):
    ks = iter(jax.random.split(key, 32))

    def uni(shape, fan_in):
        bound = 1.0 / float(fan_in) ** 0.5
        return jax.random.uniform(next(ks), shape, jnp.float32, -bound, bound)

    def bn(n):
        g = 1.0 + 0.1 * jax.random.normal(next(ks), (n,), jnp.float32)
        b = 0.1 * jax.random.normal(next(ks), (n,), jnp.float32)
        m = 0.05 * jax.random.normal(next(ks), (n,), jnp.float32)
        v = 1.0 + 0.1 * jax.random.uniform(next(ks), (n,), jnp.float32)
        return g, b, m, v

    p = {}
    p["conv1_w"] = uni((32, 1, 5, 5), 1 * 5 * 5)
    p["conv1_b"] = uni((32,), 1 * 5 * 5)
    p["bn1_g"], p["bn1_b"], p["bn1_m"], p["bn1_v"] = bn(32)
    p["conv2_w"] = uni((48, 32, 5, 5), 32 * 5 * 5)
    p["conv2_b"] = uni((48,), 32 * 5 * 5)
    p["bn2_g"], p["bn2_b"], p["bn2_m"], p["bn2_v"] = bn(48)
    p["fc1_w"] = uni((100, 768), 768)
    p["fc1_b"] = uni((100,), 768)
    p["bnf1_g"], p["bnf1_b"], p["bnf1_m"], p["bnf1_v"] = bn(100)
    p["fc2_w"] = uni((100, 100), 100)
    p["fc2_b"] = uni((100,), 100)
    p["bnf2_g"], p["bnf2_b"], p["bnf2_m"], p["bnf2_v"] = bn(100)
    p["fc3_w"] = uni((10, 100), 100)
    p["fc3_b"] = uni((10,), 100)
    return p


# ---------------------------------------------------------------------------
# Pure-JAX f32 reference (no Pallas) for correctness check
# ---------------------------------------------------------------------------
def reference_forward(params, x):
    p = params

    def conv(x, w, b, g, be, m, v):
        y = jax.lax.conv_general_dilated(
            x, w, window_strides=(1, 1), padding="VALID",
            dimension_numbers=("NCHW", "OIHW", "NCHW"))
        y = y + b.reshape(1, -1, 1, 1)
        scale = (g / jnp.sqrt(v + _BN_EPS)).reshape(1, -1, 1, 1)
        shift = (be - m * g / jnp.sqrt(v + _BN_EPS)).reshape(1, -1, 1, 1)
        return jnp.maximum(y * scale + shift, 0.0)

    def pool(x):
        return jax.lax.reduce_window(x, -jnp.inf, jax.lax.max,
                                     (1, 1, 2, 2), (1, 1, 2, 2), "VALID")

    def lin_bn_relu(x, w, b, g, be, m, v):
        y = x @ w.T + b
        scale = g / jnp.sqrt(v + _BN_EPS)
        return jnp.maximum(y * scale + (be - m * scale), 0.0)

    h = pool(conv(x, p["conv1_w"], p["conv1_b"], p["bn1_g"], p["bn1_b"], p["bn1_m"], p["bn1_v"]))
    h = pool(conv(h, p["conv2_w"], p["conv2_b"], p["bn2_g"], p["bn2_b"], p["bn2_m"], p["bn2_v"]))
    h = h.reshape(h.shape[0], 48 * 4 * 4)
    h = lin_bn_relu(h, p["fc1_w"], p["fc1_b"], p["bnf1_g"], p["bnf1_b"], p["bnf1_m"], p["bnf1_v"])
    h = lin_bn_relu(h, p["fc2_w"], p["fc2_b"], p["bnf2_g"], p["bnf2_b"], p["bnf2_m"], p["bnf2_v"])
    return h @ p["fc3_w"].T + p["fc3_b"]


if __name__ == "__main__":
    key = jax.random.PRNGKey(0)
    pkey, xkey = jax.random.split(key)
    params = init_params(pkey)

    # usps-style input: (N, 1, 28, 28) NCHW
    x = jax.random.normal(xkey, (2, 1, 28, 28), jnp.float32)

    fwd = jax.jit(cust_lenet_forward)
    out = jax.block_until_ready(fwd(params, x))
    assert out.shape == (2, 10), out.shape

    ref = jax.block_until_ready(reference_forward(params, x))
    # Tolerance accounts for bf16 MXU operands / bf16 activation stores
    # (f32 accumulation & epilogues) vs the f32 reference.
    assert jnp.allclose(out, ref, rtol=5e-2, atol=5e-2), (
        float(jnp.max(jnp.abs(out - ref))))

    print("KERNEL_OK")
</pallas_src>

<mosaic_0001>
module attributes {stable_mosaic.version = 11 : i64} {
  func.func @_conv_pool_kernel(%arg0: i32, %arg1: memref<144x40xbf16, #tpu.memory_space<vmem>>, %arg2: memref<40x512xbf16, #tpu.memory_space<vmem>>, %arg3: memref<1x128xf32, #tpu.memory_space<vmem>>, %arg4: memref<144x128xbf16, #tpu.memory_space<vmem>>) attributes {dimension_semantics = [#tpu.dimension_semantics<parallel>], iteration_bounds = array<i64: 2>, scalar_prefetch = 0 : i64, scratch_operands = 0 : i64, tpu.core_type = #tpu.core_type<tc>, window_params = [{transform_indices = @transform_0, window_bounds = array<i64: 144, 40>}, {pipeline_mode = #tpu.pipeline_mode<synchronous>, transform_indices = @transform_1, window_bounds = array<i64: 40, 512>}, {pipeline_mode = #tpu.pipeline_mode<synchronous>, transform_indices = @transform_2, window_bounds = array<i64: 1, 128>}, {transform_indices = @transform_3, window_bounds = array<i64: 144, 128>}]} {
    %c0 = arith.constant 0 : index
    %c0_0 = arith.constant 0 : index
    %0 = vector.load %arg1[%c0, %c0_0] : memref<144x40xbf16, #tpu.memory_space<vmem>>, vector<144x40xbf16>
    %c0_1 = arith.constant 0 : index
    %c0_2 = arith.constant 0 : index
    %1 = vector.load %arg2[%c0_1, %c0_2] : memref<40x512xbf16, #tpu.memory_space<vmem>>, vector<40x512xbf16>
    %cst = arith.constant dense<0.000000e+00> : vector<144x512xf32>
    %2 = tpu.matmul %0, %1, %cst {dimension_numbers = #tpu.dot_dimension_numbers<[1], [0], [0], [1], [0, 0, 1, 1], [], []>} : vector<144x40xbf16>, vector<40x512xbf16>, vector<144x512xf32> -> vector<144x512xf32>
    %3 = vector.extract_strided_slice %2 {offsets = [0, 0], sizes = [144, 128], strides = [1, 1]} : vector<144x512xf32> to vector<144x128xf32>
    %4 = vector.extract_strided_slice %2 {offsets = [0, 128], sizes = [144, 128], strides = [1, 1]} : vector<144x512xf32> to vector<144x128xf32>
    %5 = arith.maximumf %3, %4 : vector<144x128xf32>
    %6 = vector.extract_strided_slice %2 {offsets = [0, 256], sizes = [144, 128], strides = [1, 1]} : vector<144x512xf32> to vector<144x128xf32>
    %7 = arith.maximumf %5, %6 : vector<144x128xf32>
    %8 = vector.extract_strided_slice %2 {offsets = [0, 384], sizes = [144, 128], strides = [1, 1]} : vector<144x512xf32> to vector<144x128xf32>
    %9 = arith.maximumf %7, %8 : vector<144x128xf32>
    %c0_3 = arith.constant 0 : index
    %c0_4 = arith.constant 0 : index
    %10 = vector.load %arg3[%c0_3, %c0_4] : memref<1x128xf32, #tpu.memory_space<vmem>>, vector<1x128xf32>
    %11 = vector.broadcast %10 : vector<1x128xf32> to vector<144x128xf32>
    %12 = arith.addf %9, %11 : vector<144x128xf32>
    %cst_5 = arith.constant 0.000000e+00 : f32
    %13 = vector.broadcast %cst_5 : f32 to vector<144x128xf32>
    %14 = arith.maximumf %12, %13 : vector<144x128xf32>
    %15 = arith.truncf %14 : vector<144x128xf32> to vector<144x128xbf16>
    %c0_6 = arith.constant 0 : index
    %c0_7 = arith.constant 0 : index
    %16 = vector.load %arg4[%c0_6, %c0_7] : memref<144x128xbf16, #tpu.memory_space<vmem>>, vector<144x128xbf16>
    tpu.vector_store %arg4[%c0_6, %c0_7], %15 {strides = array<i32>} : memref<144x128xbf16, #tpu.memory_space<vmem>>, vector<144x128xbf16>,
    return
  }
  func.func @transform_0(%arg0: i32) -> (i32, i32) {
    %c0_i32 = arith.constant 0 : i32
    %c0_i32_0 = arith.constant 0 : i32
    return %arg0, %c0_i32 : i32, i32
  }
  func.func @transform_1(%arg0: i32) -> (i32, i32) {
    %c0_i32 = arith.constant 0 : i32
    %c0_i32_0 = arith.constant 0 : i32
    %c0_i32_1 = arith.constant 0 : i32
    return %c0_i32, %c0_i32_0 : i32, i32
  }
  func.func @transform_2(%arg0: i32) -> (i32, i32) {
    %c0_i32 = arith.constant 0 : i32
    %c0_i32_0 = arith.constant 0 : i32
    %c0_i32_1 = arith.constant 0 : i32
    return %c0_i32, %c0_i32_0 : i32, i32
  }
  func.func @transform_3(%arg0: i32) -> (i32, i32) {
    %c0_i32 = arith.constant 0 : i32
    %c0_i32_0 = arith.constant 0 : i32
    return %arg0, %c0_i32 : i32, i32
  }
}

module attributes {stable_mosaic.version = 11 : i64} {
  func.func @_conv_pool_kernel(%arg0: i32, %arg1: memref<16x1152xbf16, #tpu.memory_space<vmem>>, %arg2: memref<1152x512xbf16, #tpu.memory_space<vmem>>, %arg3: memref<1x128xf32, #tpu.memory_space<vmem>>, %arg4: memref<16x128xbf16, #tpu.memory_space<vmem>>) attributes {dimension_semantics = [#tpu.dimension_semantics<parallel>], iteration_bounds = array<i64: 2>, scalar_prefetch = 0 : i64, scratch_operands = 0 : i64, tpu.core_type = #tpu.core_type<tc>, window_params = [{transform_indices = @transform_0, window_bounds = array<i64: 16, 1152>}, {pipeline_mode = #tpu.pipeline_mode<synchronous>, transform_indices = @transform_1, window_bounds = array<i64: 1152, 512>}, {pipeline_mode = #tpu.pipeline_mode<synchronous>, transform_indices = @transform_2, window_bounds = array<i64: 1, 128>}, {transform_indices = @transform_3, window_bounds = array<i64: 16, 128>}]} {
    %c0 = arith.constant 0 : index
    %c0_0 = arith.constant 0 : index
    %0 = vector.load %arg1[%c0, %c0_0] : memref<16x1152xbf16, #tpu.memory_space<vmem>>, vector<16x1152xbf16>
    %c0_1 = arith.constant 0 : index
    %c0_2 = arith.constant 0 : index
    %1 = vector.load %arg2[%c0_1, %c0_2] : memref<1152x512xbf16, #tpu.memory_space<vmem>>, vector<1152x512xbf16>
    %cst = arith.constant dense<0.000000e+00> : vector<16x512xf32>
    %2 = tpu.matmul %0, %1, %cst {dimension_numbers = #tpu.dot_dimension_numbers<[1], [0], [0], [1], [0, 0, 1, 1], [], []>} : vector<16x1152xbf16>, vector<1152x512xbf16>, vector<16x512xf32> -> vector<16x512xf32>
    %3 = vector.extract_strided_slice %2 {offsets = [0, 0], sizes = [16, 128], strides = [1, 1]} : vector<16x512xf32> to vector<16x128xf32>
    %4 = vector.extract_strided_slice %2 {offsets = [0, 128], sizes = [16, 128], strides = [1, 1]} : vector<16x512xf32> to vector<16x128xf32>
    %5 = arith.maximumf %3, %4 : vector<16x128xf32>
    %6 = vector.extract_strided_slice %2 {offsets = [0, 256], sizes = [16, 128], strides = [1, 1]} : vector<16x512xf32> to vector<16x128xf32>
    %7 = arith.maximumf %5, %6 : vector<16x128xf32>
    %8 = vector.extract_strided_slice %2 {offsets = [0, 384], sizes = [16, 128], strides = [1, 1]} : vector<16x512xf32> to vector<16x128xf32>
    %9 = arith.maximumf %7, %8 : vector<16x128xf32>
    %c0_3 = arith.constant 0 : index
    %c0_4 = arith.constant 0 : index
    %10 = vector.load %arg3[%c0_3, %c0_4] : memref<1x128xf32, #tpu.memory_space<vmem>>, vector<1x128xf32>
    %11 = vector.broadcast %10 : vector<1x128xf32> to vector<16x128xf32>
    %12 = arith.addf %9, %11 : vector<16x128xf32>
    %cst_5 = arith.constant 0.000000e+00 : f32
    %13 = vector.broadcast %cst_5 : f32 to vector<16x128xf32>
    %14 = arith.maximumf %12, %13 : vector<16x128xf32>
    %15 = arith.truncf %14 : vector<16x128xf32> to vector<16x128xbf16>
    %c0_6 = arith.constant 0 : index
    %c0_7 = arith.constant 0 : index
    %16 = vector.load %arg4[%c0_6, %c0_7] : memref<16x128xbf16, #tpu.memory_space<vmem>>, vector<16x128xbf16>
    tpu.vector_store %arg4[%c0_6, %c0_7], %15 {strides = array<i32>} : memref<16x128xbf16, #tpu.memory_space<vmem>>, vector<16x128xbf16>,
    return
  }
  func.func @transform_0(%arg0: i32) -> (i32, i32) {
    %c0_i32 = arith.constant 0 : i32
    %c0_i32_0 = arith.constant 0 : i32
    return %arg0, %c0_i32 : i32, i32
  }
  func.func @transform_1(%arg0: i32) -> (i32, i32) {
    %c0_i32 = arith.constant 0 : i32
    %c0_i32_0 = arith.constant 0 : i32
    %c0_i32_1 = arith.constant 0 : i32
    return %c0_i32, %c0_i32_0 : i32, i32
  }
  func.func @transform_2(%arg0: i32) -> (i32, i32) {
    %c0_i32 = arith.constant 0 : i32
    %c0_i32_0 = arith.constant 0 : i32
    %c0_i32_1 = arith.constant 0 : i32
    return %c0_i32, %c0_i32_0 : i32, i32
  }
  func.func @transform_3(%arg0: i32) -> (i32, i32) {
    %c0_i32 = arith.constant 0 : i32
    %c0_i32_0 = arith.constant 0 : i32
    return %arg0, %c0_i32 : i32, i32
  }
}

module attributes {stable_mosaic.version = 11 : i64} {
  func.func @_predictor_kernel(%arg0: i32, %arg1: memref<16x2048xbf16, #tpu.memory_space<vmem>>, %arg2: memref<2048x128xbf16, #tpu.memory_space<vmem>>, %arg3: memref<1x128xf32, #tpu.memory_space<vmem>>, %arg4: memref<128x128xbf16, #tpu.memory_space<vmem>>, %arg5: memref<1x128xf32, #tpu.memory_space<vmem>>, %arg6: memref<128x128xbf16, #tpu.memory_space<vmem>>, %arg7: memref<1x128xf32, #tpu.memory_space<vmem>>, %arg8: memref<16x128xf32, #tpu.memory_space<vmem>>) attributes {dimension_semantics = [#tpu.dimension_semantics<parallel>], iteration_bounds = array<i64: 1>, scalar_prefetch = 0 : i64, scratch_operands = 0 : i64, tpu.core_type = #tpu.core_type<tc>, window_params = [{transform_indices = @transform_0, window_bounds = array<i64: 16, 2048>}, {pipeline_mode = #tpu.pipeline_mode<synchronous>, transform_indices = @transform_1, window_bounds = array<i64: 2048, 128>}, {pipeline_mode = #tpu.pipeline_mode<synchronous>, transform_indices = @transform_2, window_bounds = array<i64: 1, 128>}, {pipeline_mode = #tpu.pipeline_mode<synchronous>, transform_indices = @transform_3, window_bounds = array<i64: 128, 128>}, {pipeline_mode = #tpu.pipeline_mode<synchronous>, transform_indices = @transform_4, window_bounds = array<i64: 1, 128>}, {pipeline_mode = #tpu.pipeline_mode<synchronous>, transform_indices = @transform_5, window_bounds = array<i64: 128, 128>}, {pipeline_mode = #tpu.pipeline_mode<synchronous>, transform_indices = @transform_6, window_bounds = array<i64: 1, 128>}, {transform_indices = @transform_7, window_bounds = array<i64: 16, 128>}]} {
    %c0 = arith.constant 0 : index
    %c0_0 = arith.constant 0 : index
    %0 = vector.load %arg1[%c0, %c0_0] : memref<16x2048xbf16, #tpu.memory_space<vmem>>, vector<16x2048xbf16>
    %c0_1 = arith.constant 0 : index
    %c0_2 = arith.constant 0 : index
    %1 = vector.load %arg2[%c0_1, %c0_2] : memref<2048x128xbf16, #tpu.memory_space<vmem>>, vector<2048x128xbf16>
    %cst = arith.constant dense<0.000000e+00> : vector<16x128xf32>
    %2 = tpu.matmul %0, %1, %cst {dimension_numbers = #tpu.dot_dimension_numbers<[1], [0], [0], [1], [0, 0, 1, 1], [], []>} : vector<16x2048xbf16>, vector<2048x128xbf16>, vector<16x128xf32> -> vector<16x128xf32>
    %c0_3 = arith.constant 0 : index
    %c0_4 = arith.constant 0 : index
    %3 = vector.load %arg3[%c0_3, %c0_4] : memref<1x128xf32, #tpu.memory_space<vmem>>, vector<1x128xf32>
    %4 = vector.broadcast %3 : vector<1x128xf32> to vector<16x128xf32>
    %5 = arith.addf %2, %4 : vector<16x128xf32>
    %cst_5 = arith.constant 0.000000e+00 : f32
    %6 = vector.broadcast %cst_5 : f32 to vector<16x128xf32>
    %7 = arith.maximumf %5, %6 : vector<16x128xf32>
    %8 = arith.truncf %7 : vector<16x128xf32> to vector<16x128xbf16>
    %c0_6 = arith.constant 0 : index
    %c0_7 = arith.constant 0 : index
    %9 = vector.load %arg4[%c0_6, %c0_7] : memref<128x128xbf16, #tpu.memory_space<vmem>>, vector<128x128xbf16>
    %cst_8 = arith.constant dense<0.000000e+00> : vector<16x128xf32>
    %10 = tpu.matmul %8, %9, %cst_8 {dimension_numbers = #tpu.dot_dimension_numbers<[1], [0], [0], [1], [0, 0, 1, 1], [], []>} : vector<16x128xbf16>, vector<128x128xbf16>, vector<16x128xf32> -> vector<16x128xf32>
    %c0_9 = arith.constant 0 : index
    %c0_10 = arith.constant 0 : index
    %11 = vector.load %arg5[%c0_9, %c0_10] : memref<1x128xf32, #tpu.memory_space<vmem>>, vector<1x128xf32>
    %12 = vector.broadcast %11 : vector<1x128xf32> to vector<16x128xf32>
    %13 = arith.addf %10, %12 : vector<16x128xf32>
    %cst_11 = arith.constant 0.000000e+00 : f32
    %14 = vector.broadcast %cst_11 : f32 to vector<16x128xf32>
    %15 = arith.maximumf %13, %14 : vector<16x128xf32>
    %16 = arith.truncf %15 : vector<16x128xf32> to vector<16x128xbf16>
    %c0_12 = arith.constant 0 : index
    %c0_13 = arith.constant 0 : index
    %17 = vector.load %arg6[%c0_12, %c0_13] : memref<128x128xbf16, #tpu.memory_space<vmem>>, vector<128x128xbf16>
    %cst_14 = arith.constant dense<0.000000e+00> : vector<16x128xf32>
    %18 = tpu.matmul %16, %17, %cst_14 {dimension_numbers = #tpu.dot_dimension_numbers<[1], [0], [0], [1], [0, 0, 1, 1], [], []>} : vector<16x128xbf16>, vector<128x128xbf16>, vector<16x128xf32> -> vector<16x128xf32>
    %c0_15 = arith.constant 0 : index
    %c0_16 = arith.constant 0 : index
    %19 = vector.load %arg7[%c0_15, %c0_16] : memref<1x128xf32, #tpu.memory_space<vmem>>, vector<1x128xf32>
    %20 = vector.broadcast %19 : vector<1x128xf32> to vector<16x128xf32>
    %21 = arith.addf %18, %20 : vector<16x128xf32>
    %c0_17 = arith.constant 0 : index
    %c0_18 = arith.constant 0 : index
    %22 = vector.load %arg8[%c0_17, %c0_18] : memref<16x128xf32, #tpu.memory_space<vmem>>, vector<16x128xf32>
    tpu.vector_store %arg8[%c0_17, %c0_18], %21 {strides = array<i32>} : memref<16x128xf32, #tpu.memory_space<vmem>>, vector<16x128xf32>,
    return
  }
  func.func @transform_0(%arg0: i32) -> (i32, i32) {
    %c0_i32 = arith.constant 0 : i32
    %c0_i32_0 = arith.constant 0 : i32
    return %arg0, %c0_i32 : i32, i32
  }
  func.func @transform_1(%arg0: i32) -> (i32, i32) {
    %c0_i32 = arith.constant 0 : i32
    %c0_i32_0 = arith.constant 0 : i32
    %c0_i32_1 = arith.constant 0 : i32
    return %c0_i32, %c0_i32_0 : i32, i32
  }
  func.func @transform_2(%arg0: i32) -> (i32, i32) {
    %c0_i32 = arith.constant 0 : i32
    %c0_i32_0 = arith.constant 0 : i32
    %c0_i32_1 = arith.constant 0 : i32
    return %c0_i32, %c0_i32_0 : i32, i32
  }
  func.func @transform_3(%arg0: i32) -> (i32, i32) {
    %c0_i32 = arith.constant 0 : i32
    %c0_i32_0 = arith.constant 0 : i32
    %c0_i32_1 = arith.constant 0 : i32
    return %c0_i32, %c0_i32_0 : i32, i32
  }
  func.func @transform_4(%arg0: i32) -> (i32, i32) {
    %c0_i32 = arith.constant 0 : i32
    %c0_i32_0 = arith.constant 0 : i32
    %c0_i32_1 = arith.constant 0 : i32
    return %c0_i32, %c0_i32_0 : i32, i32
  }
  func.func @transform_5(%arg0: i32) -> (i32, i32) {
    %c0_i32 = arith.constant 0 : i32
    %c0_i32_0 = arith.constant 0 : i32
    %c0_i32_1 = arith.constant 0 : i32
    return %c0_i32, %c0_i32_0 : i32, i32
  }
  func.func @transform_6(%arg0: i32) -> (i32, i32) {
    %c0_i32 = arith.constant 0 : i32
    %c0_i32_0 = arith.constant 0 : i32
    %c0_i32_1 = arith.constant 0 : i32
    return %c0_i32, %c0_i32_0 : i32, i32
  }
  func.func @transform_7(%arg0: i32) -> (i32, i32) {
    %c0_i32 = arith.constant 0 : i32
    %c0_i32_0 = arith.constant 0 : i32
    return %arg0, %c0_i32 : i32, i32
  }
}

</mosaic_0001>

<llo_original>
// kernel: cust_lenet_forward.3
$region0: #{cust_lenet_forward.3}
  #allocation0 [shape = 'u32[]', space=smem, size = 0x4, offset = 0x4, fixed_abs, tag = 'smem constant byte address 0x4 - core index']
  #allocation1 [shape = 'u32[72,128]{1,0:T(1,128)}', space=vmem, size = 0x9000, scoped, tag = 'internal scratch']
  %s0 = inlined_call_operand.vmem [shape: bf16[288,40], index: 0, kind: input, shape index: {}]
  %s1 = inlined_call_operand.vmem [shape: bf16[40,512], index: 1, kind: input, shape index: {}]
  %s2 = inlined_call_operand.vmem [shape: f32[1,128], index: 2, kind: input, shape index: {}]
  %s3 = inlined_call_operand.vmem [shape: bf16[288,128], index: 3, kind: output, shape index: {}]
  %s4 = sld [smem:[#allocation0]]
  $region45: #{cust_lenet_forward.3} parent=0
    _
  %s6 = ssub.s32 1, %s4
  %s7 = scalar_select 0, %s6, %s4
  loop: start=0, step=1, limit=4
  $region2: #{cust_lenet_forward.3} parent=0 // loop_pre_header
    _
  $region3: #{cust_lenet_forward.3} parent=0 // loop_header
    %s9 = sphi 0, %s13
    %p10 = scmp.ge.s32.totalorder %s9, 4
    %s19 = sphi 0, %s21
    %s22 = sphi 0, %s19
    %s23 = sphi 0, %s22
    %s39 = sphi 0, %s23
    %s43 = sphi 0, %s43
    %s45 = sphi 0, %s43
    %s46 = sphi 0, %s45
    %s60 = sphi 0, %s46
    %s64 = sphi 0, %s64
    %s66 = sphi 0, %s64
    %s67 = sphi 0, %s66
    %s81 = sphi 0, %s67
    %s87 = sphi 0, %s89
    %s90 = sphi 0, %s87
    %s91 = sphi 0, %s90
    %s107 = sphi 0, %s91
  $region4: #{cust_lenet_forward.3} parent=0 // loop_header_branch
    %12 = sbr.rel (%p10) target = $region8
  $region5: #{cust_lenet_forward.3} parent=0 // loop_body
    %s14 = ssub.s32 %s9, 1
    %s15 = ssub.s32 %s9, 2
    %s16 = sadd.s32 %s9, 1
    %s17 = ssub.s32 %s9, %s16
    %p18 = scmp.eq.s32.totalorder %s17, 0
    %s20 = sadd.s32 %s19, 1
    %s21 = scalar_select %p18, %s19, %s20
    %p24 = pneg %p18
    %p25 = scmp.eq.s32.totalorder %s9, 1
    %p26 = por %p24, %p25
    %p27 = scmp.ne.s32.totalorder %s19, %s22
    %p28 = scmp.eq.s32.totalorder %s9, 0
    %p29 = por %p27, %p28
    %p30 = scmp.ne.s32.totalorder %s19, %s22
    %p31 = scmp.eq.s32.totalorder %s14, 1
    %p32 = por %p30, %p31
    %p33 = scmp.ne.s32.totalorder %s22, %s23
    %p34 = scmp.eq.s32.totalorder %s14, 0
    %p35 = por %p33, %p34
    %p36 = scmp.ne.s32.totalorder %s22, %s23
    %p37 = scmp.eq.s32.totalorder %s15, 1
    %p38 = por %p36, %p37
    %p40 = scmp.ne.s32.totalorder %s23, %s39
    %p41 = scmp.eq.s32.totalorder %s15, 0
    %p42 = por %p40, %p41
    %s44 = sadd.s32 %s43, 1
    %p47 = scmp.eq.s32.totalorder %s9, 1
    %p48 = scmp.ne.s32.totalorder %s43, %s45
    %p49 = scmp.eq.s32.totalorder %s9, 0
    %p50 = por %p48, %p49
    %p51 = scmp.ne.s32.totalorder %s43, %s45
    %p52 = scmp.eq.s32.totalorder %s14, 1
    %p53 = por %p51, %p52
    %p54 = scmp.ne.s32.totalorder %s45, %s46
    %p55 = scmp.eq.s32.totalorder %s14, 0
    %p56 = por %p54, %p55
    %p57 = scmp.ne.s32.totalorder %s45, %s46
    %p58 = scmp.eq.s32.totalorder %s15, 1
    %p59 = por %p57, %p58
    %p61 = scmp.ne.s32.totalorder %s46, %s60
    %p62 = scmp.eq.s32.totalorder %s15, 0
    %p63 = por %p61, %p62
    %s65 = sadd.s32 %s64, 1
    %p68 = scmp.eq.s32.totalorder %s9, 1
    %p69 = scmp.ne.s32.totalorder %s64, %s66
    %p70 = scmp.eq.s32.totalorder %s9, 0
    %p71 = por %p69, %p70
    %p72 = scmp.ne.s32.totalorder %s64, %s66
    %p73 = scmp.eq.s32.totalorder %s14, 1
    %p74 = por %p72, %p73
    %p75 = scmp.ne.s32.totalorder %s66, %s67
    %p76 = scmp.eq.s32.totalorder %s14, 0
    %p77 = por %p75, %p76
    %p78 = scmp.ne.s32.totalorder %s66, %s67
    %p79 = scmp.eq.s32.totalorder %s15, 1
    %p80 = por %p78, %p79
    %p82 = scmp.ne.s32.totalorder %s67, %s81
    %p83 = scmp.eq.s32.totalorder %s15, 0
    %p84 = por %p82, %p83
    %s85 = ssub.s32 %s9, %s16
    %p86 = scmp.eq.s32.totalorder %s85, 0
    %s88 = sadd.s32 %s87, 1
    %s89 = scalar_select %p86, %s87, %s88
    %p92 = pneg %p86
    %p93 = scmp.eq.s32.totalorder %s9, 1
    %p94 = por %p92, %p93
    %p95 = scmp.ne.s32.totalorder %s87, %s90
    %p96 = scmp.eq.s32.totalorder %s9, 0
    %p97 = por %p95, %p96
    %p98 = scmp.ne.s32.totalorder %s87, %s90
    %p99 = scmp.eq.s32.totalorder %s14, 1
    %p100 = por %p98, %p99
    %p101 = scmp.ne.s32.totalorder %s90, %s91
    %p102 = scmp.eq.s32.totalorder %s14, 0
    %p103 = por %p101, %p102
    %p104 = scmp.ne.s32.totalorder %s90, %s91
    %p105 = scmp.eq.s32.totalorder %s15, 1
    %p106 = por %p104, %p105
    %p108 = scmp.ne.s32.totalorder %s91, %s107
    %p109 = scmp.eq.s32.totalorder %s15, 0
    %p110 = por %p108, %p109
    %p111 = scmp.le.s32.totalorder 1, %s9
    %p112 = scmp.lt.s32.totalorder %s9, 3
    %p113 = pnand %p111, %p112
    %p114 = pneg %p113
    // Predicated region
    $region9: #{cust_lenet_forward.3} parent=5 // pred_check
      _
    $region10: #{cust_lenet_forward.3} parent=5 // pred_check_branch
      %116 = sbr.rel (%p113) target = $region12
    $region11: #{cust_lenet_forward.3} parent=5 // pred_region
      %s117 = ssub.s32 %s9, 1
      // Predicated region
      $region13: #{cust_lenet_forward.3} parent=11 // pred_check
        %p118 = pneg %p56
      $region14: #{cust_lenet_forward.3} parent=11 // pred_check_branch
        %120 = sbr.rel (%p118) target = $region16
      $region15: #{cust_lenet_forward.3} parent=11 // pred_region
        _
      $region16: #{cust_lenet_forward.3} parent=11 // pred_fallthru
        _
      // Predicated region
      $region17: #{cust_lenet_forward.3} parent=11 // pred_check
        %p121 = pneg %p77
      $region18: #{cust_lenet_forward.3} parent=11 // pred_check_branch
        %123 = sbr.rel (%p121) target = $region20
      $region19: #{cust_lenet_forward.3} parent=11 // pred_region
        _
      $region20: #{cust_lenet_forward.3} parent=11 // pred_fallthru
        _
    $region12: #{cust_lenet_forward.3} parent=5 // pred_fallthru
      _
    %p124 = scmp.lt.s32.totalorder %s9, 2
    // Predicated region
    $region21: #{cust_lenet_forward.3} parent=5 // pred_check
      %p125 = pneg %p124
    $region22: #{cust_lenet_forward.3} parent=5 // pred_check_branch
      %127 = sbr.rel (%p125) target = $region24
    $region23: #{cust_lenet_forward.3} parent=5 // pred_region
      // Predicated region
      $region25: #{cust_lenet_forward.3} parent=23 // pred_check
        %p128 = pneg %p29
      $region26: #{cust_lenet_forward.3} parent=23 // pred_check_branch
        %130 = sbr.rel (%p128) target = $region28
      $region27: #{cust_lenet_forward.3} parent=23 // pred_region
        %s131 = smul.u32 18, %s9
        %p132 = scmp.lt.s32.totalorder %s131, 35
        %s133 = scalar_select %p132, %s131, 35
        %s134 = smul.addr %s133, 4
        %s135 = scalar_lea.vmem %s0, %s134
        %s136 = smul.u32 18, %s9
      $region28: #{cust_lenet_forward.3} parent=23 // pred_fallthru
        _
    $region24: #{cust_lenet_forward.3} parent=5 // pred_fallthru
      _
    %p137 = scmp.le.s32.totalorder 1, %s9
    %p138 = scmp.lt.s32.totalorder %s9, 3
    %p139 = pnand %p137, %p138
    %p140 = pneg %p139
    // Predicated region
    $region29: #{cust_lenet_forward.3} parent=5 // pred_check
      _
    $region30: #{cust_lenet_forward.3} parent=5 // pred_check_branch
      %142 = sbr.rel (%p139) target = $region32
    $region31: #{cust_lenet_forward.3} parent=5 // pred_region
      %s143 = ssub.s32 %s9, 1
      %s144 = smul.u32 18, %s14
      %p145 = scmp.lt.s32.totalorder %s144, 35
      %s146 = scalar_select %p145, %s144, 35
      %s147 = smul.addr %s146, 4
      %s148 = scalar_lea.vmem %s0, %s147
      %p149 = pneg %p35
      %p150 = pneg %p32
      %p151 = pneg %p56
      %p152 = pneg %p53
      %p153 = pneg %p77
      %p154 = pneg %p74
      %p155 = pneg %p103
      %p156 = pneg %p100
      %s157 = smul.u32 18, %s14
      %p158 = scmp.lt.s32.totalorder %s157, 35
      %s159 = scalar_select %p158, %s157, 35
      %s160 = smul.addr %s159, 4
      %s161 = scalar_lea.vmem %s3, %s160
      %s162 = smul.u32 18, %s14
      %p163 = scmp.lt.s32.totalorder %s162, 35
      %s164 = scalar_select %p163, %s162, 35
      %s165 = smul.addr %s164, 4
      %s166 = scalar_lea.vmem %s0, %s165
      %s167 = smul.u32 18, %s14
      %s168 = smul.u32 18, %s14
      %p169 = scmp.lt.s32.totalorder %s168, 35
      %s170 = scalar_select %p169, %s168, 35
      %s171 = smul.addr %s170, 4
      %s172 = scalar_lea.vmem %s3, %s171
      %s173 = smul.u32 18, %s14
      %v175 = vld [vmem:[%s166] sm:$0xf]
      %v176 = vld [vmem:[%s166 + $0x4] sm:$0xf]
      %v177 = vld [vmem:[%s166 + $0x8] sm:$0xf]
      %v178 = vld [vmem:[%s166 + $0xc] sm:$0xf]
      %v179 = vld [vmem:[%s166 + $0x10] sm:$0xf]
      %v180 = vld [vmem:[%s166 + $0x14] sm:$0xf]
      %v181 = vld [vmem:[%s166 + $0x18] sm:$0xf]
      %v182 = vld [vmem:[%s166 + $0x1c] sm:$0xf]
      %v183 = vld [vmem:[%s166 + $0x20] sm:$0xf]
      %v184 = vld [vmem:[%s166 + $0x24] sm:$0xf]
      %v185 = vld [vmem:[%s166 + $0x28] sm:$0xf]
      %v186 = vld [vmem:[%s166 + $0x2c] sm:$0xf]
      %v187 = vld [vmem:[%s166 + $0x30] sm:$0xf]
      %v188 = vld [vmem:[%s166 + $0x34] sm:$0xf]
      %v189 = vld [vmem:[%s166 + $0x38] sm:$0xf]
      %v190 = vld [vmem:[%s166 + $0x3c] sm:$0xf]
      %v191 = vld [vmem:[%s166 + $0x40] sm:$0xf]
      %v192 = vld [vmem:[%s166 + $0x44] sm:$0xf]
      %v193 = vld [vmem:[%s1] sm:$0xff]
      %v194 = vld [vmem:[%s1 + $0x8] sm:$0xff]
      %v195 = vld [vmem:[%s1 + $0x10] sm:$0xff]
      %v196 = vld [vmem:[%s1 + $0x18] sm:$0xff]
      %v197 = vld [vmem:[%s1 + $0x20] sm:$0xff]
      %v198 = vld [vmem:[%s1 + $0x28] sm:$0xff]
      %v199 = vld [vmem:[%s1 + $0x30] sm:$0xff]
      %v200 = vld [vmem:[%s1 + $0x38] sm:$0xff]
      %v201 = vld [vmem:[%s1 + $0x40] sm:$0xff]
      %v202 = vld [vmem:[%s1 + $0x48] sm:$0xff]
      %v221 = vunpack.c.l.b16 %v175
      %v222 = vunpack.c.l.b16 %v176
      %v223 = vunpack.c.l.b16 %v177
      %v224 = vunpack.c.l.b16 %v178
      %v225 = vunpack.c.l.b16 %v179
      %v226 = vunpack.c.l.b16 %v180
      %v227 = vunpack.c.l.b16 %v181
      %v228 = vunpack.c.l.b16 %v182
      %v229 = vunpack.c.l.b16 %v183
      %v230 = vunpack.c.l.b16 %v184
      %v231 = vunpack.c.l.b16 %v185
      %v232 = vunpack.c.l.b16 %v186
      %v233 = vunpack.c.l.b16 %v187
      %v234 = vunpack.c.l.b16 %v188
      %v235 = vunpack.c.l.b16 %v189
      %v236 = vunpack.c.l.b16 %v190
      %v237 = vunpack.c.l.b16 %v191
      %v238 = vunpack.c.l.b16 %v192
      %v239 = vpack.c.b16 %v222, %v221
      %v240 = vpack.c.b16 %v224, %v223
      %v241 = vpack.c.b16 %v226, %v225
      %v242 = vpack.c.b16 %v228, %v227
      %v243 = vpack.c.b16 %v230, %v229
      %v244 = vpack.c.b16 %v232, %v231
      %v245 = vpack.c.b16 %v234, %v233
      %v246 = vpack.c.b16 %v236, %v235
      %v247 = vpack.c.b16 %v238, %v237
      %v258 = vunpack.c.l.b16 %v193
      %v259 = vunpack.c.h.b16 %v193
      %v260 = vunpack.c.l.b16 %v194
      %v261 = vunpack.c.h.b16 %v194
      %v262 = vunpack.c.l.b16 %v195
      %v263 = vunpack.c.h.b16 %v195
      %v264 = vunpack.c.l.b16 %v196
      %v265 = vunpack.c.h.b16 %v196
      %v266 = vunpack.c.l.b16 %v197
      %v267 = vunpack.c.h.b16 %v197
      %v268 = vunpack.c.l.b16 %v198
      %v269 = vunpack.c.h.b16 %v198
      %v270 = vunpack.c.l.b16 %v199
      %v271 = vunpack.c.h.b16 %v199
      %v272 = vunpack.c.l.b16 %v200
      %v273 = vunpack.c.h.b16 %v200
      %v274 = vunpack.c.l.b16 %v201
      %v275 = vunpack.c.h.b16 %v201
      %v276 = vunpack.c.l.b16 %v202
      %v277 = vunpack.c.h.b16 %v202
      %v278 = vpack.c.b16 %v262, %v258
      %v279 = vpack.c.b16 %v263, %v259
      %v280 = vpack.c.b16 %v264, %v260
      %v281 = vpack.c.b16 %v265, %v261
      %v282 = vpack.c.b16 %v270, %v266
      %v283 = vpack.c.b16 %v271, %v267
      %v284 = vpack.c.b16 %v272, %v268
      %v285 = vpack.c.b16 %v273, %v269
      %v286 = vpack.c.b16 %v274, %v274
      %v287 = vpack.c.b16 %v275, %v275
      %v288 = vpack.c.b16 %v276, %v276
      %v289 = vpack.c.b16 %v277, %v277
      %vm298 = vcmask 326656
      %v300 = vsel %vm298, %v239, 0
      %v303 = vsel %vm298, %v240, 0
      %v306 = vsel %vm298, %v241, 0
      %v309 = vsel %vm298, %v242, 0
      %v312 = vsel %vm298, %v243, 0
      %v315 = vsel %vm298, %v244, 0
      %v318 = vsel %vm298, %v245, 0
      %v321 = vsel %vm298, %v246, 0
      %v324 = vsel %vm298, %v247, 0
      %vm326 = vcmask 1043456
      %v328 = vsel %vm326, %v286, 0
      %v331 = vsel %vm326, %v287, 0
      %v334 = vsel %vm326, %v288, 0
      %v337 = vsel %vm326, %v289, 0
      %339 = vmatpush.bf16.msra.mxu0 0
      %340 = vmatpush.bf16.msra.mxu0 0
      %341 = vmatpush.bf16.msra.mxu0 0
      %342 = vmatpush.bf16.msra.mxu0 0
      %343 = vmatpush.bf16.msra.mxu0 0
      %344 = vmatpush.bf16.msra.mxu0 %v328
      %345 = vmatpush.bf16.msra.mxu0 %v282
      %346 = vmatpush.bf16.msra.mxu0 %v278
      %347 = vmatmul.bf16.gmra.mxu0 %v300
      %v348 = vpop.f32.mrf.mxu0
      %v349 = vadd.f32 0.0, %v348
      %v350 = vpop.f32.mrf.mxu0
      %v351 = vadd.f32 0.0, %v350
      %352 = vmatmul.bf16.gmra.mxu0 %v303
      %v353 = vpop.f32.mrf.mxu0
      %v354 = vadd.f32 0.0, %v353
      %v355 = vpop.f32.mrf.mxu0
      %v356 = vadd.f32 0.0, %v355
      %357 = vmatmul.bf16.gmra.mxu0 %v306
      %v358 = vpop.f32.mrf.mxu0
      %v359 = vadd.f32 0.0, %v358
      %v360 = vpop.f32.mrf.mxu0
      %v361 = vadd.f32 0.0, %v360
      %362 = vmatmul.bf16.gmra.mxu0 %v309
      %v363 = vpop.f32.mrf.mxu0
      %v364 = vadd.f32 0.0, %v363
      %v365 = vpop.f32.mrf.mxu0
      %v366 = vadd.f32 0.0, %v365
      %367 = vmatmul.bf16.gmra.mxu0 %v312
      %v368 = vpop.f32.mrf.mxu0
      %v369 = vadd.f32 0.0, %v368
      %v370 = vpop.f32.mrf.mxu0
      %v371 = vadd.f32 0.0, %v370
      %372 = vmatmul.bf16.gmra.mxu0 %v315
      %v373 = vpop.f32.mrf.mxu0
      %v374 = vadd.f32 0.0, %v373
      %v375 = vpop.f32.mrf.mxu0
      %v376 = vadd.f32 0.0, %v375
      %377 = vmatmul.bf16.gmra.mxu0 %v318
      %v378 = vpop.f32.mrf.mxu0
      %v379 = vadd.f32 0.0, %v378
      %v380 = vpop.f32.mrf.mxu0
      %v381 = vadd.f32 0.0, %v380
      %382 = vmatmul.bf16.gmra.mxu0 %v321
      %v383 = vpop.f32.mrf.mxu0
      %v384 = vadd.f32 0.0, %v383
      %v385 = vpop.f32.mrf.mxu0
      %v386 = vadd.f32 0.0, %v385
      %387 = vmatmul.bf16.gmra.mxu0 %v324
      %v388 = vpop.f32.mrf.mxu0
      %v389 = vadd.f32 0.0, %v388
      %v390 = vpop.f32.mrf.mxu0
      %v391 = vadd.f32 0.0, %v390
      %392 = vdwg.mxu0
      %393 = vmatpush.bf16.msra.mxu0 0
      %394 = vmatpush.bf16.msra.mxu0 0
      %395 = vmatpush.bf16.msra.mxu0 0
      %396 = vmatpush.bf16.msra.mxu0 0
      %397 = vmatpush.bf16.msra.mxu0 0
      %398 = vmatpush.bf16.msra.mxu0 %v331
      %399 = vmatpush.bf16.msra.mxu0 %v283
      %400 = vmatpush.bf16.msra.mxu0 %v279
      %401 = vmatmul.bf16.gmra.mxu0 %v300
      %v402 = vpop.f32.mrf.mxu0
      %v403 = vadd.f32 0.0, %v402
      %v404 = vpop.f32.mrf.mxu0
      %v405 = vadd.f32 0.0, %v404
      %406 = vmatmul.bf16.gmra.mxu0 %v303
      %v407 = vpop.f32.mrf.mxu0
      %v408 = vadd.f32 0.0, %v407
      %v409 = vpop.f32.mrf.mxu0
      %v410 = vadd.f32 0.0, %v409
      %411 = vmatmul.bf16.gmra.mxu0 %v306
      %v412 = vpop.f32.mrf.mxu0
      %v413 = vadd.f32 0.0, %v412
      %v414 = vpop.f32.mrf.mxu0
      %v415 = vadd.f32 0.0, %v414
      %416 = vmatmul.bf16.gmra.mxu0 %v309
      %v417 = vpop.f32.mrf.mxu0
      %v418 = vadd.f32 0.0, %v417
      %v419 = vpop.f32.mrf.mxu0
      %v420 = vadd.f32 0.0, %v419
      %421 = vmatmul.bf16.gmra.mxu0 %v312
      %v422 = vpop.f32.mrf.mxu0
      %v423 = vadd.f32 0.0, %v422
      %v424 = vpop.f32.mrf.mxu0
      %v425 = vadd.f32 0.0, %v424
      %426 = vmatmul.bf16.gmra.mxu0 %v315
      %v427 = vpop.f32.mrf.mxu0
      %v428 = vadd.f32 0.0, %v427
      %v429 = vpop.f32.mrf.mxu0
      %v430 = vadd.f32 0.0, %v429
      %431 = vmatmul.bf16.gmra.mxu0 %v318
      %v432 = vpop.f32.mrf.mxu0
      %v433 = vadd.f32 0.0, %v432
      %v434 = vpop.f32.mrf.mxu0
      %v435 = vadd.f32 0.0, %v434
      %436 = vmatmul.bf16.gmra.mxu0 %v321
      %v437 = vpop.f32.mrf.mxu0
      %v438 = vadd.f32 0.0, %v437
      %v439 = vpop.f32.mrf.mxu0
      %v440 = vadd.f32 0.0, %v439
      %441 = vmatmul.bf16.gmra.mxu0 %v324
      %v442 = vpop.f32.mrf.mxu0
      %v443 = vadd.f32 0.0, %v442
      %v444 = vpop.f32.mrf.mxu0
      %v445 = vadd.f32 0.0, %v444
      %446 = vdwg.mxu0
      %447 = vmatpush.bf16.msra.mxu0 0
      %448 = vmatpush.bf16.msra.mxu0 0
      %449 = vmatpush.bf16.msra.mxu0 0
      %450 = vmatpush.bf16.msra.mxu0 0
      %451 = vmatpush.bf16.msra.mxu0 0
      %452 = vmatpush.bf16.msra.mxu0 %v334
      %453 = vmatpush.bf16.msra.mxu0 %v284
      %454 = vmatpush.bf16.msra.mxu0 %v280
      %455 = vmatmul.bf16.gmra.mxu0 %v300
      %v456 = vpop.f32.mrf.mxu0
      %v457 = vadd.f32 0.0, %v456
      %v458 = vpop.f32.mrf.mxu0
      %v459 = vadd.f32 0.0, %v458
      %460 = vmatmul.bf16.gmra.mxu0 %v303
      %v461 = vpop.f32.mrf.mxu0
      %v462 = vadd.f32 0.0, %v461
      %v463 = vpop.f32.mrf.mxu0
      %v464 = vadd.f32 0.0, %v463
      %465 = vmatmul.bf16.gmra.mxu0 %v306
      %v466 = vpop.f32.mrf.mxu0
      %v467 = vadd.f32 0.0, %v466
      %v468 = vpop.f32.mrf.mxu0
      %v469 = vadd.f32 0.0, %v468
      %470 = vmatmul.bf16.gmra.mxu0 %v309
      %v471 = vpop.f32.mrf.mxu0
      %v472 = vadd.f32 0.0, %v471
      %v473 = vpop.f32.mrf.mxu0
      %v474 = vadd.f32 0.0, %v473
      %475 = vmatmul.bf16.gmra.mxu0 %v312
      %v476 = vpop.f32.mrf.mxu0
      %v477 = vadd.f32 0.0, %v476
      %v478 = vpop.f32.mrf.mxu0
      %v479 = vadd.f32 0.0, %v478
      %480 = vmatmul.bf16.gmra.mxu0 %v315
      %v481 = vpop.f32.mrf.mxu0
      %v482 = vadd.f32 0.0, %v481
      %v483 = vpop.f32.mrf.mxu0
      %v484 = vadd.f32 0.0, %v483
      %485 = vmatmul.bf16.gmra.mxu0 %v318
      %v486 = vpop.f32.mrf.mxu0
      %v487 = vadd.f32 0.0, %v486
      %v488 = vpop.f32.mrf.mxu0
      %v489 = vadd.f32 0.0, %v488
      %490 = vmatmul.bf16.gmra.mxu0 %v321
      %v491 = vpop.f32.mrf.mxu0
      %v492 = vadd.f32 0.0, %v491
      %v493 = vpop.f32.mrf.mxu0
      %v494 = vadd.f32 0.0, %v493
      %495 = vmatmul.bf16.gmra.mxu0 %v324
      %v496 = vpop.f32.mrf.mxu0
      %v497 = vadd.f32 0.0, %v496
      %v498 = vpop.f32.mrf.mxu0
      %v499 = vadd.f32 0.0, %v498
      %500 = vdwg.mxu0
      %501 = vmatpush.bf16.msra.mxu0 0
      %502 = vmatpush.bf16.msra.mxu0 0
      %503 = vmatpush.bf16.msra.mxu0 0
      %504 = vmatpush.bf16.msra.mxu0 0
      %505 = vmatpush.bf16.msra.mxu0 0
      %506 = vmatpush.bf16.msra.mxu0 %v337
      %507 = vmatpush.bf16.msra.mxu0 %v285
      %508 = vmatpush.bf16.msra.mxu0 %v281
      %509 = vmatmul.bf16.gmra.mxu0 %v300
      %v510 = vpop.f32.mrf.mxu0
      %v511 = vadd.f32 0.0, %v510
      %v512 = vpop.f32.mrf.mxu0
      %v513 = vadd.f32 0.0, %v512
      %514 = vmatmul.bf16.gmra.mxu0 %v303
      %v515 = vpop.f32.mrf.mxu0
      %v516 = vadd.f32 0.0, %v515
      %v517 = vpop.f32.mrf.mxu0
      %v518 = vadd.f32 0.0, %v517
      %519 = vmatmul.bf16.gmra.mxu0 %v306
      %v520 = vpop.f32.mrf.mxu0
      %v521 = vadd.f32 0.0, %v520
      %v522 = vpop.f32.mrf.mxu0
      %v523 = vadd.f32 0.0, %v522
      %524 = vmatmul.bf16.gmra.mxu0 %v309
      %v525 = vpop.f32.mrf.mxu0
      %v526 = vadd.f32 0.0, %v525
      %v527 = vpop.f32.mrf.mxu0
      %v528 = vadd.f32 0.0, %v527
      %529 = vmatmul.bf16.gmra.mxu0 %v312
      %v530 = vpop.f32.mrf.mxu0
      %v531 = vadd.f32 0.0, %v530
      %v532 = vpop.f32.mrf.mxu0
      %v533 = vadd.f32 0.0, %v532
      %534 = vmatmul.bf16.gmra.mxu0 %v315
      %v535 = vpop.f32.mrf.mxu0
      %v536 = vadd.f32 0.0, %v535
      %v537 = vpop.f32.mrf.mxu0
      %v538 = vadd.f32 0.0, %v537
      %539 = vmatmul.bf16.gmra.mxu0 %v318
      %v540 = vpop.f32.mrf.mxu0
      %v541 = vadd.f32 0.0, %v540
      %v542 = vpop.f32.mrf.mxu0
      %v543 = vadd.f32 0.0, %v542
      %544 = vmatmul.bf16.gmra.mxu0 %v321
      %v545 = vpop.f32.mrf.mxu0
      %v546 = vadd.f32 0.0, %v545
      %v547 = vpop.f32.mrf.mxu0
      %v548 = vadd.f32 0.0, %v547
      %549 = vmatmul.bf16.gmra.mxu0 %v324
      %v550 = vpop.f32.mrf.mxu0
      %v551 = vadd.f32 0.0, %v550
      %v552 = vpop.f32.mrf.mxu0
      %v553 = vadd.f32 0.0, %v552
      %554 = vdwg.mxu0
      %v555 = vmax.f32 %v349, %v403
      %v556 = vmax.f32 %v351, %v405
      %v557 = vmax.f32 %v354, %v408
      %v558 = vmax.f32 %v356, %v410
      %v559 = vmax.f32 %v359, %v413
      %v560 = vmax.f32 %v361, %v415
      %v561 = vmax.f32 %v364, %v418
      %v562 = vmax.f32 %v366, %v420
      %v563 = vmax.f32 %v369, %v423
      %v564 = vmax.f32 %v371, %v425
      %v565 = vmax.f32 %v374, %v428
      %v566 = vmax.f32 %v376, %v430
      %v567 = vmax.f32 %v379, %v433
      %v568 = vmax.f32 %v381, %v435
      %v569 = vmax.f32 %v384, %v438
      %v570 = vmax.f32 %v386, %v440
      %v571 = vmax.f32 %v389, %v443
      %v572 = vmax.f32 %v391, %v445
      %v573 = vmax.f32 %v555, %v457
      %v574 = vmax.f32 %v556, %v459
      %v575 = vmax.f32 %v557, %v462
      %v576 = vmax.f32 %v558, %v464
      %v577 = vmax.f32 %v559, %v467
      %v578 = vmax.f32 %v560, %v469
      %v579 = vmax.f32 %v561, %v472
      %v580 = vmax.f32 %v562, %v474
      %v581 = vmax.f32 %v563, %v477
      %v582 = vmax.f32 %v564, %v479
      %v583 = vmax.f32 %v565, %v482
      %v584 = vmax.f32 %v566, %v484
      %v585 = vmax.f32 %v567, %v487
      %v586 = vmax.f32 %v568, %v489
      %v587 = vmax.f32 %v569, %v492
      %v588 = vmax.f32 %v570, %v494
      %v589 = vmax.f32 %v571, %v497
      %v590 = vmax.f32 %v572, %v499
      %v591 = vmax.f32 %v573, %v511
      %v592 = vmax.f32 %v574, %v513
      %v593 = vmax.f32 %v575, %v516
      %v594 = vmax.f32 %v576, %v518
      %v595 = vmax.f32 %v577, %v521
      %v596 = vmax.f32 %v578, %v523
      %v597 = vmax.f32 %v579, %v526
      %v598 = vmax.f32 %v580, %v528
      %v599 = vmax.f32 %v581, %v531
      %v600 = vmax.f32 %v582, %v533
      %v601 = vmax.f32 %v583, %v536
      %v602 = vmax.f32 %v584, %v538
      %v603 = vmax.f32 %v585, %v541
      %v604 = vmax.f32 %v586, %v543
      %v605 = vmax.f32 %v587, %v546
      %v606 = vmax.f32 %v588, %v548
      %v607 = vmax.f32 %v589, %v551
      %v608 = vmax.f32 %v590, %v553
      %v609 = vld [vmem:[%s2] sm:$0x1]
      %v611 = vperm.slane %v609, 0
      %v613 = vadd.f32 %v591, %v611
      %v614 = vadd.f32 %v592, %v611
      %v615 = vadd.f32 %v593, %v611
      %v616 = vadd.f32 %v594, %v611
      %v617 = vadd.f32 %v595, %v611
      %v618 = vadd.f32 %v596, %v611
      %v619 = vadd.f32 %v597, %v611
      %v620 = vadd.f32 %v598, %v611
      %v621 = vadd.f32 %v599, %v611
      %v622 = vadd.f32 %v600, %v611
      %v623 = vadd.f32 %v601, %v611
      %v624 = vadd.f32 %v602, %v611
      %v625 = vadd.f32 %v603, %v611
      %v626 = vadd.f32 %v604, %v611
      %v627 = vadd.f32 %v605, %v611
      %v628 = vadd.f32 %v606, %v611
      %v629 = vadd.f32 %v607, %v611
      %v630 = vadd.f32 %v608, %v611
      %v631 = vmax.f32 %v613, 0.0
      %v632 = vmax.f32 %v614, 0.0
      %v633 = vmax.f32 %v615, 0.0
      %v634 = vmax.f32 %v616, 0.0
      %v635 = vmax.f32 %v617, 0.0
      %v636 = vmax.f32 %v618, 0.0
      %v637 = vmax.f32 %v619, 0.0
      %v638 = vmax.f32 %v620, 0.0
      %v639 = vmax.f32 %v621, 0.0
      %v640 = vmax.f32 %v622, 0.0
      %v641 = vmax.f32 %v623, 0.0
      %v642 = vmax.f32 %v624, 0.0
      %v643 = vmax.f32 %v625, 0.0
      %v644 = vmax.f32 %v626, 0.0
      %v645 = vmax.f32 %v627, 0.0
      %v646 = vmax.f32 %v628, 0.0
      %v647 = vmax.f32 %v629, 0.0
      %v648 = vmax.f32 %v630, 0.0
      %v649 = vpack.c.bf16 %v631, %v631
      %v650 = vpack.c.bf16 %v632, %v632
      %v651 = vpack.c.bf16 %v633, %v633
      %v652 = vpack.c.bf16 %v634, %v634
      %v653 = vpack.c.bf16 %v635, %v635
      %v654 = vpack.c.bf16 %v636, %v636
      %v655 = vpack.c.bf16 %v637, %v637
      %v656 = vpack.c.bf16 %v638, %v638
      %v657 = vpack.c.bf16 %v639, %v639
      %v658 = vpack.c.bf16 %v640, %v640
      %v659 = vpack.c.bf16 %v641, %v641
      %v660 = vpack.c.bf16 %v642, %v642
      %v661 = vpack.c.bf16 %v643, %v643
      %v662 = vpack.c.bf16 %v644, %v644
      %v663 = vpack.c.bf16 %v645, %v645
      %v664 = vpack.c.bf16 %v646, %v646
      %v665 = vpack.c.bf16 %v647, %v647
      %v666 = vpack.c.bf16 %v648, %v648
      %667 = vst [vmem:[%s172] sm:$0xf] %v649
      %668 = vst [vmem:[%s172 + $0x4] sm:$0xf] %v650
      %669 = vst [vmem:[%s172 + $0x8] sm:$0xf] %v651
      %670 = vst [vmem:[%s172 + $0xc] sm:$0xf] %v652
      %671 = vst [vmem:[%s172 + $0x10] sm:$0xf] %v653
      %672 = vst [vmem:[%s172 + $0x14] sm:$0xf] %v654
      %673 = vst [vmem:[%s172 + $0x18] sm:$0xf] %v655
      %674 = vst [vmem:[%s172 + $0x1c] sm:$0xf] %v656
      %675 = vst [vmem:[%s172 + $0x20] sm:$0xf] %v657
      %676 = vst [vmem:[%s172 + $0x24] sm:$0xf] %v658
      %677 = vst [vmem:[%s172 + $0x28] sm:$0xf] %v659
      %678 = vst [vmem:[%s172 + $0x2c] sm:$0xf] %v660
      %679 = vst [vmem:[%s172 + $0x30] sm:$0xf] %v661
      %680 = vst [vmem:[%s172 + $0x34] sm:$0xf] %v662
      %681 = vst [vmem:[%s172 + $0x38] sm:$0xf] %v663
      %682 = vst [vmem:[%s172 + $0x3c] sm:$0xf] %v664
      %683 = vst [vmem:[%s172 + $0x40] sm:$0xf] %v665
      %684 = vst [vmem:[%s172 + $0x44] sm:$0xf] %v666
      %s685 = smul.u32 18, %s14
      %p686 = scmp.lt.s32.totalorder %s685, 35
      %s687 = scalar_select %p686, %s685, 35
      %s688 = smul.addr %s687, 4
      %s689 = scalar_lea.vmem %s3, %s688
      // Predicated region
      $region33: #{cust_lenet_forward.3} parent=31 // pred_check
        %p690 = pneg %p100
      $region34: #{cust_lenet_forward.3} parent=31 // pred_check_branch
        %692 = sbr.rel (%p690) target = $region36
      $region35: #{cust_lenet_forward.3} parent=31 // pred_region
        %s693 = smul.u32 18, %s14
      $region36: #{cust_lenet_forward.3} parent=31 // pred_fallthru
        _
    $region32: #{cust_lenet_forward.3} parent=5 // pred_fallthru
      _
    %p694 = scmp.le.s32.totalorder 2, %s9
    // Predicated region
    $region37: #{cust_lenet_forward.3} parent=5 // pred_check
      %p695 = pneg %p694
    $region38: #{cust_lenet_forward.3} parent=5 // pred_check_branch
      %697 = sbr.rel (%p695) target = $region40
    $region39: #{cust_lenet_forward.3} parent=5 // pred_region
      %s698 = ssub.s32 %s9, 2
      // Predicated region
      $region41: #{cust_lenet_forward.3} parent=39 // pred_check
        %p699 = pneg %p106
      $region42: #{cust_lenet_forward.3} parent=39 // pred_check_branch
        %701 = sbr.rel (%p699) target = $region44
      $region43: #{cust_lenet_forward.3} parent=39 // pred_region
        %s702 = smul.u32 18, %s15
        %p703 = scmp.lt.s32.totalorder %s702, 35
        %s704 = scalar_select %p703, %s702, 35
        %s705 = smul.addr %s704, 4
        %s706 = scalar_lea.vmem %s3, %s705
      $region44: #{cust_lenet_forward.3} parent=39 // pred_fallthru
        _
    $region40: #{cust_lenet_forward.3} parent=5 // pred_fallthru
      _
  $region6: #{cust_lenet_forward.3} parent=0 // loop_footer
    %s13 = sadd.s32 1, %s9
  $region7: #{cust_lenet_forward.3} parent=0 // loop_footer_branch
    %8 = sbr.rel target = $region3
  $region8: #{cust_lenet_forward.3} parent=0 // loop_exit
    _

// kernel: cust_lenet_forward.4
$region0: #{cust_lenet_forward.4}
  #allocation0 [shape = 'u32[]', space=smem, size = 0x4, offset = 0x4, fixed_abs, tag = 'smem constant byte address 0x4 - core index']
  #allocation1 [shape = 'u32[72,128]{1,0:T(1,128)}', space=vmem, size = 0x9000, scoped, tag = 'internal scratch']
  %s0 = inlined_call_operand.vmem [shape: bf16[32,1152], index: 0, kind: input, shape index: {}]
  %s1 = inlined_call_operand.vmem [shape: bf16[1152,512], index: 1, kind: input, shape index: {}]
  %s2 = inlined_call_operand.vmem [shape: f32[1,128], index: 2, kind: input, shape index: {}]
  %s3 = inlined_call_operand.vmem [shape: bf16[32,128], index: 3, kind: output, shape index: {}]
  %s4 = sld [smem:[#allocation0]]
  $region45: #{cust_lenet_forward.4} parent=0
    _
  %s6 = ssub.s32 1, %s4
  %s7 = scalar_select 0, %s6, %s4
  loop: start=0, step=1, limit=4
  $region2: #{cust_lenet_forward.4} parent=0 // loop_pre_header
    _
  $region3: #{cust_lenet_forward.4} parent=0 // loop_header
    %s9 = sphi 0, %s13
    %p10 = scmp.ge.s32.totalorder %s9, 4
    %s19 = sphi 0, %s21
    %s22 = sphi 0, %s19
    %s23 = sphi 0, %s22
    %s39 = sphi 0, %s23
    %s43 = sphi 0, %s43
    %s45 = sphi 0, %s43
    %s46 = sphi 0, %s45
    %s60 = sphi 0, %s46
    %s64 = sphi 0, %s64
    %s66 = sphi 0, %s64
    %s67 = sphi 0, %s66
    %s81 = sphi 0, %s67
    %s87 = sphi 0, %s89
    %s90 = sphi 0, %s87
    %s91 = sphi 0, %s90
    %s107 = sphi 0, %s91
  $region4: #{cust_lenet_forward.4} parent=0 // loop_header_branch
    %12 = sbr.rel (%p10) target = $region8
  $region5: #{cust_lenet_forward.4} parent=0 // loop_body
    %s14 = ssub.s32 %s9, 1
    %s15 = ssub.s32 %s9, 2
    %s16 = sadd.s32 %s9, 1
    %s17 = ssub.s32 %s9, %s16
    %p18 = scmp.eq.s32.totalorder %s17, 0
    %s20 = sadd.s32 %s19, 1
    %s21 = scalar_select %p18, %s19, %s20
    %p24 = pneg %p18
    %p25 = scmp.eq.s32.totalorder %s9, 1
    %p26 = por %p24, %p25
    %p27 = scmp.ne.s32.totalorder %s19, %s22
    %p28 = scmp.eq.s32.totalorder %s9, 0
    %p29 = por %p27, %p28
    %p30 = scmp.ne.s32.totalorder %s19, %s22
    %p31 = scmp.eq.s32.totalorder %s14, 1
    %p32 = por %p30, %p31
    %p33 = scmp.ne.s32.totalorder %s22, %s23
    %p34 = scmp.eq.s32.totalorder %s14, 0
    %p35 = por %p33, %p34
    %p36 = scmp.ne.s32.totalorder %s22, %s23
    %p37 = scmp.eq.s32.totalorder %s15, 1
    %p38 = por %p36, %p37
    %p40 = scmp.ne.s32.totalorder %s23, %s39
    %p41 = scmp.eq.s32.totalorder %s15, 0
    %p42 = por %p40, %p41
    %s44 = sadd.s32 %s43, 1
    %p47 = scmp.eq.s32.totalorder %s9, 1
    %p48 = scmp.ne.s32.totalorder %s43, %s45
    %p49 = scmp.eq.s32.totalorder %s9, 0
    %p50 = por %p48, %p49
    %p51 = scmp.ne.s32.totalorder %s43, %s45
    %p52 = scmp.eq.s32.totalorder %s14, 1
    %p53 = por %p51, %p52
    %p54 = scmp.ne.s32.totalorder %s45, %s46
    %p55 = scmp.eq.s32.totalorder %s14, 0
    %p56 = por %p54, %p55
    %p57 = scmp.ne.s32.totalorder %s45, %s46
    %p58 = scmp.eq.s32.totalorder %s15, 1
    %p59 = por %p57, %p58
    %p61 = scmp.ne.s32.totalorder %s46, %s60
    %p62 = scmp.eq.s32.totalorder %s15, 0
    %p63 = por %p61, %p62
    %s65 = sadd.s32 %s64, 1
    %p68 = scmp.eq.s32.totalorder %s9, 1
    %p69 = scmp.ne.s32.totalorder %s64, %s66
    %p70 = scmp.eq.s32.totalorder %s9, 0
    %p71 = por %p69, %p70
    %p72 = scmp.ne.s32.totalorder %s64, %s66
    %p73 = scmp.eq.s32.totalorder %s14, 1
    %p74 = por %p72, %p73
    %p75 = scmp.ne.s32.totalorder %s66, %s67
    %p76 = scmp.eq.s32.totalorder %s14, 0
    %p77 = por %p75, %p76
    %p78 = scmp.ne.s32.totalorder %s66, %s67
    %p79 = scmp.eq.s32.totalorder %s15, 1
    %p80 = por %p78, %p79
    %p82 = scmp.ne.s32.totalorder %s67, %s81
    %p83 = scmp.eq.s32.totalorder %s15, 0
    %p84 = por %p82, %p83
    %s85 = ssub.s32 %s9, %s16
    %p86 = scmp.eq.s32.totalorder %s85, 0
    %s88 = sadd.s32 %s87, 1
    %s89 = scalar_select %p86, %s87, %s88
    %p92 = pneg %p86
    %p93 = scmp.eq.s32.totalorder %s9, 1
    %p94 = por %p92, %p93
    %p95 = scmp.ne.s32.totalorder %s87, %s90
    %p96 = scmp.eq.s32.totalorder %s9, 0
    %p97 = por %p95, %p96
    %p98 = scmp.ne.s32.totalorder %s87, %s90
    %p99 = scmp.eq.s32.totalorder %s14, 1
    %p100 = por %p98, %p99
    %p101 = scmp.ne.s32.totalorder %s90, %s91
    %p102 = scmp.eq.s32.totalorder %s14, 0
    %p103 = por %p101, %p102
    %p104 = scmp.ne.s32.totalorder %s90, %s91
    %p105 = scmp.eq.s32.totalorder %s15, 1
    %p106 = por %p104, %p105
    %p108 = scmp.ne.s32.totalorder %s91, %s107
    %p109 = scmp.eq.s32.totalorder %s15, 0
    %p110 = por %p108, %p109
    %p111 = scmp.le.s32.totalorder 1, %s9
    %p112 = scmp.lt.s32.totalorder %s9, 3
    %p113 = pnand %p111, %p112
    %p114 = pneg %p113
    // Predicated region
    $region9: #{cust_lenet_forward.4} parent=5 // pred_check
      _
    $region10: #{cust_lenet_forward.4} parent=5 // pred_check_branch
      %116 = sbr.rel (%p113) target = $region12
    $region11: #{cust_lenet_forward.4} parent=5 // pred_region
      %s117 = ssub.s32 %s9, 1
      // Predicated region
      $region13: #{cust_lenet_forward.4} parent=11 // pred_check
        %p118 = pneg %p56
      $region14: #{cust_lenet_forward.4} parent=11 // pred_check_branch
        %120 = sbr.rel (%p118) target = $region16
      $region15: #{cust_lenet_forward.4} parent=11 // pred_region
        _
      $region16: #{cust_lenet_forward.4} parent=11 // pred_fallthru
        _
      // Predicated region
      $region17: #{cust_lenet_forward.4} parent=11 // pred_check
        %p121 = pneg %p77
      $region18: #{cust_lenet_forward.4} parent=11 // pred_check_branch
        %123 = sbr.rel (%p121) target = $region20
      $region19: #{cust_lenet_forward.4} parent=11 // pred_region
        _
      $region20: #{cust_lenet_forward.4} parent=11 // pred_fallthru
        _
    $region12: #{cust_lenet_forward.4} parent=5 // pred_fallthru
      _
    %p124 = scmp.lt.s32.totalorder %s9, 2
    // Predicated region
    $region21: #{cust_lenet_forward.4} parent=5 // pred_check
      %p125 = pneg %p124
    $region22: #{cust_lenet_forward.4} parent=5 // pred_check_branch
      %127 = sbr.rel (%p125) target = $region24
    $region23: #{cust_lenet_forward.4} parent=5 // pred_region
      // Predicated region
      $region25: #{cust_lenet_forward.4} parent=23 // pred_check
        %p128 = pneg %p29
      $region26: #{cust_lenet_forward.4} parent=23 // pred_check_branch
        %130 = sbr.rel (%p128) target = $region28
      $region27: #{cust_lenet_forward.4} parent=23 // pred_region
        %s131 = smul.u32 2, %s9
        %p132 = scmp.lt.s32.totalorder %s131, 3
        %s133 = scalar_select %p132, %s131, 3
        %s134 = smul.addr %s133, 9
        %s135 = smul.addr %s134, 4
        %s136 = scalar_lea.vmem %s0, %s135
        %s137 = smul.u32 2, %s9
      $region28: #{cust_lenet_forward.4} parent=23 // pred_fallthru
        _
    $region24: #{cust_lenet_forward.4} parent=5 // pred_fallthru
      _
    %p138 = scmp.le.s32.totalorder 1, %s9
    %p139 = scmp.lt.s32.totalorder %s9, 3
    %p140 = pnand %p138, %p139
    %p141 = pneg %p140
    // Predicated region
    $region29: #{cust_lenet_forward.4} parent=5 // pred_check
      _
    $region30: #{cust_lenet_forward.4} parent=5 // pred_check_branch
      %143 = sbr.rel (%p140) target = $region32
    $region31: #{cust_lenet_forward.4} parent=5 // pred_region
      %s144 = ssub.s32 %s9, 1
      %s145 = smul.u32 2, %s14
      %p146 = scmp.lt.s32.totalorder %s145, 3
      %s147 = scalar_select %p146, %s145, 3
      %s148 = smul.addr %s147, 9
      %s149 = smul.addr %s148, 4
      %s150 = scalar_lea.vmem %s0, %s149
      %p151 = pneg %p35
      %p152 = pneg %p32
      %p153 = pneg %p56
      %p154 = pneg %p53
      %p155 = pneg %p77
      %p156 = pneg %p74
      %p157 = pneg %p103
      %p158 = pneg %p100
      %s159 = smul.u32 2, %s14
      %p160 = scmp.lt.s32.totalorder %s159, 3
      %s161 = scalar_select %p160, %s159, 3
      %s162 = smul.addr %s161, 4
      %s163 = scalar_lea.vmem %s3, %s162
      %s164 = smul.u32 2, %s14
      %p165 = scmp.lt.s32.totalorder %s164, 3
      %s166 = scalar_select %p165, %s164, 3
      %s167 = smul.addr %s166, 9
      %s168 = smul.addr %s167, 4
      %s169 = scalar_lea.vmem %s0, %s168
      %s170 = smul.u32 2, %s14
      %s171 = smul.u32 2, %s14
      %p172 = scmp.lt.s32.totalorder %s171, 3
      %s173 = scalar_select %p172, %s171, 3
      %s174 = smul.addr %s173, 4
      %s175 = scalar_lea.vmem %s3, %s174
      %s176 = smul.u32 2, %s14
      %v177 = vld [vmem:[%s169] sm:$0xff]
      %v178 = vld [vmem:[%s169 + $0x8] sm:$0xff]
      %v179 = vld [vmem:[%s169 + $0x10] sm:$0xff]
      %v180 = vld [vmem:[%s169 + $0x18] sm:$0xff]
      %v181 = vld [vmem:[%s169 + $0x20] sm:$0xf]
      %v182 = vld [vmem:[%s169 + $0x24] sm:$0xff]
      %v183 = vld [vmem:[%s169 + $0x2c] sm:$0xff]
      %v184 = vld [vmem:[%s169 + $0x34] sm:$0xff]
      %v185 = vld [vmem:[%s169 + $0x3c] sm:$0xff]
      %v186 = vld [vmem:[%s169 + $0x44] sm:$0xf]
      %v187 = vld [vmem:[%s1] sm:$0xff]
      %v188 = vld [vmem:[%s1 + $0x8] sm:$0xff]
      %v189 = vld [vmem:[%s1 + $0x10] sm:$0xff]
      %v190 = vld [vmem:[%s1 + $0x18] sm:$0xff]
      %v191 = vld [vmem:[%s1 + $0x20] sm:$0xff]
      %v192 = vld [vmem:[%s1 + $0x28] sm:$0xff]
      %v193 = vld [vmem:[%s1 + $0x30] sm:$0xff]
      %v194 = vld [vmem:[%s1 + $0x38] sm:$0xff]
      %v195 = vld [vmem:[%s1 + $0x40] sm:$0xff]
      %v196 = vld [vmem:[%s1 + $0x48] sm:$0xff]
      %v197 = vld [vmem:[%s1 + $0x50] sm:$0xff]
      %v198 = vld [vmem:[%s1 + $0x58] sm:$0xff]
      %v199 = vld [vmem:[%s1 + $0x60] sm:$0xff]
      %v200 = vld [vmem:[%s1 + $0x68] sm:$0xff]
      %v201 = vld [vmem:[%s1 + $0x70] sm:$0xff]
      %v202 = vld [vmem:[%s1 + $0x78] sm:$0xff]
      %v203 = vld [vmem:[%s1 + $0x80] sm:$0xff]
      %v204 = vld [vmem:[%s1 + $0x88] sm:$0xff]
      %v205 = vld [vmem:[%s1 + $0x90] sm:$0xff]
      %v206 = vld [vmem:[%s1 + $0x98] sm:$0xff]
      %v207 = vld [vmem:[%s1 + $0xa0] sm:$0xff]
      %v208 = vld [vmem:[%s1 + $0xa8] sm:$0xff]
      %v209 = vld [vmem:[%s1 + $0xb0] sm:$0xff]
      %v210 = vld [vmem:[%s1 + $0xb8] sm:$0xff]
      %v211 = vld [vmem:[%s1 + $0xc0] sm:$0xff]
      %v212 = vld [vmem:[%s1 + $0xc8] sm:$0xff]
      %v213 = vld [vmem:[%s1 + $0xd0] sm:$0xff]
      %v214 = vld [vmem:[%s1 + $0xd8] sm:$0xff]
      %v215 = vld [vmem:[%s1 + $0xe0] sm:$0xff]
      %v216 = vld [vmem:[%s1 + $0xe8] sm:$0xff]
      %v217 = vld [vmem:[%s1 + $0xf0] sm:$0xff]
      %v218 = vld [vmem:[%s1 + $0xf8] sm:$0xff]
      %v219 = vld [vmem:[%s1 + $0x100] sm:$0xff]
      %v220 = vld [vmem:[%s1 + $0x108] sm:$0xff]
      %v221 = vld [vmem:[%s1 + $0x110] sm:$0xff]
      %v222 = vld [vmem:[%s1 + $0x118] sm:$0xff]
      %v223 = vld [vmem:[%s1 + $0x120] sm:$0xff]
      %v224 = vld [vmem:[%s1 + $0x128] sm:$0xff]
      %v225 = vld [vmem:[%s1 + $0x130] sm:$0xff]
      %v226 = vld [vmem:[%s1 + $0x138] sm:$0xff]
      %v227 = vld [vmem:[%s1 + $0x140] sm:$0xff]
      %v228 = vld [vmem:[%s1 + $0x148] sm:$0xff]
      %v229 = vld [vmem:[%s1 + $0x150] sm:$0xff]
      %v230 = vld [vmem:[%s1 + $0x158] sm:$0xff]
      %v231 = vld [vmem:[%s1 + $0x160] sm:$0xff]
      %v232 = vld [vmem:[%s1 + $0x168] sm:$0xff]
      %v233 = vld [vmem:[%s1 + $0x170] sm:$0xff]
      %v234 = vld [vmem:[%s1 + $0x178] sm:$0xff]
      %v235 = vld [vmem:[%s1 + $0x180] sm:$0xff]
      %v236 = vld [vmem:[%s1 + $0x188] sm:$0xff]
      %v237 = vld [vmem:[%s1 + $0x190] sm:$0xff]
      %v238 = vld [vmem:[%s1 + $0x198] sm:$0xff]
      %v239 = vld [vmem:[%s1 + $0x1a0] sm:$0xff]
      %v240 = vld [vmem:[%s1 + $0x1a8] sm:$0xff]
      %v241 = vld [vmem:[%s1 + $0x1b0] sm:$0xff]
      %v242 = vld [vmem:[%s1 + $0x1b8] sm:$0xff]
      %v243 = vld [vmem:[%s1 + $0x1c0] sm:$0xff]
      %v244 = vld [vmem:[%s1 + $0x1c8] sm:$0xff]
      %v245 = vld [vmem:[%s1 + $0x1d0] sm:$0xff]
      %v246 = vld [vmem:[%s1 + $0x1d8] sm:$0xff]
      %v247 = vld [vmem:[%s1 + $0x1e0] sm:$0xff]
      %v248 = vld [vmem:[%s1 + $0x1e8] sm:$0xff]
      %v249 = vld [vmem:[%s1 + $0x1f0] sm:$0xff]
      %v250 = vld [vmem:[%s1 + $0x1f8] sm:$0xff]
      %v251 = vld [vmem:[%s1 + $0x200] sm:$0xff]
      %v252 = vld [vmem:[%s1 + $0x208] sm:$0xff]
      %v253 = vld [vmem:[%s1 + $0x210] sm:$0xff]
      %v254 = vld [vmem:[%s1 + $0x218] sm:$0xff]
      %v255 = vld [vmem:[%s1 + $0x220] sm:$0xff]
      %v256 = vld [vmem:[%s1 + $0x228] sm:$0xff]
      %v257 = vld [vmem:[%s1 + $0x230] sm:$0xff]
      %v258 = vld [vmem:[%s1 + $0x238] sm:$0xff]
      %v259 = vld [vmem:[%s1 + $0x240] sm:$0xff]
      %v260 = vld [vmem:[%s1 + $0x248] sm:$0xff]
      %v261 = vld [vmem:[%s1 + $0x250] sm:$0xff]
      %v262 = vld [vmem:[%s1 + $0x258] sm:$0xff]
      %v263 = vld [vmem:[%s1 + $0x260] sm:$0xff]
      %v264 = vld [vmem:[%s1 + $0x268] sm:$0xff]
      %v265 = vld [vmem:[%s1 + $0x270] sm:$0xff]
      %v266 = vld [vmem:[%s1 + $0x278] sm:$0xff]
      %v267 = vld [vmem:[%s1 + $0x280] sm:$0xff]
      %v268 = vld [vmem:[%s1 + $0x288] sm:$0xff]
      %v269 = vld [vmem:[%s1 + $0x290] sm:$0xff]
      %v270 = vld [vmem:[%s1 + $0x298] sm:$0xff]
      %v271 = vld [vmem:[%s1 + $0x2a0] sm:$0xff]
      %v272 = vld [vmem:[%s1 + $0x2a8] sm:$0xff]
      %v273 = vld [vmem:[%s1 + $0x2b0] sm:$0xff]
      %v274 = vld [vmem:[%s1 + $0x2b8] sm:$0xff]
      %v275 = vld [vmem:[%s1 + $0x2c0] sm:$0xff]
      %v276 = vld [vmem:[%s1 + $0x2c8] sm:$0xff]
      %v277 = vld [vmem:[%s1 + $0x2d0] sm:$0xff]
      %v278 = vld [vmem:[%s1 + $0x2d8] sm:$0xff]
      %v279 = vld [vmem:[%s1 + $0x2e0] sm:$0xff]
      %v280 = vld [vmem:[%s1 + $0x2e8] sm:$0xff]
      %v281 = vld [vmem:[%s1 + $0x2f0] sm:$0xff]
      %v282 = vld [vmem:[%s1 + $0x2f8] sm:$0xff]
      %v283 = vld [vmem:[%s1 + $0x300] sm:$0xff]
      %v284 = vld [vmem:[%s1 + $0x308] sm:$0xff]
      %v285 = vld [vmem:[%s1 + $0x310] sm:$0xff]
      %v286 = vld [vmem:[%s1 + $0x318] sm:$0xff]
      %v287 = vld [vmem:[%s1 + $0x320] sm:$0xff]
      %v288 = vld [vmem:[%s1 + $0x328] sm:$0xff]
      %v289 = vld [vmem:[%s1 + $0x330] sm:$0xff]
      %v290 = vld [vmem:[%s1 + $0x338] sm:$0xff]
      %v291 = vld [vmem:[%s1 + $0x340] sm:$0xff]
      %v292 = vld [vmem:[%s1 + $0x348] sm:$0xff]
      %v293 = vld [vmem:[%s1 + $0x350] sm:$0xff]
      %v294 = vld [vmem:[%s1 + $0x358] sm:$0xff]
      %v295 = vld [vmem:[%s1 + $0x360] sm:$0xff]
      %v296 = vld [vmem:[%s1 + $0x368] sm:$0xff]
      %v297 = vld [vmem:[%s1 + $0x370] sm:$0xff]
      %v298 = vld [vmem:[%s1 + $0x378] sm:$0xff]
      %v299 = vld [vmem:[%s1 + $0x380] sm:$0xff]
      %v300 = vld [vmem:[%s1 + $0x388] sm:$0xff]
      %v301 = vld [vmem:[%s1 + $0x390] sm:$0xff]
      %v302 = vld [vmem:[%s1 + $0x398] sm:$0xff]
      %v303 = vld [vmem:[%s1 + $0x3a0] sm:$0xff]
      %v304 = vld [vmem:[%s1 + $0x3a8] sm:$0xff]
      %v305 = vld [vmem:[%s1 + $0x3b0] sm:$0xff]
      %v306 = vld [vmem:[%s1 + $0x3b8] sm:$0xff]
      %v307 = vld [vmem:[%s1 + $0x3c0] sm:$0xff]
      %v308 = vld [vmem:[%s1 + $0x3c8] sm:$0xff]
      %v309 = vld [vmem:[%s1 + $0x3d0] sm:$0xff]
      %v310 = vld [vmem:[%s1 + $0x3d8] sm:$0xff]
      %v311 = vld [vmem:[%s1 + $0x3e0] sm:$0xff]
      %v312 = vld [vmem:[%s1 + $0x3e8] sm:$0xff]
      %v313 = vld [vmem:[%s1 + $0x3f0] sm:$0xff]
      %v314 = vld [vmem:[%s1 + $0x3f8] sm:$0xff]
      %v315 = vld [vmem:[%s1 + $0x400] sm:$0xff]
      %v316 = vld [vmem:[%s1 + $0x408] sm:$0xff]
      %v317 = vld [vmem:[%s1 + $0x410] sm:$0xff]
      %v318 = vld [vmem:[%s1 + $0x418] sm:$0xff]
      %v319 = vld [vmem:[%s1 + $0x420] sm:$0xff]
      %v320 = vld [vmem:[%s1 + $0x428] sm:$0xff]
      %v321 = vld [vmem:[%s1 + $0x430] sm:$0xff]
      %v322 = vld [vmem:[%s1 + $0x438] sm:$0xff]
      %v323 = vld [vmem:[%s1 + $0x440] sm:$0xff]
      %v324 = vld [vmem:[%s1 + $0x448] sm:$0xff]
      %v325 = vld [vmem:[%s1 + $0x450] sm:$0xff]
      %v326 = vld [vmem:[%s1 + $0x458] sm:$0xff]
      %v327 = vld [vmem:[%s1 + $0x460] sm:$0xff]
      %v328 = vld [vmem:[%s1 + $0x468] sm:$0xff]
      %v329 = vld [vmem:[%s1 + $0x470] sm:$0xff]
      %v330 = vld [vmem:[%s1 + $0x478] sm:$0xff]
      %v331 = vld [vmem:[%s1 + $0x480] sm:$0xff]
      %v332 = vld [vmem:[%s1 + $0x488] sm:$0xff]
      %v333 = vld [vmem:[%s1 + $0x490] sm:$0xff]
      %v334 = vld [vmem:[%s1 + $0x498] sm:$0xff]
      %v335 = vld [vmem:[%s1 + $0x4a0] sm:$0xff]
      %v336 = vld [vmem:[%s1 + $0x4a8] sm:$0xff]
      %v337 = vld [vmem:[%s1 + $0x4b0] sm:$0xff]
      %v338 = vld [vmem:[%s1 + $0x4b8] sm:$0xff]
      %v339 = vld [vmem:[%s1 + $0x4c0] sm:$0xff]
      %v340 = vld [vmem:[%s1 + $0x4c8] sm:$0xff]
      %v341 = vld [vmem:[%s1 + $0x4d0] sm:$0xff]
      %v342 = vld [vmem:[%s1 + $0x4d8] sm:$0xff]
      %v343 = vld [vmem:[%s1 + $0x4e0] sm:$0xff]
      %v344 = vld [vmem:[%s1 + $0x4e8] sm:$0xff]
      %v345 = vld [vmem:[%s1 + $0x4f0] sm:$0xff]
      %v346 = vld [vmem:[%s1 + $0x4f8] sm:$0xff]
      %v347 = vld [vmem:[%s1 + $0x500] sm:$0xff]
      %v348 = vld [vmem:[%s1 + $0x508] sm:$0xff]
      %v349 = vld [vmem:[%s1 + $0x510] sm:$0xff]
      %v350 = vld [vmem:[%s1 + $0x518] sm:$0xff]
      %v351 = vld [vmem:[%s1 + $0x520] sm:$0xff]
      %v352 = vld [vmem:[%s1 + $0x528] sm:$0xff]
      %v353 = vld [vmem:[%s1 + $0x530] sm:$0xff]
      %v354 = vld [vmem:[%s1 + $0x538] sm:$0xff]
      %v355 = vld [vmem:[%s1 + $0x540] sm:$0xff]
      %v356 = vld [vmem:[%s1 + $0x548] sm:$0xff]
      %v357 = vld [vmem:[%s1 + $0x550] sm:$0xff]
      %v358 = vld [vmem:[%s1 + $0x558] sm:$0xff]
      %v359 = vld [vmem:[%s1 + $0x560] sm:$0xff]
      %v360 = vld [vmem:[%s1 + $0x568] sm:$0xff]
      %v361 = vld [vmem:[%s1 + $0x570] sm:$0xff]
      %v362 = vld [vmem:[%s1 + $0x578] sm:$0xff]
      %v363 = vld [vmem:[%s1 + $0x580] sm:$0xff]
      %v364 = vld [vmem:[%s1 + $0x588] sm:$0xff]
      %v365 = vld [vmem:[%s1 + $0x590] sm:$0xff]
      %v366 = vld [vmem:[%s1 + $0x598] sm:$0xff]
      %v367 = vld [vmem:[%s1 + $0x5a0] sm:$0xff]
      %v368 = vld [vmem:[%s1 + $0x5a8] sm:$0xff]
      %v369 = vld [vmem:[%s1 + $0x5b0] sm:$0xff]
      %v370 = vld [vmem:[%s1 + $0x5b8] sm:$0xff]
      %v371 = vld [vmem:[%s1 + $0x5c0] sm:$0xff]
      %v372 = vld [vmem:[%s1 + $0x5c8] sm:$0xff]
      %v373 = vld [vmem:[%s1 + $0x5d0] sm:$0xff]
      %v374 = vld [vmem:[%s1 + $0x5d8] sm:$0xff]
      %v375 = vld [vmem:[%s1 + $0x5e0] sm:$0xff]
      %v376 = vld [vmem:[%s1 + $0x5e8] sm:$0xff]
      %v377 = vld [vmem:[%s1 + $0x5f0] sm:$0xff]
      %v378 = vld [vmem:[%s1 + $0x5f8] sm:$0xff]
      %v379 = vld [vmem:[%s1 + $0x600] sm:$0xff]
      %v380 = vld [vmem:[%s1 + $0x608] sm:$0xff]
      %v381 = vld [vmem:[%s1 + $0x610] sm:$0xff]
      %v382 = vld [vmem:[%s1 + $0x618] sm:$0xff]
      %v383 = vld [vmem:[%s1 + $0x620] sm:$0xff]
      %v384 = vld [vmem:[%s1 + $0x628] sm:$0xff]
      %v385 = vld [vmem:[%s1 + $0x630] sm:$0xff]
      %v386 = vld [vmem:[%s1 + $0x638] sm:$0xff]
      %v387 = vld [vmem:[%s1 + $0x640] sm:$0xff]
      %v388 = vld [vmem:[%s1 + $0x648] sm:$0xff]
      %v389 = vld [vmem:[%s1 + $0x650] sm:$0xff]
      %v390 = vld [vmem:[%s1 + $0x658] sm:$0xff]
      %v391 = vld [vmem:[%s1 + $0x660] sm:$0xff]
      %v392 = vld [vmem:[%s1 + $0x668] sm:$0xff]
      %v393 = vld [vmem:[%s1 + $0x670] sm:$0xff]
      %v394 = vld [vmem:[%s1 + $0x678] sm:$0xff]
      %v395 = vld [vmem:[%s1 + $0x680] sm:$0xff]
      %v396 = vld [vmem:[%s1 + $0x688] sm:$0xff]
      %v397 = vld [vmem:[%s1 + $0x690] sm:$0xff]
      %v398 = vld [vmem:[%s1 + $0x698] sm:$0xff]
      %v399 = vld [vmem:[%s1 + $0x6a0] sm:$0xff]
      %v400 = vld [vmem:[%s1 + $0x6a8] sm:$0xff]
      %v401 = vld [vmem:[%s1 + $0x6b0] sm:$0xff]
      %v402 = vld [vmem:[%s1 + $0x6b8] sm:$0xff]
      %v403 = vld [vmem:[%s1 + $0x6c0] sm:$0xff]
      %v404 = vld [vmem:[%s1 + $0x6c8] sm:$0xff]
      %v405 = vld [vmem:[%s1 + $0x6d0] sm:$0xff]
      %v406 = vld [vmem:[%s1 + $0x6d8] sm:$0xff]
      %v407 = vld [vmem:[%s1 + $0x6e0] sm:$0xff]
      %v408 = vld [vmem:[%s1 + $0x6e8] sm:$0xff]
      %v409 = vld [vmem:[%s1 + $0x6f0] sm:$0xff]
      %v410 = vld [vmem:[%s1 + $0x6f8] sm:$0xff]
      %v411 = vld [vmem:[%s1 + $0x700] sm:$0xff]
      %v412 = vld [vmem:[%s1 + $0x708] sm:$0xff]
      %v413 = vld [vmem:[%s1 + $0x710] sm:$0xff]
      %v414 = vld [vmem:[%s1 + $0x718] sm:$0xff]
      %v415 = vld [vmem:[%s1 + $0x720] sm:$0xff]
      %v416 = vld [vmem:[%s1 + $0x728] sm:$0xff]
      %v417 = vld [vmem:[%s1 + $0x730] sm:$0xff]
      %v418 = vld [vmem:[%s1 + $0x738] sm:$0xff]
      %v419 = vld [vmem:[%s1 + $0x740] sm:$0xff]
      %v420 = vld [vmem:[%s1 + $0x748] sm:$0xff]
      %v421 = vld [vmem:[%s1 + $0x750] sm:$0xff]
      %v422 = vld [vmem:[%s1 + $0x758] sm:$0xff]
      %v423 = vld [vmem:[%s1 + $0x760] sm:$0xff]
      %v424 = vld [vmem:[%s1 + $0x768] sm:$0xff]
      %v425 = vld [vmem:[%s1 + $0x770] sm:$0xff]
      %v426 = vld [vmem:[%s1 + $0x778] sm:$0xff]
      %v427 = vld [vmem:[%s1 + $0x780] sm:$0xff]
      %v428 = vld [vmem:[%s1 + $0x788] sm:$0xff]
      %v429 = vld [vmem:[%s1 + $0x790] sm:$0xff]
      %v430 = vld [vmem:[%s1 + $0x798] sm:$0xff]
      %v431 = vld [vmem:[%s1 + $0x7a0] sm:$0xff]
      %v432 = vld [vmem:[%s1 + $0x7a8] sm:$0xff]
      %v433 = vld [vmem:[%s1 + $0x7b0] sm:$0xff]
      %v434 = vld [vmem:[%s1 + $0x7b8] sm:$0xff]
      %v435 = vld [vmem:[%s1 + $0x7c0] sm:$0xff]
      %v436 = vld [vmem:[%s1 + $0x7c8] sm:$0xff]
      %v437 = vld [vmem:[%s1 + $0x7d0] sm:$0xff]
      %v438 = vld [vmem:[%s1 + $0x7d8] sm:$0xff]
      %v439 = vld [vmem:[%s1 + $0x7e0] sm:$0xff]
      %v440 = vld [vmem:[%s1 + $0x7e8] sm:$0xff]
      %v441 = vld [vmem:[%s1 + $0x7f0] sm:$0xff]
      %v442 = vld [vmem:[%s1 + $0x7f8] sm:$0xff]
      %v443 = vld [vmem:[%s1 + $0x800] sm:$0xff]
      %v444 = vld [vmem:[%s1 + $0x808] sm:$0xff]
      %v445 = vld [vmem:[%s1 + $0x810] sm:$0xff]
      %v446 = vld [vmem:[%s1 + $0x818] sm:$0xff]
      %v447 = vld [vmem:[%s1 + $0x820] sm:$0xff]
      %v448 = vld [vmem:[%s1 + $0x828] sm:$0xff]
      %v449 = vld [vmem:[%s1 + $0x830] sm:$0xff]
      %v450 = vld [vmem:[%s1 + $0x838] sm:$0xff]
      %v451 = vld [vmem:[%s1 + $0x840] sm:$0xff]
      %v452 = vld [vmem:[%s1 + $0x848] sm:$0xff]
      %v453 = vld [vmem:[%s1 + $0x850] sm:$0xff]
      %v454 = vld [vmem:[%s1 + $0x858] sm:$0xff]
      %v455 = vld [vmem:[%s1 + $0x860] sm:$0xff]
      %v456 = vld [vmem:[%s1 + $0x868] sm:$0xff]
      %v457 = vld [vmem:[%s1 + $0x870] sm:$0xff]
      %v458 = vld [vmem:[%s1 + $0x878] sm:$0xff]
      %v459 = vld [vmem:[%s1 + $0x880] sm:$0xff]
      %v460 = vld [vmem:[%s1 + $0x888] sm:$0xff]
      %v461 = vld [vmem:[%s1 + $0x890] sm:$0xff]
      %v462 = vld [vmem:[%s1 + $0x898] sm:$0xff]
      %v463 = vld [vmem:[%s1 + $0x8a0] sm:$0xff]
      %v464 = vld [vmem:[%s1 + $0x8a8] sm:$0xff]
      %v465 = vld [vmem:[%s1 + $0x8b0] sm:$0xff]
      %v466 = vld [vmem:[%s1 + $0x8b8] sm:$0xff]
      %v467 = vld [vmem:[%s1 + $0x8c0] sm:$0xff]
      %v468 = vld [vmem:[%s1 + $0x8c8] sm:$0xff]
      %v469 = vld [vmem:[%s1 + $0x8d0] sm:$0xff]
      %v470 = vld [vmem:[%s1 + $0x8d8] sm:$0xff]
      %v471 = vld [vmem:[%s1 + $0x8e0] sm:$0xff]
      %v472 = vld [vmem:[%s1 + $0x8e8] sm:$0xff]
      %v473 = vld [vmem:[%s1 + $0x8f0] sm:$0xff]
      %v474 = vld [vmem:[%s1 + $0x8f8] sm:$0xff]
      %v485 = vunpack.c.l.b16 %v177
      %v486 = vunpack.c.h.b16 %v177
      %v487 = vunpack.c.l.b16 %v178
      %v488 = vunpack.c.h.b16 %v178
      %v489 = vunpack.c.l.b16 %v179
      %v490 = vunpack.c.h.b16 %v179
      %v491 = vunpack.c.l.b16 %v180
      %v492 = vunpack.c.h.b16 %v180
      %v493 = vunpack.c.l.b16 %v181
      %v494 = vunpack.c.l.b16 %v182
      %v495 = vunpack.c.h.b16 %v182
      %v496 = vunpack.c.l.b16 %v183
      %v497 = vunpack.c.h.b16 %v183
      %v498 = vunpack.c.l.b16 %v184
      %v499 = vunpack.c.h.b16 %v184
      %v500 = vunpack.c.l.b16 %v185
      %v501 = vunpack.c.h.b16 %v185
      %v502 = vunpack.c.l.b16 %v186
      %v503 = vpack.c.b16 %v494, %v485
      %v504 = vpack.c.b16 %v495, %v486
      %v505 = vpack.c.b16 %v496, %v487
      %v506 = vpack.c.b16 %v497, %v488
      %v507 = vpack.c.b16 %v498, %v489
      %v508 = vpack.c.b16 %v499, %v490
      %v509 = vpack.c.b16 %v500, %v491
      %v510 = vpack.c.b16 %v501, %v492
      %v511 = vpack.c.b16 %v502, %v493
      %v809 = vunpack.c.l.b16 %v187
      %v810 = vunpack.c.h.b16 %v187
      %v811 = vunpack.c.l.b16 %v188
      %v812 = vunpack.c.h.b16 %v188
      %v813 = vunpack.c.l.b16 %v189
      %v814 = vunpack.c.h.b16 %v189
      %v815 = vunpack.c.l.b16 %v190
      %v816 = vunpack.c.h.b16 %v190
      %v817 = vunpack.c.l.b16 %v191
      %v818 = vunpack.c.h.b16 %v191
      %v819 = vunpack.c.l.b16 %v192
      %v820 = vunpack.c.h.b16 %v192
      %v821 = vunpack.c.l.b16 %v193
      %v822 = vunpack.c.h.b16 %v193
      %v823 = vunpack.c.l.b16 %v194
      %v824 = vunpack.c.h.b16 %v194
      %v825 = vunpack.c.l.b16 %v195
      %v826 = vunpack.c.h.b16 %v195
      %v827 = vunpack.c.l.b16 %v196
      %v828 = vunpack.c.h.b16 %v196
      %v829 = vunpack.c.l.b16 %v197
      %v830 = vunpack.c.h.b16 %v197
      %v831 = vunpack.c.l.b16 %v198
      %v832 = vunpack.c.h.b16 %v198
      %v833 = vunpack.c.l.b16 %v199
      %v834 = vunpack.c.h.b16 %v199
      %v835 = vunpack.c.l.b16 %v200
      %v836 = vunpack.c.h.b16 %v200
      %v837 = vunpack.c.l.b16 %v201
      %v838 = vunpack.c.h.b16 %v201
      %v839 = vunpack.c.l.b16 %v202
      %v840 = vunpack.c.h.b16 %v202
      %v841 = vunpack.c.l.b16 %v203
      %v842 = vunpack.c.h.b16 %v203
      %v843 = vunpack.c.l.b16 %v204
      %v844 = vunpack.c.h.b16 %v204
      %v845 = vunpack.c.l.b16 %v205
      %v846 = vunpack.c.h.b16 %v205
      %v847 = vunpack.c.l.b16 %v206
      %v848 = vunpack.c.h.b16 %v206
      %v849 = vunpack.c.l.b16 %v207
      %v850 = vunpack.c.h.b16 %v207
      %v851 = vunpack.c.l.b16 %v208
      %v852 = vunpack.c.h.b16 %v208
      %v853 = vunpack.c.l.b16 %v209
      %v854 = vunpack.c.h.b16 %v209
      %v855 = vunpack.c.l.b16 %v210
      %v856 = vunpack.c.h.b16 %v210
      %v857 = vunpack.c.l.b16 %v211
      %v858 = vunpack.c.h.b16 %v211
      %v859 = vunpack.c.l.b16 %v212
      %v860 = vunpack.c.h.b16 %v212
      %v861 = vunpack.c.l.b16 %v213
      %v862 = vunpack.c.h.b16 %v213
      %v863 = vunpack.c.l.b16 %v214
      %v864 = vunpack.c.h.b16 %v214
      %v865 = vunpack.c.l.b16 %v215
      %v866 = vunpack.c.h.b16 %v215
      %v867 = vunpack.c.l.b16 %v216
      %v868 = vunpack.c.h.b16 %v216
      %v869 = vunpack.c.l.b16 %v217
      %v870 = vunpack.c.h.b16 %v217
      %v871 = vunpack.c.l.b16 %v218
      %v872 = vunpack.c.h.b16 %v218
      %v873 = vunpack.c.l.b16 %v219
      %v874 = vunpack.c.h.b16 %v219
      %v875 = vunpack.c.l.b16 %v220
      %v876 = vunpack.c.h.b16 %v220
      %v877 = vunpack.c.l.b16 %v221
      %v878 = vunpack.c.h.b16 %v221
      %v879 = vunpack.c.l.b16 %v222
      %v880 = vunpack.c.h.b16 %v222
      %v881 = vunpack.c.l.b16 %v223
      %v882 = vunpack.c.h.b16 %v223
      %v883 = vunpack.c.l.b16 %v224
      %v884 = vunpack.c.h.b16 %v224
      %v885 = vunpack.c.l.b16 %v225
      %v886 = vunpack.c.h.b16 %v225
      %v887 = vunpack.c.l.b16 %v226
      %v888 = vunpack.c.h.b16 %v226
      %v889 = vunpack.c.l.b16 %v227
      %v890 = vunpack.c.h.b16 %v227
      %v891 = vunpack.c.l.b16 %v228
      %v892 = vunpack.c.h.b16 %v228
      %v893 = vunpack.c.l.b16 %v229
      %v894 = vunpack.c.h.b16 %v229
      %v895 = vunpack.c.l.b16 %v230
      %v896 = vunpack.c.h.b16 %v230
      %v897 = vunpack.c.l.b16 %v231
      %v898 = vunpack.c.h.b16 %v231
      %v899 = vunpack.c.l.b16 %v232
      %v900 = vunpack.c.h.b16 %v232
      %v901 = vunpack.c.l.b16 %v233
      %v902 = vunpack.c.h.b16 %v233
      %v903 = vunpack.c.l.b16 %v234
      %v904 = vunpack.c.h.b16 %v234
      %v905 = vunpack.c.l.b16 %v235
      %v906 = vunpack.c.h.b16 %v235
      %v907 = vunpack.c.l.b16 %v236
      %v908 = vunpack.c.h.b16 %v236
      %v909 = vunpack.c.l.b16 %v237
      %v910 = vunpack.c.h.b16 %v237
      %v911 = vunpack.c.l.b16 %v238
      %v912 = vunpack.c.h.b16 %v238
      %v913 = vunpack.c.l.b16 %v239
      %v914 = vunpack.c.h.b16 %v239
      %v915 = vunpack.c.l.b16 %v240
      %v916 = vunpack.c.h.b16 %v240
      %v917 = vunpack.c.l.b16 %v241
      %v918 = vunpack.c.h.b16 %v241
      %v919 = vunpack.c.l.b16 %v242
      %v920 = vunpack.c.h.b16 %v242
      %v921 = vunpack.c.l.b16 %v243
      %v922 = vunpack.c.h.b16 %v243
      %v923 = vunpack.c.l.b16 %v244
      %v924 = vunpack.c.h.b16 %v244
      %v925 = vunpack.c.l.b16 %v245
      %v926 = vunpack.c.h.b16 %v245
      %v927 = vunpack.c.l.b16 %v246
      %v928 = vunpack.c.h.b16 %v246
      %v929 = vunpack.c.l.b16 %v247
      %v930 = vunpack.c.h.b16 %v247
      %v931 = vunpack.c.l.b16 %v248
      %v932 = vunpack.c.h.b16 %v248
      %v933 = vunpack.c.l.b16 %v249
      %v934 = vunpack.c.h.b16 %v249
      %v935 = vunpack.c.l.b16 %v250
      %v936 = vunpack.c.h.b16 %v250
      %v937 = vunpack.c.l.b16 %v251
      %v938 = vunpack.c.h.b16 %v251
      %v939 = vunpack.c.l.b16 %v252
      %v940 = vunpack.c.h.b16 %v252
      %v941 = vunpack.c.l.b16 %v253
      %v942 = vunpack.c.h.b16 %v253
      %v943 = vunpack.c.l.b16 %v254
      %v944 = vunpack.c.h.b16 %v254
      %v945 = vunpack.c.l.b16 %v255
      %v946 = vunpack.c.h.b16 %v255
      %v947 = vunpack.c.l.b16 %v256
      %v948 = vunpack.c.h.b16 %v256
      %v949 = vunpack.c.l.b16 %v257
      %v950 = vunpack.c.h.b16 %v257
      %v951 = vunpack.c.l.b16 %v258
      %v952 = vunpack.c.h.b16 %v258
      %v953 = vunpack.c.l.b16 %v259
      %v954 = vunpack.c.h.b16 %v259
      %v955 = vunpack.c.l.b16 %v260
      %v956 = vunpack.c.h.b16 %v260
      %v957 = vunpack.c.l.b16 %v261
      %v958 = vunpack.c.h.b16 %v261
      %v959 = vunpack.c.l.b16 %v262
      %v960 = vunpack.c.h.b16 %v262
      %v961 = vunpack.c.l.b16 %v263
      %v962 = vunpack.c.h.b16 %v263
      %v963 = vunpack.c.l.b16 %v264
      %v964 = vunpack.c.h.b16 %v264
      %v965 = vunpack.c.l.b16 %v265
      %v966 = vunpack.c.h.b16 %v265
      %v967 = vunpack.c.l.b16 %v266
      %v968 = vunpack.c.h.b16 %v266
      %v969 = vunpack.c.l.b16 %v267
      %v970 = vunpack.c.h.b16 %v267
      %v971 = vunpack.c.l.b16 %v268
      %v972 = vunpack.c.h.b16 %v268
      %v973 = vunpack.c.l.b16 %v269
      %v974 = vunpack.c.h.b16 %v269
      %v975 = vunpack.c.l.b16 %v270
      %v976 = vunpack.c.h.b16 %v270
      %v977 = vunpack.c.l.b16 %v271
      %v978 = vunpack.c.h.b16 %v271
      %v979 = vunpack.c.l.b16 %v272
      %v980 = vunpack.c.h.b16 %v272
      %v981 = vunpack.c.l.b16 %v273
      %v982 = vunpack.c.h.b16 %v273
      %v983 = vunpack.c.l.b16 %v274
      %v984 = vunpack.c.h.b16 %v274
      %v985 = vunpack.c.l.b16 %v275
      %v986 = vunpack.c.h.b16 %v275
      %v987 = vunpack.c.l.b16 %v276
      %v988 = vunpack.c.h.b16 %v276
      %v989 = vunpack.c.l.b16 %v277
      %v990 = vunpack.c.h.b16 %v277
      %v991 = vunpack.c.l.b16 %v278
      %v992 = vunpack.c.h.b16 %v278
      %v993 = vunpack.c.l.b16 %v279
      %v994 = vunpack.c.h.b16 %v279
      %v995 = vunpack.c.l.b16 %v280
      %v996 = vunpack.c.h.b16 %v280
      %v997 = vunpack.c.l.b16 %v281
      %v998 = vunpack.c.h.b16 %v281
      %v999 = vunpack.c.l.b16 %v282
      %v1000 = vunpack.c.h.b16 %v282
      %v1001 = vunpack.c.l.b16 %v283
      %v1002 = vunpack.c.h.b16 %v283
      %v1003 = vunpack.c.l.b16 %v284
      %v1004 = vunpack.c.h.b16 %v284
      %v1005 = vunpack.c.l.b16 %v285
      %v1006 = vunpack.c.h.b16 %v285
      %v1007 = vunpack.c.l.b16 %v286
      %v1008 = vunpack.c.h.b16 %v286
      %v1009 = vunpack.c.l.b16 %v287
      %v1010 = vunpack.c.h.b16 %v287
      %v1011 = vunpack.c.l.b16 %v288
      %v1012 = vunpack.c.h.b16 %v288
      %v1013 = vunpack.c.l.b16 %v289
      %v1014 = vunpack.c.h.b16 %v289
      %v1015 = vunpack.c.l.b16 %v290
      %v1016 = vunpack.c.h.b16 %v290
      %v1017 = vunpack.c.l.b16 %v291
      %v1018 = vunpack.c.h.b16 %v291
      %v1019 = vunpack.c.l.b16 %v292
      %v1020 = vunpack.c.h.b16 %v292
      %v1021 = vunpack.c.l.b16 %v293
      %v1022 = vunpack.c.h.b16 %v293
      %v1023 = vunpack.c.l.b16 %v294
      %v1024 = vunpack.c.h.b16 %v294
      %v1025 = vunpack.c.l.b16 %v295
      %v1026 = vunpack.c.h.b16 %v295
      %v1027 = vunpack.c.l.b16 %v296
      %v1028 = vunpack.c.h.b16 %v296
      %v1029 = vunpack.c.l.b16 %v297
      %v1030 = vunpack.c.h.b16 %v297
      %v1031 = vunpack.c.l.b16 %v298
      %v1032 = vunpack.c.h.b16 %v298
      %v1033 = vunpack.c.l.b16 %v299
      %v1034 = vunpack.c.h.b16 %v299
      %v1035 = vunpack.c.l.b16 %v300
      %v1036 = vunpack.c.h.b16 %v300
      %v1037 = vunpack.c.l.b16 %v301
      %v1038 = vunpack.c.h.b16 %v301
      %v1039 = vunpack.c.l.b16 %v302
      %v1040 = vunpack.c.h.b16 %v302
      %v1041 = vunpack.c.l.b16 %v303
      %v1042 = vunpack.c.h.b16 %v303
      %v1043 = vunpack.c.l.b16 %v304
      %v1044 = vunpack.c.h.b16 %v304
      %v1045 = vunpack.c.l.b16 %v305
      %v1046 = vunpack.c.h.b16 %v305
      %v1047 = vunpack.c.l.b16 %v306
      %v1048 = vunpack.c.h.b16 %v306
      %v1049 = vunpack.c.l.b16 %v307
      %v1050 = vunpack.c.h.b16 %v307
      %v1051 = vunpack.c.l.b16 %v308
      %v1052 = vunpack.c.h.b16 %v308
      %v1053 = vunpack.c.l.b16 %v309
      %v1054 = vunpack.c.h.b16 %v309
      %v1055 = vunpack.c.l.b16 %v310
      %v1056 = vunpack.c.h.b16 %v310
      %v1057 = vunpack.c.l.b16 %v311
      %v1058 = vunpack.c.h.b16 %v311
      %v1059 = vunpack.c.l.b16 %v312
      %v1060 = vunpack.c.h.b16 %v312
      %v1061 = vunpack.c.l.b16 %v313
      %v1062 = vunpack.c.h.b16 %v313
      %v1063 = vunpack.c.l.b16 %v314
      %v1064 = vunpack.c.h.b16 %v314
      %v1065 = vunpack.c.l.b16 %v315
      %v1066 = vunpack.c.h.b16 %v315
      %v1067 = vunpack.c.l.b16 %v316
      %v1068 = vunpack.c.h.b16 %v316
      %v1069 = vunpack.c.l.b16 %v317
      %v1070 = vunpack.c.h.b16 %v317
      %v1071 = vunpack.c.l.b16 %v318
      %v1072 = vunpack.c.h.b16 %v318
      %v1073 = vunpack.c.l.b16 %v319
      %v1074 = vunpack.c.h.b16 %v319
      %v1075 = vunpack.c.l.b16 %v320
      %v1076 = vunpack.c.h.b16 %v320
      %v1077 = vunpack.c.l.b16 %v321
      %v1078 = vunpack.c.h.b16 %v321
      %v1079 = vunpack.c.l.b16 %v322
      %v1080 = vunpack.c.h.b16 %v322
      %v1081 = vunpack.c.l.b16 %v323
      %v1082 = vunpack.c.h.b16 %v323
      %v1083 = vunpack.c.l.b16 %v324
      %v1084 = vunpack.c.h.b16 %v324
      %v1085 = vunpack.c.l.b16 %v325
      %v1086 = vunpack.c.h.b16 %v325
      %v1087 = vunpack.c.l.b16 %v326
      %v1088 = vunpack.c.h.b16 %v326
      %v1089 = vunpack.c.l.b16 %v327
      %v1090 = vunpack.c.h.b16 %v327
      %v1091 = vunpack.c.l.b16 %v328
      %v1092 = vunpack.c.h.b16 %v328
      %v1093 = vunpack.c.l.b16 %v329
      %v1094 = vunpack.c.h.b16 %v329
      %v1095 = vunpack.c.l.b16 %v330
      %v1096 = vunpack.c.h.b16 %v330
      %v1097 = vunpack.c.l.b16 %v331
      %v1098 = vunpack.c.h.b16 %v331
      %v1099 = vunpack.c.l.b16 %v332
      %v1100 = vunpack.c.h.b16 %v332
      %v1101 = vunpack.c.l.b16 %v333
      %v1102 = vunpack.c.h.b16 %v333
      %v1103 = vunpack.c.l.b16 %v334
      %v1104 = vunpack.c.h.b16 %v334
      %v1105 = vunpack.c.l.b16 %v335
      %v1106 = vunpack.c.h.b16 %v335
      %v1107 = vunpack.c.l.b16 %v336
      %v1108 = vunpack.c.h.b16 %v336
      %v1109 = vunpack.c.l.b16 %v337
      %v1110 = vunpack.c.h.b16 %v337
      %v1111 = vunpack.c.l.b16 %v338
      %v1112 = vunpack.c.h.b16 %v338
      %v1113 = vunpack.c.l.b16 %v339
      %v1114 = vunpack.c.h.b16 %v339
      %v1115 = vunpack.c.l.b16 %v340
      %v1116 = vunpack.c.h.b16 %v340
      %v1117 = vunpack.c.l.b16 %v341
      %v1118 = vunpack.c.h.b16 %v341
      %v1119 = vunpack.c.l.b16 %v342
      %v1120 = vunpack.c.h.b16 %v342
      %v1121 = vunpack.c.l.b16 %v343
      %v1122 = vunpack.c.h.b16 %v343
      %v1123 = vunpack.c.l.b16 %v344
      %v1124 = vunpack.c.h.b16 %v344
      %v1125 = vunpack.c.l.b16 %v345
      %v1126 = vunpack.c.h.b16 %v345
      %v1127 = vunpack.c.l.b16 %v346
      %v1128 = vunpack.c.h.b16 %v346
      %v1129 = vunpack.c.l.b16 %v347
      %v1130 = vunpack.c.h.b16 %v347
      %v1131 = vunpack.c.l.b16 %v348
      %v1132 = vunpack.c.h.b16 %v348
      %v1133 = vunpack.c.l.b16 %v349
      %v1134 = vunpack.c.h.b16 %v349
      %v1135 = vunpack.c.l.b16 %v350
      %v1136 = vunpack.c.h.b16 %v350
      %v1137 = vunpack.c.l.b16 %v351
      %v1138 = vunpack.c.h.b16 %v351
      %v1139 = vunpack.c.l.b16 %v352
      %v1140 = vunpack.c.h.b16 %v352
      %v1141 = vunpack.c.l.b16 %v353
      %v1142 = vunpack.c.h.b16 %v353
      %v1143 = vunpack.c.l.b16 %v354
      %v1144 = vunpack.c.h.b16 %v354
      %v1145 = vunpack.c.l.b16 %v355
      %v1146 = vunpack.c.h.b16 %v355
      %v1147 = vunpack.c.l.b16 %v356
      %v1148 = vunpack.c.h.b16 %v356
      %v1149 = vunpack.c.l.b16 %v357
      %v1150 = vunpack.c.h.b16 %v357
      %v1151 = vunpack.c.l.b16 %v358
      %v1152 = vunpack.c.h.b16 %v358
      %v1153 = vunpack.c.l.b16 %v359
      %v1154 = vunpack.c.h.b16 %v359
      %v1155 = vunpack.c.l.b16 %v360
      %v1156 = vunpack.c.h.b16 %v360
      %v1157 = vunpack.c.l.b16 %v361
      %v1158 = vunpack.c.h.b16 %v361
      %v1159 = vunpack.c.l.b16 %v362
      %v1160 = vunpack.c.h.b16 %v362
      %v1161 = vunpack.c.l.b16 %v363
      %v1162 = vunpack.c.h.b16 %v363
      %v1163 = vunpack.c.l.b16 %v364
      %v1164 = vunpack.c.h.b16 %v364
      %v1165 = vunpack.c.l.b16 %v365
      %v1166 = vunpack.c.h.b16 %v365
      %v1167 = vunpack.c.l.b16 %v366
      %v1168 = vunpack.c.h.b16 %v366
      %v1169 = vunpack.c.l.b16 %v367
      %v1170 = vunpack.c.h.b16 %v367
      %v1171 = vunpack.c.l.b16 %v368
      %v1172 = vunpack.c.h.b16 %v368
      %v1173 = vunpack.c.l.b16 %v369
      %v1174 = vunpack.c.h.b16 %v369
      %v1175 = vunpack.c.l.b16 %v370
      %v1176 = vunpack.c.h.b16 %v370
      %v1177 = vunpack.c.l.b16 %v371
      %v1178 = vunpack.c.h.b16 %v371
      %v1179 = vunpack.c.l.b16 %v372
      %v1180 = vunpack.c.h.b16 %v372
      %v1181 = vunpack.c.l.b16 %v373
      %v1182 = vunpack.c.h.b16 %v373
      %v1183 = vunpack.c.l.b16 %v374
      %v1184 = vunpack.c.h.b16 %v374
      %v1185 = vunpack.c.l.b16 %v375
      %v1186 = vunpack.c.h.b16 %v375
      %v1187 = vunpack.c.l.b16 %v376
      %v1188 = vunpack.c.h.b16 %v376
      %v1189 = vunpack.c.l.b16 %v377
      %v1190 = vunpack.c.h.b16 %v377
      %v1191 = vunpack.c.l.b16 %v378
      %v1192 = vunpack.c.h.b16 %v378
      %v1193 = vunpack.c.l.b16 %v379
      %v1194 = vunpack.c.h.b16 %v379
      %v1195 = vunpack.c.l.b16 %v380
      %v1196 = vunpack.c.h.b16 %v380
      %v1197 = vunpack.c.l.b16 %v381
      %v1198 = vunpack.c.h.b16 %v381
      %v1199 = vunpack.c.l.b16 %v382
      %v1200 = vunpack.c.h.b16 %v382
      %v1201 = vunpack.c.l.b16 %v383
      %v1202 = vunpack.c.h.b16 %v383
      %v1203 = vunpack.c.l.b16 %v384
      %v1204 = vunpack.c.h.b16 %v384
      %v1205 = vunpack.c.l.b16 %v385
      %v1206 = vunpack.c.h.b16 %v385
      %v1207 = vunpack.c.l.b16 %v386
      %v1208 = vunpack.c.h.b16 %v386
      %v1209 = vunpack.c.l.b16 %v387
      %v1210 = vunpack.c.h.b16 %v387
      %v1211 = vunpack.c.l.b16 %v388
      %v1212 = vunpack.c.h.b16 %v388
      %v1213 = vunpack.c.l.b16 %v389
      %v1214 = vunpack.c.h.b16 %v389
      %v1215 = vunpack.c.l.b16 %v390
      %v1216 = vunpack.c.h.b16 %v390
      %v1217 = vunpack.c.l.b16 %v391
      %v1218 = vunpack.c.h.b16 %v391
      %v1219 = vunpack.c.l.b16 %v392
      %v1220 = vunpack.c.h.b16 %v392
      %v1221 = vunpack.c.l.b16 %v393
      %v1222 = vunpack.c.h.b16 %v393
      %v1223 = vunpack.c.l.b16 %v394
      %v1224 = vunpack.c.h.b16 %v394
      %v1225 = vunpack.c.l.b16 %v395
      %v1226 = vunpack.c.h.b16 %v395
      %v1227 = vunpack.c.l.b16 %v396
      %v1228 = vunpack.c.h.b16 %v396
      %v1229 = vunpack.c.l.b16 %v397
      %v1230 = vunpack.c.h.b16 %v397
      %v1231 = vunpack.c.l.b16 %v398
      %v1232 = vunpack.c.h.b16 %v398
      %v1233 = vunpack.c.l.b16 %v399
      %v1234 = vunpack.c.h.b16 %v399
      %v1235 = vunpack.c.l.b16 %v400
      %v1236 = vunpack.c.h.b16 %v400
      %v1237 = vunpack.c.l.b16 %v401
      %v1238 = vunpack.c.h.b16 %v401
      %v1239 = vunpack.c.l.b16 %v402
      %v1240 = vunpack.c.h.b16 %v402
      %v1241 = vunpack.c.l.b16 %v403
      %v1242 = vunpack.c.h.b16 %v403
      %v1243 = vunpack.c.l.b16 %v404
      %v1244 = vunpack.c.h.b16 %v404
      %v1245 = vunpack.c.l.b16 %v405
      %v1246 = vunpack.c.h.b16 %v405
      %v1247 = vunpack.c.l.b16 %v406
      %v1248 = vunpack.c.h.b16 %v406
      %v1249 = vunpack.c.l.b16 %v407
      %v1250 = vunpack.c.h.b16 %v407
      %v1251 = vunpack.c.l.b16 %v408
      %v1252 = vunpack.c.h.b16 %v408
      %v1253 = vunpack.c.l.b16 %v409
      %v1254 = vunpack.c.h.b16 %v409
      %v1255 = vunpack.c.l.b16 %v410
      %v1256 = vunpack.c.h.b16 %v410
      %v1257 = vunpack.c.l.b16 %v411
      %v1258 = vunpack.c.h.b16 %v411
      %v1259 = vunpack.c.l.b16 %v412
      %v1260 = vunpack.c.h.b16 %v412
      %v1261 = vunpack.c.l.b16 %v413
      %v1262 = vunpack.c.h.b16 %v413
      %v1263 = vunpack.c.l.b16 %v414
      %v1264 = vunpack.c.h.b16 %v414
      %v1265 = vunpack.c.l.b16 %v415
      %v1266 = vunpack.c.h.b16 %v415
      %v1267 = vunpack.c.l.b16 %v416
      %v1268 = vunpack.c.h.b16 %v416
      %v1269 = vunpack.c.l.b16 %v417
      %v1270 = vunpack.c.h.b16 %v417
      %v1271 = vunpack.c.l.b16 %v418
      %v1272 = vunpack.c.h.b16 %v418
      %v1273 = vunpack.c.l.b16 %v419
      %v1274 = vunpack.c.h.b16 %v419
      %v1275 = vunpack.c.l.b16 %v420
      %v1276 = vunpack.c.h.b16 %v420
      %v1277 = vunpack.c.l.b16 %v421
      %v1278 = vunpack.c.h.b16 %v421
      %v1279 = vunpack.c.l.b16 %v422
      %v1280 = vunpack.c.h.b16 %v422
      %v1281 = vunpack.c.l.b16 %v423
      %v1282 = vunpack.c.h.b16 %v423
      %v1283 = vunpack.c.l.b16 %v424
      %v1284 = vunpack.c.h.b16 %v424
      %v1285 = vunpack.c.l.b16 %v425
      %v1286 = vunpack.c.h.b16 %v425
      %v1287 = vunpack.c.l.b16 %v426
      %v1288 = vunpack.c.h.b16 %v426
      %v1289 = vunpack.c.l.b16 %v427
      %v1290 = vunpack.c.h.b16 %v427
      %v1291 = vunpack.c.l.b16 %v428
      %v1292 = vunpack.c.h.b16 %v428
      %v1293 = vunpack.c.l.b16 %v429
      %v1294 = vunpack.c.h.b16 %v429
      %v1295 = vunpack.c.l.b16 %v430
      %v1296 = vunpack.c.h.b16 %v430
      %v1297 = vunpack.c.l.b16 %v431
      %v1298 = vunpack.c.h.b16 %v431
      %v1299 = vunpack.c.l.b16 %v432
      %v1300 = vunpack.c.h.b16 %v432
      %v1301 = vunpack.c.l.b16 %v433
      %v1302 = vunpack.c.h.b16 %v433
      %v1303 = vunpack.c.l.b16 %v434
      %v1304 = vunpack.c.h.b16 %v434
      %v1305 = vunpack.c.l.b16 %v435
      %v1306 = vunpack.c.h.b16 %v435
      %v1307 = vunpack.c.l.b16 %v436
      %v1308 = vunpack.c.h.b16 %v436
      %v1309 = vunpack.c.l.b16 %v437
      %v1310 = vunpack.c.h.b16 %v437
      %v1311 = vunpack.c.l.b16 %v438
      %v1312 = vunpack.c.h.b16 %v438
      %v1313 = vunpack.c.l.b16 %v439
      %v1314 = vunpack.c.h.b16 %v439
      %v1315 = vunpack.c.l.b16 %v440
      %v1316 = vunpack.c.h.b16 %v440
      %v1317 = vunpack.c.l.b16 %v441
      %v1318 = vunpack.c.h.b16 %v441
      %v1319 = vunpack.c.l.b16 %v442
      %v1320 = vunpack.c.h.b16 %v442
      %v1321 = vunpack.c.l.b16 %v443
      %v1322 = vunpack.c.h.b16 %v443
      %v1323 = vunpack.c.l.b16 %v444
      %v1324 = vunpack.c.h.b16 %v444
      %v1325 = vunpack.c.l.b16 %v445
      %v1326 = vunpack.c.h.b16 %v445
      %v1327 = vunpack.c.l.b16 %v446
      %v1328 = vunpack.c.h.b16 %v446
      %v1329 = vunpack.c.l.b16 %v447
      %v1330 = vunpack.c.h.b16 %v447
      %v1331 = vunpack.c.l.b16 %v448
      %v1332 = vunpack.c.h.b16 %v448
      %v1333 = vunpack.c.l.b16 %v449
      %v1334 = vunpack.c.h.b16 %v449
      %v1335 = vunpack.c.l.b16 %v450
      %v1336 = vunpack.c.h.b16 %v450
      %v1337 = vunpack.c.l.b16 %v451
      %v1338 = vunpack.c.h.b16 %v451
      %v1339 = vunpack.c.l.b16 %v452
      %v1340 = vunpack.c.h.b16 %v452
      %v1341 = vunpack.c.l.b16 %v453
      %v1342 = vunpack.c.h.b16 %v453
      %v1343 = vunpack.c.l.b16 %v454
      %v1344 = vunpack.c.h.b16 %v454
      %v1345 = vunpack.c.l.b16 %v455
      %v1346 = vunpack.c.h.b16 %v455
      %v1347 = vunpack.c.l.b16 %v456
      %v1348 = vunpack.c.h.b16 %v456
      %v1349 = vunpack.c.l.b16 %v457
      %v1350 = vunpack.c.h.b16 %v457
      %v1351 = vunpack.c.l.b16 %v458
      %v1352 = vunpack.c.h.b16 %v458
      %v1353 = vunpack.c.l.b16 %v459
      %v1354 = vunpack.c.h.b16 %v459
      %v1355 = vunpack.c.l.b16 %v460
      %v1356 = vunpack.c.h.b16 %v460
      %v1357 = vunpack.c.l.b16 %v461
      %v1358 = vunpack.c.h.b16 %v461
      %v1359 = vunpack.c.l.b16 %v462
      %v1360 = vunpack.c.h.b16 %v462
      %v1361 = vunpack.c.l.b16 %v463
      %v1362 = vunpack.c.h.b16 %v463
      %v1363 = vunpack.c.l.b16 %v464
      %v1364 = vunpack.c.h.b16 %v464
      %v1365 = vunpack.c.l.b16 %v465
      %v1366 = vunpack.c.h.b16 %v465
      %v1367 = vunpack.c.l.b16 %v466
      %v1368 = vunpack.c.h.b16 %v466
      %v1369 = vunpack.c.l.b16 %v467
      %v1370 = vunpack.c.h.b16 %v467
      %v1371 = vunpack.c.l.b16 %v468
      %v1372 = vunpack.c.h.b16 %v468
      %v1373 = vunpack.c.l.b16 %v469
      %v1374 = vunpack.c.h.b16 %v469
      %v1375 = vunpack.c.l.b16 %v470
      %v1376 = vunpack.c.h.b16 %v470
      %v1377 = vunpack.c.l.b16 %v471
      %v1378 = vunpack.c.h.b16 %v471
      %v1379 = vunpack.c.l.b16 %v472
      %v1380 = vunpack.c.h.b16 %v472
      %v1381 = vunpack.c.l.b16 %v473
      %v1382 = vunpack.c.h.b16 %v473
      %v1383 = vunpack.c.l.b16 %v474
      %v1384 = vunpack.c.h.b16 %v474
      %v1385 = vpack.c.b16 %v813, %v809
      %v1386 = vpack.c.b16 %v814, %v810
      %v1387 = vpack.c.b16 %v815, %v811
      %v1388 = vpack.c.b16 %v816, %v812
      %v1389 = vpack.c.b16 %v821, %v817
      %v1390 = vpack.c.b16 %v822, %v818
      %v1391 = vpack.c.b16 %v823, %v819
      %v1392 = vpack.c.b16 %v824, %v820
      %v1393 = vpack.c.b16 %v829, %v825
      %v1394 = vpack.c.b16 %v830, %v826
      %v1395 = vpack.c.b16 %v831, %v827
      %v1396 = vpack.c.b16 %v832, %v828
      %v1397 = vpack.c.b16 %v837, %v833
      %v1398 = vpack.c.b16 %v838, %v834
      %v1399 = vpack.c.b16 %v839, %v835
      %v1400 = vpack.c.b16 %v840, %v836
      %v1401 = vpack.c.b16 %v845, %v841
      %v1402 = vpack.c.b16 %v846, %v842
      %v1403 = vpack.c.b16 %v847, %v843
      %v1404 = vpack.c.b16 %v848, %v844
      %v1405 = vpack.c.b16 %v853, %v849
      %v1406 = vpack.c.b16 %v854, %v850
      %v1407 = vpack.c.b16 %v855, %v851
      %v1408 = vpack.c.b16 %v856, %v852
      %v1409 = vpack.c.b16 %v861, %v857
      %v1410 = vpack.c.b16 %v862, %v858
      %v1411 = vpack.c.b16 %v863, %v859
      %v1412 = vpack.c.b16 %v864, %v860
      %v1413 = vpack.c.b16 %v869, %v865
      %v1414 = vpack.c.b16 %v870, %v866
      %v1415 = vpack.c.b16 %v871, %v867
      %v1416 = vpack.c.b16 %v872, %v868
      %v1417 = vpack.c.b16 %v877, %v873
      %v1418 = vpack.c.b16 %v878, %v874
      %v1419 = vpack.c.b16 %v879, %v875
      %v1420 = vpack.c.b16 %v880, %v876
      %v1421 = vpack.c.b16 %v885, %v881
      %v1422 = vpack.c.b16 %v886, %v882
      %v1423 = vpack.c.b16 %v887, %v883
      %v1424 = vpack.c.b16 %v888, %v884
      %v1425 = vpack.c.b16 %v893, %v889
      %v1426 = vpack.c.b16 %v894, %v890
      %v1427 = vpack.c.b16 %v895, %v891
      %v1428 = vpack.c.b16 %v896, %v892
      %v1429 = vpack.c.b16 %v901, %v897
      %v1430 = vpack.c.b16 %v902, %v898
      %v1431 = vpack.c.b16 %v903, %v899
      %v1432 = vpack.c.b16 %v904, %v900
      %v1433 = vpack.c.b16 %v909, %v905
      %v1434 = vpack.c.b16 %v910, %v906
      %v1435 = vpack.c.b16 %v911, %v907
      %v1436 = vpack.c.b16 %v912, %v908
      %v1437 = vpack.c.b16 %v917, %v913
      %v1438 = vpack.c.b16 %v918, %v914
      %v1439 = vpack.c.b16 %v919, %v915
      %v1440 = vpack.c.b16 %v920, %v916
      %v1441 = vpack.c.b16 %v925, %v921
      %v1442 = vpack.c.b16 %v926, %v922
      %v1443 = vpack.c.b16 %v927, %v923
      %v1444 = vpack.c.b16 %v928, %v924
      %v1445 = vpack.c.b16 %v933, %v929
      %v1446 = vpack.c.b16 %v934, %v930
      %v1447 = vpack.c.b16 %v935, %v931
      %v1448 = vpack.c.b16 %v936, %v932
      %v1449 = vpack.c.b16 %v941, %v937
      %v1450 = vpack.c.b16 %v942, %v938
      %v1451 = vpack.c.b16 %v943, %v939
      %v1452 = vpack.c.b16 %v944, %v940
      %v1453 = vpack.c.b16 %v949, %v945
      %v1454 = vpack.c.b16 %v950, %v946
      %v1455 = vpack.c.b16 %v951, %v947
      %v1456 = vpack.c.b16 %v952, %v948
      %v1457 = vpack.c.b16 %v957, %v953
      %v1458 = vpack.c.b16 %v958, %v954
      %v1459 = vpack.c.b16 %v959, %v955
      %v1460 = vpack.c.b16 %v960, %v956
      %v1461 = vpack.c.b16 %v965, %v961
      %v1462 = vpack.c.b16 %v966, %v962
      %v1463 = vpack.c.b16 %v967, %v963
      %v1464 = vpack.c.b16 %v968, %v964
      %v1465 = vpack.c.b16 %v973, %v969
      %v1466 = vpack.c.b16 %v974, %v970
      %v1467 = vpack.c.b16 %v975, %v971
      %v1468 = vpack.c.b16 %v976, %v972
      %v1469 = vpack.c.b16 %v981, %v977
      %v1470 = vpack.c.b16 %v982, %v978
      %v1471 = vpack.c.b16 %v983, %v979
      %v1472 = vpack.c.b16 %v984, %v980
      %v1473 = vpack.c.b16 %v989, %v985
      %v1474 = vpack.c.b16 %v990, %v986
      %v1475 = vpack.c.b16 %v991, %v987
      %v1476 = vpack.c.b16 %v992, %v988
      %v1477 = vpack.c.b16 %v997, %v993
      %v1478 = vpack.c.b16 %v998, %v994
      %v1479 = vpack.c.b16 %v999, %v995
      %v1480 = vpack.c.b16 %v1000, %v996
      %v1481 = vpack.c.b16 %v1005, %v1001
      %v1482 = vpack.c.b16 %v1006, %v1002
      %v1483 = vpack.c.b16 %v1007, %v1003
      %v1484 = vpack.c.b16 %v1008, %v1004
      %v1485 = vpack.c.b16 %v1013, %v1009
      %v1486 = vpack.c.b16 %v1014, %v1010
      %v1487 = vpack.c.b16 %v1015, %v1011
      %v1488 = vpack.c.b16 %v1016, %v1012
      %v1489 = vpack.c.b16 %v1021, %v1017
      %v1490 = vpack.c.b16 %v1022, %v1018
      %v1491 = vpack.c.b16 %v1023, %v1019
      %v1492 = vpack.c.b16 %v1024, %v1020
      %v1493 = vpack.c.b16 %v1029, %v1025
      %v1494 = vpack.c.b16 %v1030, %v1026
      %v1495 = vpack.c.b16 %v1031, %v1027
      %v1496 = vpack.c.b16 %v1032, %v1028
      %v1497 = vpack.c.b16 %v1037, %v1033
      %v1498 = vpack.c.b16 %v1038, %v1034
      %v1499 = vpack.c.b16 %v1039, %v1035
      %v1500 = vpack.c.b16 %v1040, %v1036
      %v1501 = vpack.c.b16 %v1045, %v1041
      %v1502 = vpack.c.b16 %v1046, %v1042
      %v1503 = vpack.c.b16 %v1047, %v1043
      %v1504 = vpack.c.b16 %v1048, %v1044
      %v1505 = vpack.c.b16 %v1053, %v1049
      %v1506 = vpack.c.b16 %v1054, %v1050
      %v1507 = vpack.c.b16 %v1055, %v1051
      %v1508 = vpack.c.b16 %v1056, %v1052
      %v1509 = vpack.c.b16 %v1061, %v1057
      %v1510 = vpack.c.b16 %v1062, %v1058
      %v1511 = vpack.c.b16 %v1063, %v1059
      %v1512 = vpack.c.b16 %v1064, %v1060
      %v1513 = vpack.c.b16 %v1069, %v1065
      %v1514 = vpack.c.b16 %v1070, %v1066
      %v1515 = vpack.c.b16 %v1071, %v1067
      %v1516 = vpack.c.b16 %v1072, %v1068
      %v1517 = vpack.c.b16 %v1077, %v1073
      %v1518 = vpack.c.b16 %v1078, %v1074
      %v1519 = vpack.c.b16 %v1079, %v1075
      %v1520 = vpack.c.b16 %v1080, %v1076
      %v1521 = vpack.c.b16 %v1085, %v1081
      %v1522 = vpack.c.b16 %v1086, %v1082
      %v1523 = vpack.c.b16 %v1087, %v1083
      %v1524 = vpack.c.b16 %v1088, %v1084
      %v1525 = vpack.c.b16 %v1093, %v1089
      %v1526 = vpack.c.b16 %v1094, %v1090
      %v1527 = vpack.c.b16 %v1095, %v1091
      %v1528 = vpack.c.b16 %v1096, %v1092
      %v1529 = vpack.c.b16 %v1101, %v1097
      %v1530 = vpack.c.b16 %v1102, %v1098
      %v1531 = vpack.c.b16 %v1103, %v1099
      %v1532 = vpack.c.b16 %v1104, %v1100
      %v1533 = vpack.c.b16 %v1109, %v1105
      %v1534 = vpack.c.b16 %v1110, %v1106
      %v1535 = vpack.c.b16 %v1111, %v1107
      %v1536 = vpack.c.b16 %v1112, %v1108
      %v1537 = vpack.c.b16 %v1117, %v1113
      %v1538 = vpack.c.b16 %v1118, %v1114
      %v1539 = vpack.c.b16 %v1119, %v1115
      %v1540 = vpack.c.b16 %v1120, %v1116
      %v1541 = vpack.c.b16 %v1125, %v1121
      %v1542 = vpack.c.b16 %v1126, %v1122
      %v1543 = vpack.c.b16 %v1127, %v1123
      %v1544 = vpack.c.b16 %v1128, %v1124
      %v1545 = vpack.c.b16 %v1133, %v1129
      %v1546 = vpack.c.b16 %v1134, %v1130
      %v1547 = vpack.c.b16 %v1135, %v1131
      %v1548 = vpack.c.b16 %v1136, %v1132
      %v1549 = vpack.c.b16 %v1141, %v1137
      %v1550 = vpack.c.b16 %v1142, %v1138
      %v1551 = vpack.c.b16 %v1143, %v1139
      %v1552 = vpack.c.b16 %v1144, %v1140
      %v1553 = vpack.c.b16 %v1149, %v1145
      %v1554 = vpack.c.b16 %v1150, %v1146
      %v1555 = vpack.c.b16 %v1151, %v1147
      %v1556 = vpack.c.b16 %v1152, %v1148
      %v1557 = vpack.c.b16 %v1157, %v1153
      %v1558 = vpack.c.b16 %v1158, %v1154
      %v1559 = vpack.c.b16 %v1159, %v1155
      %v1560 = vpack.c.b16 %v1160, %v1156
      %v1561 = vpack.c.b16 %v1165, %v1161
      %v1562 = vpack.c.b16 %v1166, %v1162
      %v1563 = vpack.c.b16 %v1167, %v1163
      %v1564 = vpack.c.b16 %v1168, %v1164
      %v1565 = vpack.c.b16 %v1173, %v1169
      %v1566 = vpack.c.b16 %v1174, %v1170
      %v1567 = vpack.c.b16 %v1175, %v1171
      %v1568 = vpack.c.b16 %v1176, %v1172
      %v1569 = vpack.c.b16 %v1181, %v1177
      %v1570 = vpack.c.b16 %v1182, %v1178
      %v1571 = vpack.c.b16 %v1183, %v1179
      %v1572 = vpack.c.b16 %v1184, %v1180
      %v1573 = vpack.c.b16 %v1189, %v1185
      %v1574 = vpack.c.b16 %v1190, %v1186
      %v1575 = vpack.c.b16 %v1191, %v1187
      %v1576 = vpack.c.b16 %v1192, %v1188
      %v1577 = vpack.c.b16 %v1197, %v1193
      %v1578 = vpack.c.b16 %v1198, %v1194
      %v1579 = vpack.c.b16 %v1199, %v1195
      %v1580 = vpack.c.b16 %v1200, %v1196
      %v1581 = vpack.c.b16 %v1205, %v1201
      %v1582 = vpack.c.b16 %v1206, %v1202
      %v1583 = vpack.c.b16 %v1207, %v1203
      %v1584 = vpack.c.b16 %v1208, %v1204
      %v1585 = vpack.c.b16 %v1213, %v1209
      %v1586 = vpack.c.b16 %v1214, %v1210
      %v1587 = vpack.c.b16 %v1215, %v1211
      %v1588 = vpack.c.b16 %v1216, %v1212
      %v1589 = vpack.c.b16 %v1221, %v1217
      %v1590 = vpack.c.b16 %v1222, %v1218
      %v1591 = vpack.c.b16 %v1223, %v1219
      %v1592 = vpack.c.b16 %v1224, %v1220
      %v1593 = vpack.c.b16 %v1229, %v1225
      %v1594 = vpack.c.b16 %v1230, %v1226
      %v1595 = vpack.c.b16 %v1231, %v1227
      %v1596 = vpack.c.b16 %v1232, %v1228
      %v1597 = vpack.c.b16 %v1237, %v1233
      %v1598 = vpack.c.b16 %v1238, %v1234
      %v1599 = vpack.c.b16 %v1239, %v1235
      %v1600 = vpack.c.b16 %v1240, %v1236
      %v1601 = vpack.c.b16 %v1245, %v1241
      %v1602 = vpack.c.b16 %v1246, %v1242
      %v1603 = vpack.c.b16 %v1247, %v1243
      %v1604 = vpack.c.b16 %v1248, %v1244
      %v1605 = vpack.c.b16 %v1253, %v1249
      %v1606 = vpack.c.b16 %v1254, %v1250
      %v1607 = vpack.c.b16 %v1255, %v1251
      %v1608 = vpack.c.b16 %v1256, %v1252
      %v1609 = vpack.c.b16 %v1261, %v1257
      %v1610 = vpack.c.b16 %v1262, %v1258
      %v1611 = vpack.c.b16 %v1263, %v1259
      %v1612 = vpack.c.b16 %v1264, %v1260
      %v1613 = vpack.c.b16 %v1269, %v1265
      %v1614 = vpack.c.b16 %v1270, %v1266
      %v1615 = vpack.c.b16 %v1271, %v1267
      %v1616 = vpack.c.b16 %v1272, %v1268
      %v1617 = vpack.c.b16 %v1277, %v1273
      %v1618 = vpack.c.b16 %v1278, %v1274
      %v1619 = vpack.c.b16 %v1279, %v1275
      %v1620 = vpack.c.b16 %v1280, %v1276
      %v1621 = vpack.c.b16 %v1285, %v1281
      %v1622 = vpack.c.b16 %v1286, %v1282
      %v1623 = vpack.c.b16 %v1287, %v1283
      %v1624 = vpack.c.b16 %v1288, %v1284
      %v1625 = vpack.c.b16 %v1293, %v1289
      %v1626 = vpack.c.b16 %v1294, %v1290
      %v1627 = vpack.c.b16 %v1295, %v1291
      %v1628 = vpack.c.b16 %v1296, %v1292
      %v1629 = vpack.c.b16 %v1301, %v1297
      %v1630 = vpack.c.b16 %v1302, %v1298
      %v1631 = vpack.c.b16 %v1303, %v1299
      %v1632 = vpack.c.b16 %v1304, %v1300
      %v1633 = vpack.c.b16 %v1309, %v1305
      %v1634 = vpack.c.b16 %v1310, %v1306
      %v1635 = vpack.c.b16 %v1311, %v1307
      %v1636 = vpack.c.b16 %v1312, %v1308
      %v1637 = vpack.c.b16 %v1317, %v1313
      %v1638 = vpack.c.b16 %v1318, %v1314
      %v1639 = vpack.c.b16 %v1319, %v1315
      %v1640 = vpack.c.b16 %v1320, %v1316
      %v1641 = vpack.c.b16 %v1325, %v1321
      %v1642 = vpack.c.b16 %v1326, %v1322
      %v1643 = vpack.c.b16 %v1327, %v1323
      %v1644 = vpack.c.b16 %v1328, %v1324
      %v1645 = vpack.c.b16 %v1333, %v1329
      %v1646 = vpack.c.b16 %v1334, %v1330
      %v1647 = vpack.c.b16 %v1335, %v1331
      %v1648 = vpack.c.b16 %v1336, %v1332
      %v1649 = vpack.c.b16 %v1341, %v1337
      %v1650 = vpack.c.b16 %v1342, %v1338
      %v1651 = vpack.c.b16 %v1343, %v1339
      %v1652 = vpack.c.b16 %v1344, %v1340
      %v1653 = vpack.c.b16 %v1349, %v1345
      %v1654 = vpack.c.b16 %v1350, %v1346
      %v1655 = vpack.c.b16 %v1351, %v1347
      %v1656 = vpack.c.b16 %v1352, %v1348
      %v1657 = vpack.c.b16 %v1357, %v1353
      %v1658 = vpack.c.b16 %v1358, %v1354
      %v1659 = vpack.c.b16 %v1359, %v1355
      %v1660 = vpack.c.b16 %v1360, %v1356
      %v1661 = vpack.c.b16 %v1365, %v1361
      %v1662 = vpack.c.b16 %v1366, %v1362
      %v1663 = vpack.c.b16 %v1367, %v1363
      %v1664 = vpack.c.b16 %v1368, %v1364
      %v1665 = vpack.c.b16 %v1373, %v1369
      %v1666 = vpack.c.b16 %v1374, %v1370
      %v1667 = vpack.c.b16 %v1375, %v1371
      %v1668 = vpack.c.b16 %v1376, %v1372
      %v1669 = vpack.c.b16 %v1381, %v1377
      %v1670 = vpack.c.b16 %v1382, %v1378
      %v1671 = vpack.c.b16 %v1383, %v1379
      %v1672 = vpack.c.b16 %v1384, %v1380
      %1961 = vmatpush.bf16.msra.mxu0 %v1413
      %1962 = vmatpush.bf16.msra.mxu0 %v1409
      %1963 = vmatpush.bf16.msra.mxu0 %v1405
      %1964 = vmatpush.bf16.msra.mxu0 %v1401
      %1965 = vmatpush.bf16.msra.mxu0 %v1397
      %1966 = vmatpush.bf16.msra.mxu0 %v1393
      %1967 = vmatpush.bf16.msra.mxu0 %v1389
      %1968 = vmatpush.bf16.msra.mxu0 %v1385
      %1969 = vmatmul.bf16.gmra.mxu0 %v503
      %v1970 = vpop.f32.mrf.mxu0
      %v1971 = vadd.f32 0.0, %v1970
      %v1972 = vpop.f32.mrf.mxu0
      %v1973 = vadd.f32 0.0, %v1972
      %1974 = vdwg.mxu0
      %1975 = vmatpush.bf16.msra.mxu0 %v1445
      %1976 = vmatpush.bf16.msra.mxu0 %v1441
      %1977 = vmatpush.bf16.msra.mxu0 %v1437
      %1978 = vmatpush.bf16.msra.mxu0 %v1433
      %1979 = vmatpush.bf16.msra.mxu0 %v1429
      %1980 = vmatpush.bf16.msra.mxu0 %v1425
      %1981 = vmatpush.bf16.msra.mxu0 %v1421
      %1982 = vmatpush.bf16.msra.mxu0 %v1417
      %1983 = vmatmul.bf16.gmra.mxu0 %v504
      %v1984 = vpop.f32.mrf.mxu0
      %v1985 = vadd.f32 %v1971, %v1984
      %v1986 = vpop.f32.mrf.mxu0
      %v1987 = vadd.f32 %v1973, %v1986
      %1988 = vdwg.mxu0
      %1989 = vmatpush.bf16.msra.mxu0 %v1477
      %1990 = vmatpush.bf16.msra.mxu0 %v1473
      %1991 = vmatpush.bf16.msra.mxu0 %v1469
      %1992 = vmatpush.bf16.msra.mxu0 %v1465
      %1993 = vmatpush.bf16.msra.mxu0 %v1461
      %1994 = vmatpush.bf16.msra.mxu0 %v1457
      %1995 = vmatpush.bf16.msra.mxu0 %v1453
      %1996 = vmatpush.bf16.msra.mxu0 %v1449
      %1997 = vmatmul.bf16.gmra.mxu0 %v505
      %v1998 = vpop.f32.mrf.mxu0
      %v1999 = vadd.f32 %v1985, %v1998
      %v2000 = vpop.f32.mrf.mxu0
      %v2001 = vadd.f32 %v1987, %v2000
      %2002 = vdwg.mxu0
      %2003 = vmatpush.bf16.msra.mxu0 %v1509
      %2004 = vmatpush.bf16.msra.mxu0 %v1505
      %2005 = vmatpush.bf16.msra.mxu0 %v1501
      %2006 = vmatpush.bf16.msra.mxu0 %v1497
      %2007 = vmatpush.bf16.msra.mxu0 %v1493
      %2008 = vmatpush.bf16.msra.mxu0 %v1489
      %2009 = vmatpush.bf16.msra.mxu0 %v1485
      %2010 = vmatpush.bf16.msra.mxu0 %v1481
      %2011 = vmatmul.bf16.gmra.mxu0 %v506
      %v2012 = vpop.f32.mrf.mxu0
      %v2013 = vadd.f32 %v1999, %v2012
      %v2014 = vpop.f32.mrf.mxu0
      %v2015 = vadd.f32 %v2001, %v2014
      %2016 = vdwg.mxu0
      %2017 = vmatpush.bf16.msra.mxu0 %v1541
      %2018 = vmatpush.bf16.msra.mxu0 %v1537
      %2019 = vmatpush.bf16.msra.mxu0 %v1533
      %2020 = vmatpush.bf16.msra.mxu0 %v1529
      %2021 = vmatpush.bf16.msra.mxu0 %v1525
      %2022 = vmatpush.bf16.msra.mxu0 %v1521
      %2023 = vmatpush.bf16.msra.mxu0 %v1517
      %2024 = vmatpush.bf16.msra.mxu0 %v1513
      %2025 = vmatmul.bf16.gmra.mxu0 %v507
      %v2026 = vpop.f32.mrf.mxu0
      %v2027 = vadd.f32 %v2013, %v2026
      %v2028 = vpop.f32.mrf.mxu0
      %v2029 = vadd.f32 %v2015, %v2028
      %2030 = vdwg.mxu0
      %2031 = vmatpush.bf16.msra.mxu0 %v1573
      %2032 = vmatpush.bf16.msra.mxu0 %v1569
      %2033 = vmatpush.bf16.msra.mxu0 %v1565
      %2034 = vmatpush.bf16.msra.mxu0 %v1561
      %2035 = vmatpush.bf16.msra.mxu0 %v1557
      %2036 = vmatpush.bf16.msra.mxu0 %v1553
      %2037 = vmatpush.bf16.msra.mxu0 %v1549
      %2038 = vmatpush.bf16.msra.mxu0 %v1545
      %2039 = vmatmul.bf16.gmra.mxu0 %v508
      %v2040 = vpop.f32.mrf.mxu0
      %v2041 = vadd.f32 %v2027, %v2040
      %v2042 = vpop.f32.mrf.mxu0
      %v2043 = vadd.f32 %v2029, %v2042
      %2044 = vdwg.mxu0
      %2045 = vmatpush.bf16.msra.mxu0 %v1605
      %2046 = vmatpush.bf16.msra.mxu0 %v1601
      %2047 = vmatpush.bf16.msra.mxu0 %v1597
      %2048 = vmatpush.bf16.msra.mxu0 %v1593
      %2049 = vmatpush.bf16.msra.mxu0 %v1589
      %2050 = vmatpush.bf16.msra.mxu0 %v1585
      %2051 = vmatpush.bf16.msra.mxu0 %v1581
      %2052 = vmatpush.bf16.msra.mxu0 %v1577
      %2053 = vmatmul.bf16.gmra.mxu0 %v509
      %v2054 = vpop.f32.mrf.mxu0
      %v2055 = vadd.f32 %v2041, %v2054
      %v2056 = vpop.f32.mrf.mxu0
      %v2057 = vadd.f32 %v2043, %v2056
      %2058 = vdwg.mxu0
      %2059 = vmatpush.bf16.msra.mxu0 %v1637
      %2060 = vmatpush.bf16.msra.mxu0 %v1633
      %2061 = vmatpush.bf16.msra.mxu0 %v1629
      %2062 = vmatpush.bf16.msra.mxu0 %v1625
      %2063 = vmatpush.bf16.msra.mxu0 %v1621
      %2064 = vmatpush.bf16.msra.mxu0 %v1617
      %2065 = vmatpush.bf16.msra.mxu0 %v1613
      %2066 = vmatpush.bf16.msra.mxu0 %v1609
      %2067 = vmatmul.bf16.gmra.mxu0 %v510
      %v2068 = vpop.f32.mrf.mxu0
      %v2069 = vadd.f32 %v2055, %v2068
      %v2070 = vpop.f32.mrf.mxu0
      %v2071 = vadd.f32 %v2057, %v2070
      %2072 = vdwg.mxu0
      %2073 = vmatpush.bf16.msra.mxu0 %v1669
      %2074 = vmatpush.bf16.msra.mxu0 %v1665
      %2075 = vmatpush.bf16.msra.mxu0 %v1661
      %2076 = vmatpush.bf16.msra.mxu0 %v1657
      %2077 = vmatpush.bf16.msra.mxu0 %v1653
      %2078 = vmatpush.bf16.msra.mxu0 %v1649
      %2079 = vmatpush.bf16.msra.mxu0 %v1645
      %2080 = vmatpush.bf16.msra.mxu0 %v1641
      %2081 = vmatmul.bf16.gmra.mxu0 %v511
      %v2082 = vpop.f32.mrf.mxu0
      %v2083 = vadd.f32 %v2069, %v2082
      %v2084 = vpop.f32.mrf.mxu0
      %v2085 = vadd.f32 %v2071, %v2084
      %2086 = vdwg.mxu0
      %2087 = vmatpush.bf16.msra.mxu0 %v1414
      %2088 = vmatpush.bf16.msra.mxu0 %v1410
      %2089 = vmatpush.bf16.msra.mxu0 %v1406
      %2090 = vmatpush.bf16.msra.mxu0 %v1402
      %2091 = vmatpush.bf16.msra.mxu0 %v1398
      %2092 = vmatpush.bf16.msra.mxu0 %v1394
      %2093 = vmatpush.bf16.msra.mxu0 %v1390
      %2094 = vmatpush.bf16.msra.mxu0 %v1386
      %2095 = vmatmul.bf16.gmra.mxu0 %v503
      %v2096 = vpop.f32.mrf.mxu0
      %v2097 = vadd.f32 0.0, %v2096
      %v2098 = vpop.f32.mrf.mxu0
      %v2099 = vadd.f32 0.0, %v2098
      %2100 = vdwg.mxu0
      %2101 = vmatpush.bf16.msra.mxu0 %v1446
      %2102 = vmatpush.bf16.msra.mxu0 %v1442
      %2103 = vmatpush.bf16.msra.mxu0 %v1438
      %2104 = vmatpush.bf16.msra.mxu0 %v1434
      %2105 = vmatpush.bf16.msra.mxu0 %v1430
      %2106 = vmatpush.bf16.msra.mxu0 %v1426
      %2107 = vmatpush.bf16.msra.mxu0 %v1422
      %2108 = vmatpush.bf16.msra.mxu0 %v1418
      %2109 = vmatmul.bf16.gmra.mxu0 %v504
      %v2110 = vpop.f32.mrf.mxu0
      %v2111 = vadd.f32 %v2097, %v2110
      %v2112 = vpop.f32.mrf.mxu0
      %v2113 = vadd.f32 %v2099, %v2112
      %2114 = vdwg.mxu0
      %2115 = vmatpush.bf16.msra.mxu0 %v1478
      %2116 = vmatpush.bf16.msra.mxu0 %v1474
      %2117 = vmatpush.bf16.msra.mxu0 %v1470
      %2118 = vmatpush.bf16.msra.mxu0 %v1466
      %2119 = vmatpush.bf16.msra.mxu0 %v1462
      %2120 = vmatpush.bf16.msra.mxu0 %v1458
      %2121 = vmatpush.bf16.msra.mxu0 %v1454
      %2122 = vmatpush.bf16.msra.mxu0 %v1450
      %2123 = vmatmul.bf16.gmra.mxu0 %v505
      %v2124 = vpop.f32.mrf.mxu0
      %v2125 = vadd.f32 %v2111, %v2124
      %v2126 = vpop.f32.mrf.mxu0
      %v2127 = vadd.f32 %v2113, %v2126
      %2128 = vdwg.mxu0
      %2129 = vmatpush.bf16.msra.mxu0 %v1510
      %2130 = vmatpush.bf16.msra.mxu0 %v1506
      %2131 = vmatpush.bf16.msra.mxu0 %v1502
      %2132 = vmatpush.bf16.msra.mxu0 %v1498
      %2133 = vmatpush.bf16.msra.mxu0 %v1494
      %2134 = vmatpush.bf16.msra.mxu0 %v1490
      %2135 = vmatpush.bf16.msra.mxu0 %v1486
      %2136 = vmatpush.bf16.msra.mxu0 %v1482
      %2137 = vmatmul.bf16.gmra.mxu0 %v506
      %v2138 = vpop.f32.mrf.mxu0
      %v2139 = vadd.f32 %v2125, %v2138
      %v2140 = vpop.f32.mrf.mxu0
      %v2141 = vadd.f32 %v2127, %v2140
      %2142 = vdwg.mxu0
      %2143 = vmatpush.bf16.msra.mxu0 %v1542
      %2144 = vmatpush.bf16.msra.mxu0 %v1538
      %2145 = vmatpush.bf16.msra.mxu0 %v1534
      %2146 = vmatpush.bf16.msra.mxu0 %v1530
      %2147 = vmatpush.bf16.msra.mxu0 %v1526
      %2148 = vmatpush.bf16.msra.mxu0 %v1522
      %2149 = vmatpush.bf16.msra.mxu0 %v1518
      %2150 = vmatpush.bf16.msra.mxu0 %v1514
      %2151 = vmatmul.bf16.gmra.mxu0 %v507
      %v2152 = vpop.f32.mrf.mxu0
      %v2153 = vadd.f32 %v2139, %v2152
      %v2154 = vpop.f32.mrf.mxu0
      %v2155 = vadd.f32 %v2141, %v2154
      %2156 = vdwg.mxu0
      %2157 = vmatpush.bf16.msra.mxu0 %v1574
      %2158 = vmatpush.bf16.msra.mxu0 %v1570
      %2159 = vmatpush.bf16.msra.mxu0 %v1566
      %2160 = vmatpush.bf16.msra.mxu0 %v1562
      %2161 = vmatpush.bf16.msra.mxu0 %v1558
      %2162 = vmatpush.bf16.msra.mxu0 %v1554
      %2163 = vmatpush.bf16.msra.mxu0 %v1550
      %2164 = vmatpush.bf16.msra.mxu0 %v1546
      %2165 = vmatmul.bf16.gmra.mxu0 %v508
      %v2166 = vpop.f32.mrf.mxu0
      %v2167 = vadd.f32 %v2153, %v2166
      %v2168 = vpop.f32.mrf.mxu0
      %v2169 = vadd.f32 %v2155, %v2168
      %2170 = vdwg.mxu0
      %2171 = vmatpush.bf16.msra.mxu0 %v1606
      %2172 = vmatpush.bf16.msra.mxu0 %v1602
      %2173 = vmatpush.bf16.msra.mxu0 %v1598
      %2174 = vmatpush.bf16.msra.mxu0 %v1594
      %2175 = vmatpush.bf16.msra.mxu0 %v1590
      %2176 = vmatpush.bf16.msra.mxu0 %v1586
      %2177 = vmatpush.bf16.msra.mxu0 %v1582
      %2178 = vmatpush.bf16.msra.mxu0 %v1578
      %2179 = vmatmul.bf16.gmra.mxu0 %v509
      %v2180 = vpop.f32.mrf.mxu0
      %v2181 = vadd.f32 %v2167, %v2180
      %v2182 = vpop.f32.mrf.mxu0
      %v2183 = vadd.f32 %v2169, %v2182
      %2184 = vdwg.mxu0
      %2185 = vmatpush.bf16.msra.mxu0 %v1638
      %2186 = vmatpush.bf16.msra.mxu0 %v1634
      %2187 = vmatpush.bf16.msra.mxu0 %v1630
      %2188 = vmatpush.bf16.msra.mxu0 %v1626
      %2189 = vmatpush.bf16.msra.mxu0 %v1622
      %2190 = vmatpush.bf16.msra.mxu0 %v1618
      %2191 = vmatpush.bf16.msra.mxu0 %v1614
      %2192 = vmatpush.bf16.msra.mxu0 %v1610
      %2193 = vmatmul.bf16.gmra.mxu0 %v510
      %v2194 = vpop.f32.mrf.mxu0
      %v2195 = vadd.f32 %v2181, %v2194
      %v2196 = vpop.f32.mrf.mxu0
      %v2197 = vadd.f32 %v2183, %v2196
      %2198 = vdwg.mxu0
      %2199 = vmatpush.bf16.msra.mxu0 %v1670
      %2200 = vmatpush.bf16.msra.mxu0 %v1666
      %2201 = vmatpush.bf16.msra.mxu0 %v1662
      %2202 = vmatpush.bf16.msra.mxu0 %v1658
      %2203 = vmatpush.bf16.msra.mxu0 %v1654
      %2204 = vmatpush.bf16.msra.mxu0 %v1650
      %2205 = vmatpush.bf16.msra.mxu0 %v1646
      %2206 = vmatpush.bf16.msra.mxu0 %v1642
      %2207 = vmatmul.bf16.gmra.mxu0 %v511
      %v2208 = vpop.f32.mrf.mxu0
      %v2209 = vadd.f32 %v2195, %v2208
      %v2210 = vpop.f32.mrf.mxu0
      %v2211 = vadd.f32 %v2197, %v2210
      %2212 = vdwg.mxu0
      %2213 = vmatpush.bf16.msra.mxu0 %v1415
      %2214 = vmatpush.bf16.msra.mxu0 %v1411
      %2215 = vmatpush.bf16.msra.mxu0 %v1407
      %2216 = vmatpush.bf16.msra.mxu0 %v1403
      %2217 = vmatpush.bf16.msra.mxu0 %v1399
      %2218 = vmatpush.bf16.msra.mxu0 %v1395
      %2219 = vmatpush.bf16.msra.mxu0 %v1391
      %2220 = vmatpush.bf16.msra.mxu0 %v1387
      %2221 = vmatmul.bf16.gmra.mxu0 %v503
      %v2222 = vpop.f32.mrf.mxu0
      %v2223 = vadd.f32 0.0, %v2222
      %v2224 = vpop.f32.mrf.mxu0
      %v2225 = vadd.f32 0.0, %v2224
      %2226 = vdwg.mxu0
      %2227 = vmatpush.bf16.msra.mxu0 %v1447
      %2228 = vmatpush.bf16.msra.mxu0 %v1443
      %2229 = vmatpush.bf16.msra.mxu0 %v1439
      %2230 = vmatpush.bf16.msra.mxu0 %v1435
      %2231 = vmatpush.bf16.msra.mxu0 %v1431
      %2232 = vmatpush.bf16.msra.mxu0 %v1427
      %2233 = vmatpush.bf16.msra.mxu0 %v1423
      %2234 = vmatpush.bf16.msra.mxu0 %v1419
      %2235 = vmatmul.bf16.gmra.mxu0 %v504
      %v2236 = vpop.f32.mrf.mxu0
      %v2237 = vadd.f32 %v2223, %v2236
      %v2238 = vpop.f32.mrf.mxu0
      %v2239 = vadd.f32 %v2225, %v2238
      %2240 = vdwg.mxu0
      %2241 = vmatpush.bf16.msra.mxu0 %v1479
      %2242 = vmatpush.bf16.msra.mxu0 %v1475
      %2243 = vmatpush.bf16.msra.mxu0 %v1471
      %2244 = vmatpush.bf16.msra.mxu0 %v1467
      %2245 = vmatpush.bf16.msra.mxu0 %v1463
      %2246 = vmatpush.bf16.msra.mxu0 %v1459
      %2247 = vmatpush.bf16.msra.mxu0 %v1455
      %2248 = vmatpush.bf16.msra.mxu0 %v1451
      %2249 = vmatmul.bf16.gmra.mxu0 %v505
      %v2250 = vpop.f32.mrf.mxu0
      %v2251 = vadd.f32 %v2237, %v2250
      %v2252 = vpop.f32.mrf.mxu0
      %v2253 = vadd.f32 %v2239, %v2252
      %2254 = vdwg.mxu0
      %2255 = vmatpush.bf16.msra.mxu0 %v1511
      %2256 = vmatpush.bf16.msra.mxu0 %v1507
      %2257 = vmatpush.bf16.msra.mxu0 %v1503
      %2258 = vmatpush.bf16.msra.mxu0 %v1499
      %2259 = vmatpush.bf16.msra.mxu0 %v1495
      %2260 = vmatpush.bf16.msra.mxu0 %v1491
      %2261 = vmatpush.bf16.msra.mxu0 %v1487
      %2262 = vmatpush.bf16.msra.mxu0 %v1483
      %2263 = vmatmul.bf16.gmra.mxu0 %v506
      %v2264 = vpop.f32.mrf.mxu0
      %v2265 = vadd.f32 %v2251, %v2264
      %v2266 = vpop.f32.mrf.mxu0
      %v2267 = vadd.f32 %v2253, %v2266
      %2268 = vdwg.mxu0
      %2269 = vmatpush.bf16.msra.mxu0 %v1543
      %2270 = vmatpush.bf16.msra.mxu0 %v1539
      %2271 = vmatpush.bf16.msra.mxu0 %v1535
      %2272 = vmatpush.bf16.msra.mxu0 %v1531
      %2273 = vmatpush.bf16.msra.mxu0 %v1527
      %2274 = vmatpush.bf16.msra.mxu0 %v1523
      %2275 = vmatpush.bf16.msra.mxu0 %v1519
      %2276 = vmatpush.bf16.msra.mxu0 %v1515
      %2277 = vmatmul.bf16.gmra.mxu0 %v507
      %v2278 = vpop.f32.mrf.mxu0
      %v2279 = vadd.f32 %v2265, %v2278
      %v2280 = vpop.f32.mrf.mxu0
      %v2281 = vadd.f32 %v2267, %v2280
      %2282 = vdwg.mxu0
      %2283 = vmatpush.bf16.msra.mxu0 %v1575
      %2284 = vmatpush.bf16.msra.mxu0 %v1571
      %2285 = vmatpush.bf16.msra.mxu0 %v1567
      %2286 = vmatpush.bf16.msra.mxu0 %v1563
      %2287 = vmatpush.bf16.msra.mxu0 %v1559
      %2288 = vmatpush.bf16.msra.mxu0 %v1555
      %2289 = vmatpush.bf16.msra.mxu0 %v1551
      %2290 = vmatpush.bf16.msra.mxu0 %v1547
      %2291 = vmatmul.bf16.gmra.mxu0 %v508
      %v2292 = vpop.f32.mrf.mxu0
      %v2293 = vadd.f32 %v2279, %v2292
      %v2294 = vpop.f32.mrf.mxu0
      %v2295 = vadd.f32 %v2281, %v2294
      %2296 = vdwg.mxu0
      %2297 = vmatpush.bf16.msra.mxu0 %v1607
      %2298 = vmatpush.bf16.msra.mxu0 %v1603
      %2299 = vmatpush.bf16.msra.mxu0 %v1599
      %2300 = vmatpush.bf16.msra.mxu0 %v1595
      %2301 = vmatpush.bf16.msra.mxu0 %v1591
      %2302 = vmatpush.bf16.msra.mxu0 %v1587
      %2303 = vmatpush.bf16.msra.mxu0 %v1583
      %2304 = vmatpush.bf16.msra.mxu0 %v1579
      %2305 = vmatmul.bf16.gmra.mxu0 %v509
      %v2306 = vpop.f32.mrf.mxu0
      %v2307 = vadd.f32 %v2293, %v2306
      %v2308 = vpop.f32.mrf.mxu0
      %v2309 = vadd.f32 %v2295, %v2308
      %2310 = vdwg.mxu0
      %2311 = vmatpush.bf16.msra.mxu0 %v1639
      %2312 = vmatpush.bf16.msra.mxu0 %v1635
      %2313 = vmatpush.bf16.msra.mxu0 %v1631
      %2314 = vmatpush.bf16.msra.mxu0 %v1627
      %2315 = vmatpush.bf16.msra.mxu0 %v1623
      %2316 = vmatpush.bf16.msra.mxu0 %v1619
      %2317 = vmatpush.bf16.msra.mxu0 %v1615
      %2318 = vmatpush.bf16.msra.mxu0 %v1611
      %2319 = vmatmul.bf16.gmra.mxu0 %v510
      %v2320 = vpop.f32.mrf.mxu0
      %v2321 = vadd.f32 %v2307, %v2320
      %v2322 = vpop.f32.mrf.mxu0
      %v2323 = vadd.f32 %v2309, %v2322
      %2324 = vdwg.mxu0
      %2325 = vmatpush.bf16.msra.mxu0 %v1671
      %2326 = vmatpush.bf16.msra.mxu0 %v1667
      %2327 = vmatpush.bf16.msra.mxu0 %v1663
      %2328 = vmatpush.bf16.msra.mxu0 %v1659
      %2329 = vmatpush.bf16.msra.mxu0 %v1655
      %2330 = vmatpush.bf16.msra.mxu0 %v1651
      %2331 = vmatpush.bf16.msra.mxu0 %v1647
      %2332 = vmatpush.bf16.msra.mxu0 %v1643
      %2333 = vmatmul.bf16.gmra.mxu0 %v511
      %v2334 = vpop.f32.mrf.mxu0
      %v2335 = vadd.f32 %v2321, %v2334
      %v2336 = vpop.f32.mrf.mxu0
      %v2337 = vadd.f32 %v2323, %v2336
      %2338 = vdwg.mxu0
      %2339 = vmatpush.bf16.msra.mxu0 %v1416
      %2340 = vmatpush.bf16.msra.mxu0 %v1412
      %2341 = vmatpush.bf16.msra.mxu0 %v1408
      %2342 = vmatpush.bf16.msra.mxu0 %v1404
      %2343 = vmatpush.bf16.msra.mxu0 %v1400
      %2344 = vmatpush.bf16.msra.mxu0 %v1396
      %2345 = vmatpush.bf16.msra.mxu0 %v1392
      %2346 = vmatpush.bf16.msra.mxu0 %v1388
      %2347 = vmatmul.bf16.gmra.mxu0 %v503
      %v2348 = vpop.f32.mrf.mxu0
      %v2349 = vadd.f32 0.0, %v2348
      %v2350 = vpop.f32.mrf.mxu0
      %v2351 = vadd.f32 0.0, %v2350
      %2352 = vdwg.mxu0
      %2353 = vmatpush.bf16.msra.mxu0 %v1448
      %2354 = vmatpush.bf16.msra.mxu0 %v1444
      %2355 = vmatpush.bf16.msra.mxu0 %v1440
      %2356 = vmatpush.bf16.msra.mxu0 %v1436
      %2357 = vmatpush.bf16.msra.mxu0 %v1432
      %2358 = vmatpush.bf16.msra.mxu0 %v1428
      %2359 = vmatpush.bf16.msra.mxu0 %v1424
      %2360 = vmatpush.bf16.msra.mxu0 %v1420
      %2361 = vmatmul.bf16.gmra.mxu0 %v504
      %v2362 = vpop.f32.mrf.mxu0
      %v2363 = vadd.f32 %v2349, %v2362
      %v2364 = vpop.f32.mrf.mxu0
      %v2365 = vadd.f32 %v2351, %v2364
      %2366 = vdwg.mxu0
      %2367 = vmatpush.bf16.msra.mxu0 %v1480
      %2368 = vmatpush.bf16.msra.mxu0 %v1476
      %2369 = vmatpush.bf16.msra.mxu0 %v1472
      %2370 = vmatpush.bf16.msra.mxu0 %v1468
      %2371 = vmatpush.bf16.msra.mxu0 %v1464
      %2372 = vmatpush.bf16.msra.mxu0 %v1460
      %2373 = vmatpush.bf16.msra.mxu0 %v1456
      %2374 = vmatpush.bf16.msra.mxu0 %v1452
      %2375 = vmatmul.bf16.gmra.mxu0 %v505
      %v2376 = vpop.f32.mrf.mxu0
      %v2377 = vadd.f32 %v2363, %v2376
      %v2378 = vpop.f32.mrf.mxu0
      %v2379 = vadd.f32 %v2365, %v2378
      %2380 = vdwg.mxu0
      %2381 = vmatpush.bf16.msra.mxu0 %v1512
      %2382 = vmatpush.bf16.msra.mxu0 %v1508
      %2383 = vmatpush.bf16.msra.mxu0 %v1504
      %2384 = vmatpush.bf16.msra.mxu0 %v1500
      %2385 = vmatpush.bf16.msra.mxu0 %v1496
      %2386 = vmatpush.bf16.msra.mxu0 %v1492
      %2387 = vmatpush.bf16.msra.mxu0 %v1488
      %2388 = vmatpush.bf16.msra.mxu0 %v1484
      %2389 = vmatmul.bf16.gmra.mxu0 %v506
      %v2390 = vpop.f32.mrf.mxu0
      %v2391 = vadd.f32 %v2377, %v2390
      %v2392 = vpop.f32.mrf.mxu0
      %v2393 = vadd.f32 %v2379, %v2392
      %2394 = vdwg.mxu0
      %2395 = vmatpush.bf16.msra.mxu0 %v1544
      %2396 = vmatpush.bf16.msra.mxu0 %v1540
      %2397 = vmatpush.bf16.msra.mxu0 %v1536
      %2398 = vmatpush.bf16.msra.mxu0 %v1532
      %2399 = vmatpush.bf16.msra.mxu0 %v1528
      %2400 = vmatpush.bf16.msra.mxu0 %v1524
      %2401 = vmatpush.bf16.msra.mxu0 %v1520
      %2402 = vmatpush.bf16.msra.mxu0 %v1516
      %2403 = vmatmul.bf16.gmra.mxu0 %v507
      %v2404 = vpop.f32.mrf.mxu0
      %v2405 = vadd.f32 %v2391, %v2404
      %v2406 = vpop.f32.mrf.mxu0
      %v2407 = vadd.f32 %v2393, %v2406
      %2408 = vdwg.mxu0
      %2409 = vmatpush.bf16.msra.mxu0 %v1576
      %2410 = vmatpush.bf16.msra.mxu0 %v1572
      %2411 = vmatpush.bf16.msra.mxu0 %v1568
      %2412 = vmatpush.bf16.msra.mxu0 %v1564
      %2413 = vmatpush.bf16.msra.mxu0 %v1560
      %2414 = vmatpush.bf16.msra.mxu0 %v1556
      %2415 = vmatpush.bf16.msra.mxu0 %v1552
      %2416 = vmatpush.bf16.msra.mxu0 %v1548
      %2417 = vmatmul.bf16.gmra.mxu0 %v508
      %v2418 = vpop.f32.mrf.mxu0
      %v2419 = vadd.f32 %v2405, %v2418
      %v2420 = vpop.f32.mrf.mxu0
      %v2421 = vadd.f32 %v2407, %v2420
      %2422 = vdwg.mxu0
      %2423 = vmatpush.bf16.msra.mxu0 %v1608
      %2424 = vmatpush.bf16.msra.mxu0 %v1604
      %2425 = vmatpush.bf16.msra.mxu0 %v1600
      %2426 = vmatpush.bf16.msra.mxu0 %v1596
      %2427 = vmatpush.bf16.msra.mxu0 %v1592
      %2428 = vmatpush.bf16.msra.mxu0 %v1588
      %2429 = vmatpush.bf16.msra.mxu0 %v1584
      %2430 = vmatpush.bf16.msra.mxu0 %v1580
      %2431 = vmatmul.bf16.gmra.mxu0 %v509
      %v2432 = vpop.f32.mrf.mxu0
      %v2433 = vadd.f32 %v2419, %v2432
      %v2434 = vpop.f32.mrf.mxu0
      %v2435 = vadd.f32 %v2421, %v2434
      %2436 = vdwg.mxu0
      %2437 = vmatpush.bf16.msra.mxu0 %v1640
      %2438 = vmatpush.bf16.msra.mxu0 %v1636
      %2439 = vmatpush.bf16.msra.mxu0 %v1632
      %2440 = vmatpush.bf16.msra.mxu0 %v1628
      %2441 = vmatpush.bf16.msra.mxu0 %v1624
      %2442 = vmatpush.bf16.msra.mxu0 %v1620
      %2443 = vmatpush.bf16.msra.mxu0 %v1616
      %2444 = vmatpush.bf16.msra.mxu0 %v1612
      %2445 = vmatmul.bf16.gmra.mxu0 %v510
      %v2446 = vpop.f32.mrf.mxu0
      %v2447 = vadd.f32 %v2433, %v2446
      %v2448 = vpop.f32.mrf.mxu0
      %v2449 = vadd.f32 %v2435, %v2448
      %2450 = vdwg.mxu0
      %2451 = vmatpush.bf16.msra.mxu0 %v1672
      %2452 = vmatpush.bf16.msra.mxu0 %v1668
      %2453 = vmatpush.bf16.msra.mxu0 %v1664
      %2454 = vmatpush.bf16.msra.mxu0 %v1660
      %2455 = vmatpush.bf16.msra.mxu0 %v1656
      %2456 = vmatpush.bf16.msra.mxu0 %v1652
      %2457 = vmatpush.bf16.msra.mxu0 %v1648
      %2458 = vmatpush.bf16.msra.mxu0 %v1644
      %2459 = vmatmul.bf16.gmra.mxu0 %v511
      %v2460 = vpop.f32.mrf.mxu0
      %v2461 = vadd.f32 %v2447, %v2460
      %v2462 = vpop.f32.mrf.mxu0
      %v2463 = vadd.f32 %v2449, %v2462
      %2464 = vdwg.mxu0
      %v2465 = vmax.f32 %v2083, %v2209
      %v2466 = vmax.f32 %v2085, %v2211
      %v2467 = vmax.f32 %v2465, %v2335
      %v2468 = vmax.f32 %v2466, %v2337
      %v2469 = vmax.f32 %v2467, %v2461
      %v2470 = vmax.f32 %v2468, %v2463
      %v2471 = vld [vmem:[%s2] sm:$0x1]
      %v2473 = vperm.slane %v2471, 0
      %v2475 = vadd.f32 %v2469, %v2473
      %v2476 = vadd.f32 %v2470, %v2473
      %v2477 = vmax.f32 %v2475, 0.0
      %v2478 = vmax.f32 %v2476, 0.0
      %v2479 = vpack.c.bf16 %v2477, %v2477
      %v2480 = vpack.c.bf16 %v2478, %v2478
      %2481 = vst [vmem:[%s175] sm:$0xf] %v2479
      %2482 = vst [vmem:[%s175 + $0x4] sm:$0xf] %v2480
      %s2483 = smul.u32 2, %s14
      %p2484 = scmp.lt.s32.totalorder %s2483, 3
      %s2485 = scalar_select %p2484, %s2483, 3
      %s2486 = smul.addr %s2485, 4
      %s2487 = scalar_lea.vmem %s3, %s2486
      // Predicated region
      $region33: #{cust_lenet_forward.4} parent=31 // pred_check
        %p2488 = pneg %p100
      $region34: #{cust_lenet_forward.4} parent=31 // pred_check_branch
        %2490 = sbr.rel (%p2488) target = $region36
      $region35: #{cust_lenet_forward.4} parent=31 // pred_region
        %s2491 = smul.u32 2, %s14
      $region36: #{cust_lenet_forward.4} parent=31 // pred_fallthru
        _
    $region32: #{cust_lenet_forward.4} parent=5 // pred_fallthru
      _
    %p2492 = scmp.le.s32.totalorder 2, %s9
    // Predicated region
    $region37: #{cust_lenet_forward.4} parent=5 // pred_check
      %p2493 = pneg %p2492
    $region38: #{cust_lenet_forward.4} parent=5 // pred_check_branch
      %2495 = sbr.rel (%p2493) target = $region40
    $region39: #{cust_lenet_forward.4} parent=5 // pred_region
      %s2496 = ssub.s32 %s9, 2
      // Predicated region
      $region41: #{cust_lenet_forward.4} parent=39 // pred_check
        %p2497 = pneg %p106
      $region42: #{cust_lenet_forward.4} parent=39 // pred_check_branch
        %2499 = sbr.rel (%p2497) target = $region44
      $region43: #{cust_lenet_forward.4} parent=39 // pred_region
        %s2500 = smul.u32 2, %s15
        %p2501 = scmp.lt.s32.totalorder %s2500, 3
        %s2502 = scalar_select %p2501, %s2500, 3
        %s2503 = smul.addr %s2502, 4
        %s2504 = scalar_lea.vmem %s3, %s2503
      $region44: #{cust_lenet_forward.4} parent=39 // pred_fallthru
        _
    $region40: #{cust_lenet_forward.4} parent=5 // pred_fallthru
      _
  $region6: #{cust_lenet_forward.4} parent=0 // loop_footer
    %s13 = sadd.s32 1, %s9
  $region7: #{cust_lenet_forward.4} parent=0 // loop_footer_branch
    %8 = sbr.rel target = $region3
  $region8: #{cust_lenet_forward.4} parent=0 // loop_exit
    _

// kernel: cust_lenet_forward.5
$region0: #{cust_lenet_forward.5}
  #allocation0 [shape = 'u32[]', space=smem, size = 0x4, offset = 0x4, fixed_abs, tag = 'smem constant byte address 0x4 - core index']
  #allocation1 [shape = 'u32[72,128]{1,0:T(1,128)}', space=vmem, size = 0x9000, scoped, tag = 'internal scratch']
  %s0 = inlined_call_operand.vmem [shape: bf16[16,2048], index: 0, kind: input, shape index: {}]
  %s1 = inlined_call_operand.vmem [shape: bf16[2048,128], index: 1, kind: input, shape index: {}]
  %s2 = inlined_call_operand.vmem [shape: f32[1,128], index: 2, kind: input, shape index: {}]
  %s3 = inlined_call_operand.vmem [shape: bf16[128,128], index: 3, kind: input, shape index: {}]
  %s4 = inlined_call_operand.vmem [shape: f32[1,128], index: 4, kind: input, shape index: {}]
  %s5 = inlined_call_operand.vmem [shape: bf16[128,128], index: 5, kind: input, shape index: {}]
  %s6 = inlined_call_operand.vmem [shape: f32[1,128], index: 6, kind: input, shape index: {}]
  %s7 = inlined_call_operand.vmem [shape: f32[16,128], index: 7, kind: output, shape index: {}]
  %s8 = sld [smem:[#allocation0]]
  $region38: #{cust_lenet_forward.5} parent=0
    _
  %s10 = ssub.s32 1, %s8
  %s11 = scalar_select 0, %s10, %s8
  // Predicated region
  $region2: #{cust_lenet_forward.5} parent=0 // pred_check
    _
  $region3: #{cust_lenet_forward.5} parent=0 // pred_check_branch
    %13 = sbr.rel (0) target = $region5
  $region4: #{cust_lenet_forward.5} parent=0 // pred_region
    _
  $region5: #{cust_lenet_forward.5} parent=0 // pred_fallthru
    _
  // Predicated region
  $region6: #{cust_lenet_forward.5} parent=0 // pred_check
    _
  $region7: #{cust_lenet_forward.5} parent=0 // pred_check_branch
    %15 = sbr.rel (0) target = $region9
  $region8: #{cust_lenet_forward.5} parent=0 // pred_region
    _
  $region9: #{cust_lenet_forward.5} parent=0 // pred_fallthru
    _
  // Predicated region
  $region10: #{cust_lenet_forward.5} parent=0 // pred_check
    _
  $region11: #{cust_lenet_forward.5} parent=0 // pred_check_branch
    %17 = sbr.rel (0) target = $region13
  $region12: #{cust_lenet_forward.5} parent=0 // pred_region
    _
  $region13: #{cust_lenet_forward.5} parent=0 // pred_fallthru
    _
  // Predicated region
  $region14: #{cust_lenet_forward.5} parent=0 // pred_check
    _
  $region15: #{cust_lenet_forward.5} parent=0 // pred_check_branch
    %19 = sbr.rel (0) target = $region17
  $region16: #{cust_lenet_forward.5} parent=0 // pred_region
    _
  $region17: #{cust_lenet_forward.5} parent=0 // pred_fallthru
    _
  // Predicated region
  $region18: #{cust_lenet_forward.5} parent=0 // pred_check
    _
  $region19: #{cust_lenet_forward.5} parent=0 // pred_check_branch
    %21 = sbr.rel (0) target = $region21
  $region20: #{cust_lenet_forward.5} parent=0 // pred_region
    _
  $region21: #{cust_lenet_forward.5} parent=0 // pred_fallthru
    _
  // Predicated region
  $region22: #{cust_lenet_forward.5} parent=0 // pred_check
    _
  $region23: #{cust_lenet_forward.5} parent=0 // pred_check_branch
    %23 = sbr.rel (0) target = $region25
  $region24: #{cust_lenet_forward.5} parent=0 // pred_region
    _
  $region25: #{cust_lenet_forward.5} parent=0 // pred_fallthru
    _
  // Predicated region
  $region26: #{cust_lenet_forward.5} parent=0 // pred_check
    _
  $region27: #{cust_lenet_forward.5} parent=0 // pred_check_branch
    %25 = sbr.rel (0) target = $region29
  $region28: #{cust_lenet_forward.5} parent=0 // pred_region
    _
  $region29: #{cust_lenet_forward.5} parent=0 // pred_fallthru
    _
  %v26 = vld [vmem:[%s0] sm:$0xff]
  %v27 = vld [vmem:[%s0 + $0x8] sm:$0xff]
  %v28 = vld [vmem:[%s0 + $0x10] sm:$0xff]
  %v29 = vld [vmem:[%s0 + $0x18] sm:$0xff]
  %v30 = vld [vmem:[%s0 + $0x20] sm:$0xff]
  %v31 = vld [vmem:[%s0 + $0x28] sm:$0xff]
  %v32 = vld [vmem:[%s0 + $0x30] sm:$0xff]
  %v33 = vld [vmem:[%s0 + $0x38] sm:$0xff]
  %v34 = vld [vmem:[%s0 + $0x40] sm:$0xff]
  %v35 = vld [vmem:[%s0 + $0x48] sm:$0xff]
  %v36 = vld [vmem:[%s0 + $0x50] sm:$0xff]
  %v37 = vld [vmem:[%s0 + $0x58] sm:$0xff]
  %v38 = vld [vmem:[%s0 + $0x60] sm:$0xff]
  %v39 = vld [vmem:[%s0 + $0x68] sm:$0xff]
  %v40 = vld [vmem:[%s0 + $0x70] sm:$0xff]
  %v41 = vld [vmem:[%s0 + $0x78] sm:$0xff]
  %v42 = vld [vmem:[%s1] sm:$0xf]
  %v43 = vld [vmem:[%s1 + $0x4] sm:$0xf]
  %v44 = vld [vmem:[%s1 + $0x8] sm:$0xf]
  %v45 = vld [vmem:[%s1 + $0xc] sm:$0xf]
  %v46 = vld [vmem:[%s1 + $0x10] sm:$0xf]
  %v47 = vld [vmem:[%s1 + $0x14] sm:$0xf]
  %v48 = vld [vmem:[%s1 + $0x18] sm:$0xf]
  %v49 = vld [vmem:[%s1 + $0x1c] sm:$0xf]
  %v50 = vld [vmem:[%s1 + $0x20] sm:$0xf]
  %v51 = vld [vmem:[%s1 + $0x24] sm:$0xf]
  %v52 = vld [vmem:[%s1 + $0x28] sm:$0xf]
  %v53 = vld [vmem:[%s1 + $0x2c] sm:$0xf]
  %v54 = vld [vmem:[%s1 + $0x30] sm:$0xf]
  %v55 = vld [vmem:[%s1 + $0x34] sm:$0xf]
  %v56 = vld [vmem:[%s1 + $0x38] sm:$0xf]
  %v57 = vld [vmem:[%s1 + $0x3c] sm:$0xf]
  %v58 = vld [vmem:[%s1 + $0x40] sm:$0xf]
  %v59 = vld [vmem:[%s1 + $0x44] sm:$0xf]
  %v60 = vld [vmem:[%s1 + $0x48] sm:$0xf]
  %v61 = vld [vmem:[%s1 + $0x4c] sm:$0xf]
  %v62 = vld [vmem:[%s1 + $0x50] sm:$0xf]
  %v63 = vld [vmem:[%s1 + $0x54] sm:$0xf]
  %v64 = vld [vmem:[%s1 + $0x58] sm:$0xf]
  %v65 = vld [vmem:[%s1 + $0x5c] sm:$0xf]
  %v66 = vld [vmem:[%s1 + $0x60] sm:$0xf]
  %v67 = vld [vmem:[%s1 + $0x64] sm:$0xf]
  %v68 = vld [vmem:[%s1 + $0x68] sm:$0xf]
  %v69 = vld [vmem:[%s1 + $0x6c] sm:$0xf]
  %v70 = vld [vmem:[%s1 + $0x70] sm:$0xf]
  %v71 = vld [vmem:[%s1 + $0x74] sm:$0xf]
  %v72 = vld [vmem:[%s1 + $0x78] sm:$0xf]
  %v73 = vld [vmem:[%s1 + $0x7c] sm:$0xf]
  %v74 = vld [vmem:[%s1 + $0x80] sm:$0xf]
  %v75 = vld [vmem:[%s1 + $0x84] sm:$0xf]
  %v76 = vld [vmem:[%s1 + $0x88] sm:$0xf]
  %v77 = vld [vmem:[%s1 + $0x8c] sm:$0xf]
  %v78 = vld [vmem:[%s1 + $0x90] sm:$0xf]
  %v79 = vld [vmem:[%s1 + $0x94] sm:$0xf]
  %v80 = vld [vmem:[%s1 + $0x98] sm:$0xf]
  %v81 = vld [vmem:[%s1 + $0x9c] sm:$0xf]
  %v82 = vld [vmem:[%s1 + $0xa0] sm:$0xf]
  %v83 = vld [vmem:[%s1 + $0xa4] sm:$0xf]
  %v84 = vld [vmem:[%s1 + $0xa8] sm:$0xf]
  %v85 = vld [vmem:[%s1 + $0xac] sm:$0xf]
  %v86 = vld [vmem:[%s1 + $0xb0] sm:$0xf]
  %v87 = vld [vmem:[%s1 + $0xb4] sm:$0xf]
  %v88 = vld [vmem:[%s1 + $0xb8] sm:$0xf]
  %v89 = vld [vmem:[%s1 + $0xbc] sm:$0xf]
  %v90 = vld [vmem:[%s1 + $0xc0] sm:$0xf]
  %v91 = vld [vmem:[%s1 + $0xc4] sm:$0xf]
  %v92 = vld [vmem:[%s1 + $0xc8] sm:$0xf]
  %v93 = vld [vmem:[%s1 + $0xcc] sm:$0xf]
  %v94 = vld [vmem:[%s1 + $0xd0] sm:$0xf]
  %v95 = vld [vmem:[%s1 + $0xd4] sm:$0xf]
  %v96 = vld [vmem:[%s1 + $0xd8] sm:$0xf]
  %v97 = vld [vmem:[%s1 + $0xdc] sm:$0xf]
  %v98 = vld [vmem:[%s1 + $0xe0] sm:$0xf]
  %v99 = vld [vmem:[%s1 + $0xe4] sm:$0xf]
  %v100 = vld [vmem:[%s1 + $0xe8] sm:$0xf]
  %v101 = vld [vmem:[%s1 + $0xec] sm:$0xf]
  %v102 = vld [vmem:[%s1 + $0xf0] sm:$0xf]
  %v103 = vld [vmem:[%s1 + $0xf4] sm:$0xf]
  %v104 = vld [vmem:[%s1 + $0xf8] sm:$0xf]
  %v105 = vld [vmem:[%s1 + $0xfc] sm:$0xf]
  %v106 = vld [vmem:[%s1 + $0x100] sm:$0xf]
  %v107 = vld [vmem:[%s1 + $0x104] sm:$0xf]
  %v108 = vld [vmem:[%s1 + $0x108] sm:$0xf]
  %v109 = vld [vmem:[%s1 + $0x10c] sm:$0xf]
  %v110 = vld [vmem:[%s1 + $0x110] sm:$0xf]
  %v111 = vld [vmem:[%s1 + $0x114] sm:$0xf]
  %v112 = vld [vmem:[%s1 + $0x118] sm:$0xf]
  %v113 = vld [vmem:[%s1 + $0x11c] sm:$0xf]
  %v114 = vld [vmem:[%s1 + $0x120] sm:$0xf]
  %v115 = vld [vmem:[%s1 + $0x124] sm:$0xf]
  %v116 = vld [vmem:[%s1 + $0x128] sm:$0xf]
  %v117 = vld [vmem:[%s1 + $0x12c] sm:$0xf]
  %v118 = vld [vmem:[%s1 + $0x130] sm:$0xf]
  %v119 = vld [vmem:[%s1 + $0x134] sm:$0xf]
  %v120 = vld [vmem:[%s1 + $0x138] sm:$0xf]
  %v121 = vld [vmem:[%s1 + $0x13c] sm:$0xf]
  %v122 = vld [vmem:[%s1 + $0x140] sm:$0xf]
  %v123 = vld [vmem:[%s1 + $0x144] sm:$0xf]
  %v124 = vld [vmem:[%s1 + $0x148] sm:$0xf]
  %v125 = vld [vmem:[%s1 + $0x14c] sm:$0xf]
  %v126 = vld [vmem:[%s1 + $0x150] sm:$0xf]
  %v127 = vld [vmem:[%s1 + $0x154] sm:$0xf]
  %v128 = vld [vmem:[%s1 + $0x158] sm:$0xf]
  %v129 = vld [vmem:[%s1 + $0x15c] sm:$0xf]
  %v130 = vld [vmem:[%s1 + $0x160] sm:$0xf]
  %v131 = vld [vmem:[%s1 + $0x164] sm:$0xf]
  %v132 = vld [vmem:[%s1 + $0x168] sm:$0xf]
  %v133 = vld [vmem:[%s1 + $0x16c] sm:$0xf]
  %v134 = vld [vmem:[%s1 + $0x170] sm:$0xf]
  %v135 = vld [vmem:[%s1 + $0x174] sm:$0xf]
  %v136 = vld [vmem:[%s1 + $0x178] sm:$0xf]
  %v137 = vld [vmem:[%s1 + $0x17c] sm:$0xf]
  %v138 = vld [vmem:[%s1 + $0x180] sm:$0xf]
  %v139 = vld [vmem:[%s1 + $0x184] sm:$0xf]
  %v140 = vld [vmem:[%s1 + $0x188] sm:$0xf]
  %v141 = vld [vmem:[%s1 + $0x18c] sm:$0xf]
  %v142 = vld [vmem:[%s1 + $0x190] sm:$0xf]
  %v143 = vld [vmem:[%s1 + $0x194] sm:$0xf]
  %v144 = vld [vmem:[%s1 + $0x198] sm:$0xf]
  %v145 = vld [vmem:[%s1 + $0x19c] sm:$0xf]
  %v146 = vld [vmem:[%s1 + $0x1a0] sm:$0xf]
  %v147 = vld [vmem:[%s1 + $0x1a4] sm:$0xf]
  %v148 = vld [vmem:[%s1 + $0x1a8] sm:$0xf]
  %v149 = vld [vmem:[%s1 + $0x1ac] sm:$0xf]
  %v150 = vld [vmem:[%s1 + $0x1b0] sm:$0xf]
  %v151 = vld [vmem:[%s1 + $0x1b4] sm:$0xf]
  %v152 = vld [vmem:[%s1 + $0x1b8] sm:$0xf]
  %v153 = vld [vmem:[%s1 + $0x1bc] sm:$0xf]
  %v154 = vld [vmem:[%s1 + $0x1c0] sm:$0xf]
  %v155 = vld [vmem:[%s1 + $0x1c4] sm:$0xf]
  %v156 = vld [vmem:[%s1 + $0x1c8] sm:$0xf]
  %v157 = vld [vmem:[%s1 + $0x1cc] sm:$0xf]
  %v158 = vld [vmem:[%s1 + $0x1d0] sm:$0xf]
  %v159 = vld [vmem:[%s1 + $0x1d4] sm:$0xf]
  %v160 = vld [vmem:[%s1 + $0x1d8] sm:$0xf]
  %v161 = vld [vmem:[%s1 + $0x1dc] sm:$0xf]
  %v162 = vld [vmem:[%s1 + $0x1e0] sm:$0xf]
  %v163 = vld [vmem:[%s1 + $0x1e4] sm:$0xf]
  %v164 = vld [vmem:[%s1 + $0x1e8] sm:$0xf]
  %v165 = vld [vmem:[%s1 + $0x1ec] sm:$0xf]
  %v166 = vld [vmem:[%s1 + $0x1f0] sm:$0xf]
  %v167 = vld [vmem:[%s1 + $0x1f4] sm:$0xf]
  %v168 = vld [vmem:[%s1 + $0x1f8] sm:$0xf]
  %v169 = vld [vmem:[%s1 + $0x1fc] sm:$0xf]
  %v170 = vld [vmem:[%s1 + $0x200] sm:$0xf]
  %v171 = vld [vmem:[%s1 + $0x204] sm:$0xf]
  %v172 = vld [vmem:[%s1 + $0x208] sm:$0xf]
  %v173 = vld [vmem:[%s1 + $0x20c] sm:$0xf]
  %v174 = vld [vmem:[%s1 + $0x210] sm:$0xf]
  %v175 = vld [vmem:[%s1 + $0x214] sm:$0xf]
  %v176 = vld [vmem:[%s1 + $0x218] sm:$0xf]
  %v177 = vld [vmem:[%s1 + $0x21c] sm:$0xf]
  %v178 = vld [vmem:[%s1 + $0x220] sm:$0xf]
  %v179 = vld [vmem:[%s1 + $0x224] sm:$0xf]
  %v180 = vld [vmem:[%s1 + $0x228] sm:$0xf]
  %v181 = vld [vmem:[%s1 + $0x22c] sm:$0xf]
  %v182 = vld [vmem:[%s1 + $0x230] sm:$0xf]
  %v183 = vld [vmem:[%s1 + $0x234] sm:$0xf]
  %v184 = vld [vmem:[%s1 + $0x238] sm:$0xf]
  %v185 = vld [vmem:[%s1 + $0x23c] sm:$0xf]
  %v186 = vld [vmem:[%s1 + $0x240] sm:$0xf]
  %v187 = vld [vmem:[%s1 + $0x244] sm:$0xf]
  %v188 = vld [vmem:[%s1 + $0x248] sm:$0xf]
  %v189 = vld [vmem:[%s1 + $0x24c] sm:$0xf]
  %v190 = vld [vmem:[%s1 + $0x250] sm:$0xf]
  %v191 = vld [vmem:[%s1 + $0x254] sm:$0xf]
  %v192 = vld [vmem:[%s1 + $0x258] sm:$0xf]
  %v193 = vld [vmem:[%s1 + $0x25c] sm:$0xf]
  %v194 = vld [vmem:[%s1 + $0x260] sm:$0xf]
  %v195 = vld [vmem:[%s1 + $0x264] sm:$0xf]
  %v196 = vld [vmem:[%s1 + $0x268] sm:$0xf]
  %v197 = vld [vmem:[%s1 + $0x26c] sm:$0xf]
  %v198 = vld [vmem:[%s1 + $0x270] sm:$0xf]
  %v199 = vld [vmem:[%s1 + $0x274] sm:$0xf]
  %v200 = vld [vmem:[%s1 + $0x278] sm:$0xf]
  %v201 = vld [vmem:[%s1 + $0x27c] sm:$0xf]
  %v202 = vld [vmem:[%s1 + $0x280] sm:$0xf]
  %v203 = vld [vmem:[%s1 + $0x284] sm:$0xf]
  %v204 = vld [vmem:[%s1 + $0x288] sm:$0xf]
  %v205 = vld [vmem:[%s1 + $0x28c] sm:$0xf]
  %v206 = vld [vmem:[%s1 + $0x290] sm:$0xf]
  %v207 = vld [vmem:[%s1 + $0x294] sm:$0xf]
  %v208 = vld [vmem:[%s1 + $0x298] sm:$0xf]
  %v209 = vld [vmem:[%s1 + $0x29c] sm:$0xf]
  %v210 = vld [vmem:[%s1 + $0x2a0] sm:$0xf]
  %v211 = vld [vmem:[%s1 + $0x2a4] sm:$0xf]
  %v212 = vld [vmem:[%s1 + $0x2a8] sm:$0xf]
  %v213 = vld [vmem:[%s1 + $0x2ac] sm:$0xf]
  %v214 = vld [vmem:[%s1 + $0x2b0] sm:$0xf]
  %v215 = vld [vmem:[%s1 + $0x2b4] sm:$0xf]
  %v216 = vld [vmem:[%s1 + $0x2b8] sm:$0xf]
  %v217 = vld [vmem:[%s1 + $0x2bc] sm:$0xf]
  %v218 = vld [vmem:[%s1 + $0x2c0] sm:$0xf]
  %v219 = vld [vmem:[%s1 + $0x2c4] sm:$0xf]
  %v220 = vld [vmem:[%s1 + $0x2c8] sm:$0xf]
  %v221 = vld [vmem:[%s1 + $0x2cc] sm:$0xf]
  %v222 = vld [vmem:[%s1 + $0x2d0] sm:$0xf]
  %v223 = vld [vmem:[%s1 + $0x2d4] sm:$0xf]
  %v224 = vld [vmem:[%s1 + $0x2d8] sm:$0xf]
  %v225 = vld [vmem:[%s1 + $0x2dc] sm:$0xf]
  %v226 = vld [vmem:[%s1 + $0x2e0] sm:$0xf]
  %v227 = vld [vmem:[%s1 + $0x2e4] sm:$0xf]
  %v228 = vld [vmem:[%s1 + $0x2e8] sm:$0xf]
  %v229 = vld [vmem:[%s1 + $0x2ec] sm:$0xf]
  %v230 = vld [vmem:[%s1 + $0x2f0] sm:$0xf]
  %v231 = vld [vmem:[%s1 + $0x2f4] sm:$0xf]
  %v232 = vld [vmem:[%s1 + $0x2f8] sm:$0xf]
  %v233 = vld [vmem:[%s1 + $0x2fc] sm:$0xf]
  %v234 = vld [vmem:[%s1 + $0x300] sm:$0xf]
  %v235 = vld [vmem:[%s1 + $0x304] sm:$0xf]
  %v236 = vld [vmem:[%s1 + $0x308] sm:$0xf]
  %v237 = vld [vmem:[%s1 + $0x30c] sm:$0xf]
  %v238 = vld [vmem:[%s1 + $0x310] sm:$0xf]
  %v239 = vld [vmem:[%s1 + $0x314] sm:$0xf]
  %v240 = vld [vmem:[%s1 + $0x318] sm:$0xf]
  %v241 = vld [vmem:[%s1 + $0x31c] sm:$0xf]
  %v242 = vld [vmem:[%s1 + $0x320] sm:$0xf]
  %v243 = vld [vmem:[%s1 + $0x324] sm:$0xf]
  %v244 = vld [vmem:[%s1 + $0x328] sm:$0xf]
  %v245 = vld [vmem:[%s1 + $0x32c] sm:$0xf]
  %v246 = vld [vmem:[%s1 + $0x330] sm:$0xf]
  %v247 = vld [vmem:[%s1 + $0x334] sm:$0xf]
  %v248 = vld [vmem:[%s1 + $0x338] sm:$0xf]
  %v249 = vld [vmem:[%s1 + $0x33c] sm:$0xf]
  %v250 = vld [vmem:[%s1 + $0x340] sm:$0xf]
  %v251 = vld [vmem:[%s1 + $0x344] sm:$0xf]
  %v252 = vld [vmem:[%s1 + $0x348] sm:$0xf]
  %v253 = vld [vmem:[%s1 + $0x34c] sm:$0xf]
  %v254 = vld [vmem:[%s1 + $0x350] sm:$0xf]
  %v255 = vld [vmem:[%s1 + $0x354] sm:$0xf]
  %v256 = vld [vmem:[%s1 + $0x358] sm:$0xf]
  %v257 = vld [vmem:[%s1 + $0x35c] sm:$0xf]
  %v258 = vld [vmem:[%s1 + $0x360] sm:$0xf]
  %v259 = vld [vmem:[%s1 + $0x364] sm:$0xf]
  %v260 = vld [vmem:[%s1 + $0x368] sm:$0xf]
  %v261 = vld [vmem:[%s1 + $0x36c] sm:$0xf]
  %v262 = vld [vmem:[%s1 + $0x370] sm:$0xf]
  %v263 = vld [vmem:[%s1 + $0x374] sm:$0xf]
  %v264 = vld [vmem:[%s1 + $0x378] sm:$0xf]
  %v265 = vld [vmem:[%s1 + $0x37c] sm:$0xf]
  %v266 = vld [vmem:[%s1 + $0x380] sm:$0xf]
  %v267 = vld [vmem:[%s1 + $0x384] sm:$0xf]
  %v268 = vld [vmem:[%s1 + $0x388] sm:$0xf]
  %v269 = vld [vmem:[%s1 + $0x38c] sm:$0xf]
  %v270 = vld [vmem:[%s1 + $0x390] sm:$0xf]
  %v271 = vld [vmem:[%s1 + $0x394] sm:$0xf]
  %v272 = vld [vmem:[%s1 + $0x398] sm:$0xf]
  %v273 = vld [vmem:[%s1 + $0x39c] sm:$0xf]
  %v274 = vld [vmem:[%s1 + $0x3a0] sm:$0xf]
  %v275 = vld [vmem:[%s1 + $0x3a4] sm:$0xf]
  %v276 = vld [vmem:[%s1 + $0x3a8] sm:$0xf]
  %v277 = vld [vmem:[%s1 + $0x3ac] sm:$0xf]
  %v278 = vld [vmem:[%s1 + $0x3b0] sm:$0xf]
  %v279 = vld [vmem:[%s1 + $0x3b4] sm:$0xf]
  %v280 = vld [vmem:[%s1 + $0x3b8] sm:$0xf]
  %v281 = vld [vmem:[%s1 + $0x3bc] sm:$0xf]
  %v282 = vld [vmem:[%s1 + $0x3c0] sm:$0xf]
  %v283 = vld [vmem:[%s1 + $0x3c4] sm:$0xf]
  %v284 = vld [vmem:[%s1 + $0x3c8] sm:$0xf]
  %v285 = vld [vmem:[%s1 + $0x3cc] sm:$0xf]
  %v286 = vld [vmem:[%s1 + $0x3d0] sm:$0xf]
  %v287 = vld [vmem:[%s1 + $0x3d4] sm:$0xf]
  %v288 = vld [vmem:[%s1 + $0x3d8] sm:$0xf]
  %v289 = vld [vmem:[%s1 + $0x3dc] sm:$0xf]
  %v290 = vld [vmem:[%s1 + $0x3e0] sm:$0xf]
  %v291 = vld [vmem:[%s1 + $0x3e4] sm:$0xf]
  %v292 = vld [vmem:[%s1 + $0x3e8] sm:$0xf]
  %v293 = vld [vmem:[%s1 + $0x3ec] sm:$0xf]
  %v294 = vld [vmem:[%s1 + $0x3f0] sm:$0xf]
  %v295 = vld [vmem:[%s1 + $0x3f4] sm:$0xf]
  %v296 = vld [vmem:[%s1 + $0x3f8] sm:$0xf]
  %v297 = vld [vmem:[%s1 + $0x3fc] sm:$0xf]
  %v298 = vld [vmem:[%s2] sm:$0x1]
  %v300 = vperm.slane %v298, 0
  %v318 = vunpack.c.l.b16 %v26
  %v319 = vunpack.c.h.b16 %v26
  %v320 = vunpack.c.l.b16 %v27
  %v321 = vunpack.c.h.b16 %v27
  %v322 = vunpack.c.l.b16 %v28
  %v323 = vunpack.c.h.b16 %v28
  %v324 = vunpack.c.l.b16 %v29
  %v325 = vunpack.c.h.b16 %v29
  %v326 = vunpack.c.l.b16 %v30
  %v327 = vunpack.c.h.b16 %v30
  %v328 = vunpack.c.l.b16 %v31
  %v329 = vunpack.c.h.b16 %v31
  %v330 = vunpack.c.l.b16 %v32
  %v331 = vunpack.c.h.b16 %v32
  %v332 = vunpack.c.l.b16 %v33
  %v333 = vunpack.c.h.b16 %v33
  %v334 = vunpack.c.l.b16 %v34
  %v335 = vunpack.c.h.b16 %v34
  %v336 = vunpack.c.l.b16 %v35
  %v337 = vunpack.c.h.b16 %v35
  %v338 = vunpack.c.l.b16 %v36
  %v339 = vunpack.c.h.b16 %v36
  %v340 = vunpack.c.l.b16 %v37
  %v341 = vunpack.c.h.b16 %v37
  %v342 = vunpack.c.l.b16 %v38
  %v343 = vunpack.c.h.b16 %v38
  %v344 = vunpack.c.l.b16 %v39
  %v345 = vunpack.c.h.b16 %v39
  %v346 = vunpack.c.l.b16 %v40
  %v347 = vunpack.c.h.b16 %v40
  %v348 = vunpack.c.l.b16 %v41
  %v349 = vunpack.c.h.b16 %v41
  %v350 = vpack.c.b16 %v334, %v318
  %v351 = vpack.c.b16 %v335, %v319
  %v352 = vpack.c.b16 %v336, %v320
  %v353 = vpack.c.b16 %v337, %v321
  %v354 = vpack.c.b16 %v338, %v322
  %v355 = vpack.c.b16 %v339, %v323
  %v356 = vpack.c.b16 %v340, %v324
  %v357 = vpack.c.b16 %v341, %v325
  %v358 = vpack.c.b16 %v342, %v326
  %v359 = vpack.c.b16 %v343, %v327
  %v360 = vpack.c.b16 %v344, %v328
  %v361 = vpack.c.b16 %v345, %v329
  %v362 = vpack.c.b16 %v346, %v330
  %v363 = vpack.c.b16 %v347, %v331
  %v364 = vpack.c.b16 %v348, %v332
  %v365 = vpack.c.b16 %v349, %v333
  %v638 = vunpack.c.l.b16 %v42
  %v639 = vunpack.c.l.b16 %v43
  %v640 = vunpack.c.l.b16 %v44
  %v641 = vunpack.c.l.b16 %v45
  %v642 = vunpack.c.l.b16 %v46
  %v643 = vunpack.c.l.b16 %v47
  %v644 = vunpack.c.l.b16 %v48
  %v645 = vunpack.c.l.b16 %v49
  %v646 = vunpack.c.l.b16 %v50
  %v647 = vunpack.c.l.b16 %v51
  %v648 = vunpack.c.l.b16 %v52
  %v649 = vunpack.c.l.b16 %v53
  %v650 = vunpack.c.l.b16 %v54
  %v651 = vunpack.c.l.b16 %v55
  %v652 = vunpack.c.l.b16 %v56
  %v653 = vunpack.c.l.b16 %v57
  %v654 = vunpack.c.l.b16 %v58
  %v655 = vunpack.c.l.b16 %v59
  %v656 = vunpack.c.l.b16 %v60
  %v657 = vunpack.c.l.b16 %v61
  %v658 = vunpack.c.l.b16 %v62
  %v659 = vunpack.c.l.b16 %v63
  %v660 = vunpack.c.l.b16 %v64
  %v661 = vunpack.c.l.b16 %v65
  %v662 = vunpack.c.l.b16 %v66
  %v663 = vunpack.c.l.b16 %v67
  %v664 = vunpack.c.l.b16 %v68
  %v665 = vunpack.c.l.b16 %v69
  %v666 = vunpack.c.l.b16 %v70
  %v667 = vunpack.c.l.b16 %v71
  %v668 = vunpack.c.l.b16 %v72
  %v669 = vunpack.c.l.b16 %v73
  %v670 = vunpack.c.l.b16 %v74
  %v671 = vunpack.c.l.b16 %v75
  %v672 = vunpack.c.l.b16 %v76
  %v673 = vunpack.c.l.b16 %v77
  %v674 = vunpack.c.l.b16 %v78
  %v675 = vunpack.c.l.b16 %v79
  %v676 = vunpack.c.l.b16 %v80
  %v677 = vunpack.c.l.b16 %v81
  %v678 = vunpack.c.l.b16 %v82
  %v679 = vunpack.c.l.b16 %v83
  %v680 = vunpack.c.l.b16 %v84
  %v681 = vunpack.c.l.b16 %v85
  %v682 = vunpack.c.l.b16 %v86
  %v683 = vunpack.c.l.b16 %v87
  %v684 = vunpack.c.l.b16 %v88
  %v685 = vunpack.c.l.b16 %v89
  %v686 = vunpack.c.l.b16 %v90
  %v687 = vunpack.c.l.b16 %v91
  %v688 = vunpack.c.l.b16 %v92
  %v689 = vunpack.c.l.b16 %v93
  %v690 = vunpack.c.l.b16 %v94
  %v691 = vunpack.c.l.b16 %v95
  %v692 = vunpack.c.l.b16 %v96
  %v693 = vunpack.c.l.b16 %v97
  %v694 = vunpack.c.l.b16 %v98
  %v695 = vunpack.c.l.b16 %v99
  %v696 = vunpack.c.l.b16 %v100
  %v697 = vunpack.c.l.b16 %v101
  %v698 = vunpack.c.l.b16 %v102
  %v699 = vunpack.c.l.b16 %v103
  %v700 = vunpack.c.l.b16 %v104
  %v701 = vunpack.c.l.b16 %v105
  %v702 = vunpack.c.l.b16 %v106
  %v703 = vunpack.c.l.b16 %v107
  %v704 = vunpack.c.l.b16 %v108
  %v705 = vunpack.c.l.b16 %v109
  %v706 = vunpack.c.l.b16 %v110
  %v707 = vunpack.c.l.b16 %v111
  %v708 = vunpack.c.l.b16 %v112
  %v709 = vunpack.c.l.b16 %v113
  %v710 = vunpack.c.l.b16 %v114
  %v711 = vunpack.c.l.b16 %v115
  %v712 = vunpack.c.l.b16 %v116
  %v713 = vunpack.c.l.b16 %v117
  %v714 = vunpack.c.l.b16 %v118
  %v715 = vunpack.c.l.b16 %v119
  %v716 = vunpack.c.l.b16 %v120
  %v717 = vunpack.c.l.b16 %v121
  %v718 = vunpack.c.l.b16 %v122
  %v719 = vunpack.c.l.b16 %v123
  %v720 = vunpack.c.l.b16 %v124
  %v721 = vunpack.c.l.b16 %v125
  %v722 = vunpack.c.l.b16 %v126
  %v723 = vunpack.c.l.b16 %v127
  %v724 = vunpack.c.l.b16 %v128
  %v725 = vunpack.c.l.b16 %v129
  %v726 = vunpack.c.l.b16 %v130
  %v727 = vunpack.c.l.b16 %v131
  %v728 = vunpack.c.l.b16 %v132
  %v729 = vunpack.c.l.b16 %v133
  %v730 = vunpack.c.l.b16 %v134
  %v731 = vunpack.c.l.b16 %v135
  %v732 = vunpack.c.l.b16 %v136
  %v733 = vunpack.c.l.b16 %v137
  %v734 = vunpack.c.l.b16 %v138
  %v735 = vunpack.c.l.b16 %v139
  %v736 = vunpack.c.l.b16 %v140
  %v737 = vunpack.c.l.b16 %v141
  %v738 = vunpack.c.l.b16 %v142
  %v739 = vunpack.c.l.b16 %v143
  %v740 = vunpack.c.l.b16 %v144
  %v741 = vunpack.c.l.b16 %v145
  %v742 = vunpack.c.l.b16 %v146
  %v743 = vunpack.c.l.b16 %v147
  %v744 = vunpack.c.l.b16 %v148
  %v745 = vunpack.c.l.b16 %v149
  %v746 = vunpack.c.l.b16 %v150
  %v747 = vunpack.c.l.b16 %v151
  %v748 = vunpack.c.l.b16 %v152
  %v749 = vunpack.c.l.b16 %v153
  %v750 = vunpack.c.l.b16 %v154
  %v751 = vunpack.c.l.b16 %v155
  %v752 = vunpack.c.l.b16 %v156
  %v753 = vunpack.c.l.b16 %v157
  %v754 = vunpack.c.l.b16 %v158
  %v755 = vunpack.c.l.b16 %v159
  %v756 = vunpack.c.l.b16 %v160
  %v757 = vunpack.c.l.b16 %v161
  %v758 = vunpack.c.l.b16 %v162
  %v759 = vunpack.c.l.b16 %v163
  %v760 = vunpack.c.l.b16 %v164
  %v761 = vunpack.c.l.b16 %v165
  %v762 = vunpack.c.l.b16 %v166
  %v763 = vunpack.c.l.b16 %v167
  %v764 = vunpack.c.l.b16 %v168
  %v765 = vunpack.c.l.b16 %v169
  %v766 = vunpack.c.l.b16 %v170
  %v767 = vunpack.c.l.b16 %v171
  %v768 = vunpack.c.l.b16 %v172
  %v769 = vunpack.c.l.b16 %v173
  %v770 = vunpack.c.l.b16 %v174
  %v771 = vunpack.c.l.b16 %v175
  %v772 = vunpack.c.l.b16 %v176
  %v773 = vunpack.c.l.b16 %v177
  %v774 = vunpack.c.l.b16 %v178
  %v775 = vunpack.c.l.b16 %v179
  %v776 = vunpack.c.l.b16 %v180
  %v777 = vunpack.c.l.b16 %v181
  %v778 = vunpack.c.l.b16 %v182
  %v779 = vunpack.c.l.b16 %v183
  %v780 = vunpack.c.l.b16 %v184
  %v781 = vunpack.c.l.b16 %v185
  %v782 = vunpack.c.l.b16 %v186
  %v783 = vunpack.c.l.b16 %v187
  %v784 = vunpack.c.l.b16 %v188
  %v785 = vunpack.c.l.b16 %v189
  %v786 = vunpack.c.l.b16 %v190
  %v787 = vunpack.c.l.b16 %v191
  %v788 = vunpack.c.l.b16 %v192
  %v789 = vunpack.c.l.b16 %v193
  %v790 = vunpack.c.l.b16 %v194
  %v791 = vunpack.c.l.b16 %v195
  %v792 = vunpack.c.l.b16 %v196
  %v793 = vunpack.c.l.b16 %v197
  %v794 = vunpack.c.l.b16 %v198
  %v795 = vunpack.c.l.b16 %v199
  %v796 = vunpack.c.l.b16 %v200
  %v797 = vunpack.c.l.b16 %v201
  %v798 = vunpack.c.l.b16 %v202
  %v799 = vunpack.c.l.b16 %v203
  %v800 = vunpack.c.l.b16 %v204
  %v801 = vunpack.c.l.b16 %v205
  %v802 = vunpack.c.l.b16 %v206
  %v803 = vunpack.c.l.b16 %v207
  %v804 = vunpack.c.l.b16 %v208
  %v805 = vunpack.c.l.b16 %v209
  %v806 = vunpack.c.l.b16 %v210
  %v807 = vunpack.c.l.b16 %v211
  %v808 = vunpack.c.l.b16 %v212
  %v809 = vunpack.c.l.b16 %v213
  %v810 = vunpack.c.l.b16 %v214
  %v811 = vunpack.c.l.b16 %v215
  %v812 = vunpack.c.l.b16 %v216
  %v813 = vunpack.c.l.b16 %v217
  %v814 = vunpack.c.l.b16 %v218
  %v815 = vunpack.c.l.b16 %v219
  %v816 = vunpack.c.l.b16 %v220
  %v817 = vunpack.c.l.b16 %v221
  %v818 = vunpack.c.l.b16 %v222
  %v819 = vunpack.c.l.b16 %v223
  %v820 = vunpack.c.l.b16 %v224
  %v821 = vunpack.c.l.b16 %v225
  %v822 = vunpack.c.l.b16 %v226
  %v823 = vunpack.c.l.b16 %v227
  %v824 = vunpack.c.l.b16 %v228
  %v825 = vunpack.c.l.b16 %v229
  %v826 = vunpack.c.l.b16 %v230
  %v827 = vunpack.c.l.b16 %v231
  %v828 = vunpack.c.l.b16 %v232
  %v829 = vunpack.c.l.b16 %v233
  %v830 = vunpack.c.l.b16 %v234
  %v831 = vunpack.c.l.b16 %v235
  %v832 = vunpack.c.l.b16 %v236
  %v833 = vunpack.c.l.b16 %v237
  %v834 = vunpack.c.l.b16 %v238
  %v835 = vunpack.c.l.b16 %v239
  %v836 = vunpack.c.l.b16 %v240
  %v837 = vunpack.c.l.b16 %v241
  %v838 = vunpack.c.l.b16 %v242
  %v839 = vunpack.c.l.b16 %v243
  %v840 = vunpack.c.l.b16 %v244
  %v841 = vunpack.c.l.b16 %v245
  %v842 = vunpack.c.l.b16 %v246
  %v843 = vunpack.c.l.b16 %v247
  %v844 = vunpack.c.l.b16 %v248
  %v845 = vunpack.c.l.b16 %v249
  %v846 = vunpack.c.l.b16 %v250
  %v847 = vunpack.c.l.b16 %v251
  %v848 = vunpack.c.l.b16 %v252
  %v849 = vunpack.c.l.b16 %v253
  %v850 = vunpack.c.l.b16 %v254
  %v851 = vunpack.c.l.b16 %v255
  %v852 = vunpack.c.l.b16 %v256
  %v853 = vunpack.c.l.b16 %v257
  %v854 = vunpack.c.l.b16 %v258
  %v855 = vunpack.c.l.b16 %v259
  %v856 = vunpack.c.l.b16 %v260
  %v857 = vunpack.c.l.b16 %v261
  %v858 = vunpack.c.l.b16 %v262
  %v859 = vunpack.c.l.b16 %v263
  %v860 = vunpack.c.l.b16 %v264
  %v861 = vunpack.c.l.b16 %v265
  %v862 = vunpack.c.l.b16 %v266
  %v863 = vunpack.c.l.b16 %v267
  %v864 = vunpack.c.l.b16 %v268
  %v865 = vunpack.c.l.b16 %v269
  %v866 = vunpack.c.l.b16 %v270
  %v867 = vunpack.c.l.b16 %v271
  %v868 = vunpack.c.l.b16 %v272
  %v869 = vunpack.c.l.b16 %v273
  %v870 = vunpack.c.l.b16 %v274
  %v871 = vunpack.c.l.b16 %v275
  %v872 = vunpack.c.l.b16 %v276
  %v873 = vunpack.c.l.b16 %v277
  %v874 = vunpack.c.l.b16 %v278
  %v875 = vunpack.c.l.b16 %v279
  %v876 = vunpack.c.l.b16 %v280
  %v877 = vunpack.c.l.b16 %v281
  %v878 = vunpack.c.l.b16 %v282
  %v879 = vunpack.c.l.b16 %v283
  %v880 = vunpack.c.l.b16 %v284
  %v881 = vunpack.c.l.b16 %v285
  %v882 = vunpack.c.l.b16 %v286
  %v883 = vunpack.c.l.b16 %v287
  %v884 = vunpack.c.l.b16 %v288
  %v885 = vunpack.c.l.b16 %v289
  %v886 = vunpack.c.l.b16 %v290
  %v887 = vunpack.c.l.b16 %v291
  %v888 = vunpack.c.l.b16 %v292
  %v889 = vunpack.c.l.b16 %v293
  %v890 = vunpack.c.l.b16 %v294
  %v891 = vunpack.c.l.b16 %v295
  %v892 = vunpack.c.l.b16 %v296
  %v893 = vunpack.c.l.b16 %v297
  %v894 = vpack.c.b16 %v639, %v638
  %v895 = vpack.c.b16 %v641, %v640
  %v896 = vpack.c.b16 %v643, %v642
  %v897 = vpack.c.b16 %v645, %v644
  %v898 = vpack.c.b16 %v647, %v646
  %v899 = vpack.c.b16 %v649, %v648
  %v900 = vpack.c.b16 %v651, %v650
  %v901 = vpack.c.b16 %v653, %v652
  %v902 = vpack.c.b16 %v655, %v654
  %v903 = vpack.c.b16 %v657, %v656
  %v904 = vpack.c.b16 %v659, %v658
  %v905 = vpack.c.b16 %v661, %v660
  %v906 = vpack.c.b16 %v663, %v662
  %v907 = vpack.c.b16 %v665, %v664
  %v908 = vpack.c.b16 %v667, %v666
  %v909 = vpack.c.b16 %v669, %v668
  %v910 = vpack.c.b16 %v671, %v670
  %v911 = vpack.c.b16 %v673, %v672
  %v912 = vpack.c.b16 %v675, %v674
  %v913 = vpack.c.b16 %v677, %v676
  %v914 = vpack.c.b16 %v679, %v678
  %v915 = vpack.c.b16 %v681, %v680
  %v916 = vpack.c.b16 %v683, %v682
  %v917 = vpack.c.b16 %v685, %v684
  %v918 = vpack.c.b16 %v687, %v686
  %v919 = vpack.c.b16 %v689, %v688
  %v920 = vpack.c.b16 %v691, %v690
  %v921 = vpack.c.b16 %v693, %v692
  %v922 = vpack.c.b16 %v695, %v694
  %v923 = vpack.c.b16 %v697, %v696
  %v924 = vpack.c.b16 %v699, %v698
  %v925 = vpack.c.b16 %v701, %v700
  %v926 = vpack.c.b16 %v703, %v702
  %v927 = vpack.c.b16 %v705, %v704
  %v928 = vpack.c.b16 %v707, %v706
  %v929 = vpack.c.b16 %v709, %v708
  %v930 = vpack.c.b16 %v711, %v710
  %v931 = vpack.c.b16 %v713, %v712
  %v932 = vpack.c.b16 %v715, %v714
  %v933 = vpack.c.b16 %v717, %v716
  %v934 = vpack.c.b16 %v719, %v718
  %v935 = vpack.c.b16 %v721, %v720
  %v936 = vpack.c.b16 %v723, %v722
  %v937 = vpack.c.b16 %v725, %v724
  %v938 = vpack.c.b16 %v727, %v726
  %v939 = vpack.c.b16 %v729, %v728
  %v940 = vpack.c.b16 %v731, %v730
  %v941 = vpack.c.b16 %v733, %v732
  %v942 = vpack.c.b16 %v735, %v734
  %v943 = vpack.c.b16 %v737, %v736
  %v944 = vpack.c.b16 %v739, %v738
  %v945 = vpack.c.b16 %v741, %v740
  %v946 = vpack.c.b16 %v743, %v742
  %v947 = vpack.c.b16 %v745, %v744
  %v948 = vpack.c.b16 %v747, %v746
  %v949 = vpack.c.b16 %v749, %v748
  %v950 = vpack.c.b16 %v751, %v750
  %v951 = vpack.c.b16 %v753, %v752
  %v952 = vpack.c.b16 %v755, %v754
  %v953 = vpack.c.b16 %v757, %v756
  %v954 = vpack.c.b16 %v759, %v758
  %v955 = vpack.c.b16 %v761, %v760
  %v956 = vpack.c.b16 %v763, %v762
  %v957 = vpack.c.b16 %v765, %v764
  %v958 = vpack.c.b16 %v767, %v766
  %v959 = vpack.c.b16 %v769, %v768
  %v960 = vpack.c.b16 %v771, %v770
  %v961 = vpack.c.b16 %v773, %v772
  %v962 = vpack.c.b16 %v775, %v774
  %v963 = vpack.c.b16 %v777, %v776
  %v964 = vpack.c.b16 %v779, %v778
  %v965 = vpack.c.b16 %v781, %v780
  %v966 = vpack.c.b16 %v783, %v782
  %v967 = vpack.c.b16 %v785, %v784
  %v968 = vpack.c.b16 %v787, %v786
  %v969 = vpack.c.b16 %v789, %v788
  %v970 = vpack.c.b16 %v791, %v790
  %v971 = vpack.c.b16 %v793, %v792
  %v972 = vpack.c.b16 %v795, %v794
  %v973 = vpack.c.b16 %v797, %v796
  %v974 = vpack.c.b16 %v799, %v798
  %v975 = vpack.c.b16 %v801, %v800
  %v976 = vpack.c.b16 %v803, %v802
  %v977 = vpack.c.b16 %v805, %v804
  %v978 = vpack.c.b16 %v807, %v806
  %v979 = vpack.c.b16 %v809, %v808
  %v980 = vpack.c.b16 %v811, %v810
  %v981 = vpack.c.b16 %v813, %v812
  %v982 = vpack.c.b16 %v815, %v814
  %v983 = vpack.c.b16 %v817, %v816
  %v984 = vpack.c.b16 %v819, %v818
  %v985 = vpack.c.b16 %v821, %v820
  %v986 = vpack.c.b16 %v823, %v822
  %v987 = vpack.c.b16 %v825, %v824
  %v988 = vpack.c.b16 %v827, %v826
  %v989 = vpack.c.b16 %v829, %v828
  %v990 = vpack.c.b16 %v831, %v830
  %v991 = vpack.c.b16 %v833, %v832
  %v992 = vpack.c.b16 %v835, %v834
  %v993 = vpack.c.b16 %v837, %v836
  %v994 = vpack.c.b16 %v839, %v838
  %v995 = vpack.c.b16 %v841, %v840
  %v996 = vpack.c.b16 %v843, %v842
  %v997 = vpack.c.b16 %v845, %v844
  %v998 = vpack.c.b16 %v847, %v846
  %v999 = vpack.c.b16 %v849, %v848
  %v1000 = vpack.c.b16 %v851, %v850
  %v1001 = vpack.c.b16 %v853, %v852
  %v1002 = vpack.c.b16 %v855, %v854
  %v1003 = vpack.c.b16 %v857, %v856
  %v1004 = vpack.c.b16 %v859, %v858
  %v1005 = vpack.c.b16 %v861, %v860
  %v1006 = vpack.c.b16 %v863, %v862
  %v1007 = vpack.c.b16 %v865, %v864
  %v1008 = vpack.c.b16 %v867, %v866
  %v1009 = vpack.c.b16 %v869, %v868
  %v1010 = vpack.c.b16 %v871, %v870
  %v1011 = vpack.c.b16 %v873, %v872
  %v1012 = vpack.c.b16 %v875, %v874
  %v1013 = vpack.c.b16 %v877, %v876
  %v1014 = vpack.c.b16 %v879, %v878
  %v1015 = vpack.c.b16 %v881, %v880
  %v1016 = vpack.c.b16 %v883, %v882
  %v1017 = vpack.c.b16 %v885, %v884
  %v1018 = vpack.c.b16 %v887, %v886
  %v1019 = vpack.c.b16 %v889, %v888
  %v1020 = vpack.c.b16 %v891, %v890
  %v1021 = vpack.c.b16 %v893, %v892
  %1150 = vmatpush.bf16.msra.mxu0 %v901
  %1151 = vmatpush.bf16.msra.mxu0 %v900
  %1152 = vmatpush.bf16.msra.mxu0 %v899
  %1153 = vmatpush.bf16.msra.mxu0 %v898
  %1154 = vmatpush.bf16.msra.mxu0 %v897
  %1155 = vmatpush.bf16.msra.mxu0 %v896
  %1156 = vmatpush.bf16.msra.mxu0 %v895
  %1157 = vmatpush.bf16.msra.mxu0 %v894
  %1158 = vmatmul.bf16.gmra.mxu0 %v350
  %v1159 = vpop.f32.mrf.mxu0
  %v1160 = vadd.f32 %v300, %v1159
  %v1161 = vpop.f32.mrf.mxu0
  %v1162 = vadd.f32 %v300, %v1161
  %1163 = vdwg.mxu0
  %1164 = vmatpush.bf16.msra.mxu0 %v909
  %1165 = vmatpush.bf16.msra.mxu0 %v908
  %1166 = vmatpush.bf16.msra.mxu0 %v907
  %1167 = vmatpush.bf16.msra.mxu0 %v906
  %1168 = vmatpush.bf16.msra.mxu0 %v905
  %1169 = vmatpush.bf16.msra.mxu0 %v904
  %1170 = vmatpush.bf16.msra.mxu0 %v903
  %1171 = vmatpush.bf16.msra.mxu0 %v902
  %1172 = vmatmul.bf16.gmra.mxu0 %v351
  %v1173 = vpop.f32.mrf.mxu0
  %v1174 = vadd.f32 %v1160, %v1173
  %v1175 = vpop.f32.mrf.mxu0
  %v1176 = vadd.f32 %v1162, %v1175
  %1177 = vdwg.mxu0
  %1178 = vmatpush.bf16.msra.mxu0 %v917
  %1179 = vmatpush.bf16.msra.mxu0 %v916
  %1180 = vmatpush.bf16.msra.mxu0 %v915
  %1181 = vmatpush.bf16.msra.mxu0 %v914
  %1182 = vmatpush.bf16.msra.mxu0 %v913
  %1183 = vmatpush.bf16.msra.mxu0 %v912
  %1184 = vmatpush.bf16.msra.mxu0 %v911
  %1185 = vmatpush.bf16.msra.mxu0 %v910
  %1186 = vmatmul.bf16.gmra.mxu0 %v352
  %v1187 = vpop.f32.mrf.mxu0
  %v1188 = vadd.f32 %v1174, %v1187
  %v1189 = vpop.f32.mrf.mxu0
  %v1190 = vadd.f32 %v1176, %v1189
  %1191 = vdwg.mxu0
  %1192 = vmatpush.bf16.msra.mxu0 %v925
  %1193 = vmatpush.bf16.msra.mxu0 %v924
  %1194 = vmatpush.bf16.msra.mxu0 %v923
  %1195 = vmatpush.bf16.msra.mxu0 %v922
  %1196 = vmatpush.bf16.msra.mxu0 %v921
  %1197 = vmatpush.bf16.msra.mxu0 %v920
  %1198 = vmatpush.bf16.msra.mxu0 %v919
  %1199 = vmatpush.bf16.msra.mxu0 %v918
  %1200 = vmatmul.bf16.gmra.mxu0 %v353
  %v1201 = vpop.f32.mrf.mxu0
  %v1202 = vadd.f32 %v1188, %v1201
  %v1203 = vpop.f32.mrf.mxu0
  %v1204 = vadd.f32 %v1190, %v1203
  %1205 = vdwg.mxu0
  %1206 = vmatpush.bf16.msra.mxu0 %v933
  %1207 = vmatpush.bf16.msra.mxu0 %v932
  %1208 = vmatpush.bf16.msra.mxu0 %v931
  %1209 = vmatpush.bf16.msra.mxu0 %v930
  %1210 = vmatpush.bf16.msra.mxu0 %v929
  %1211 = vmatpush.bf16.msra.mxu0 %v928
  %1212 = vmatpush.bf16.msra.mxu0 %v927
  %1213 = vmatpush.bf16.msra.mxu0 %v926
  %1214 = vmatmul.bf16.gmra.mxu0 %v354
  %v1215 = vpop.f32.mrf.mxu0
  %v1216 = vadd.f32 %v1202, %v1215
  %v1217 = vpop.f32.mrf.mxu0
  %v1218 = vadd.f32 %v1204, %v1217
  %1219 = vdwg.mxu0
  %1220 = vmatpush.bf16.msra.mxu0 %v941
  %1221 = vmatpush.bf16.msra.mxu0 %v940
  %1222 = vmatpush.bf16.msra.mxu0 %v939
  %1223 = vmatpush.bf16.msra.mxu0 %v938
  %1224 = vmatpush.bf16.msra.mxu0 %v937
  %1225 = vmatpush.bf16.msra.mxu0 %v936
  %1226 = vmatpush.bf16.msra.mxu0 %v935
  %1227 = vmatpush.bf16.msra.mxu0 %v934
  %1228 = vmatmul.bf16.gmra.mxu0 %v355
  %v1229 = vpop.f32.mrf.mxu0
  %v1230 = vadd.f32 %v1216, %v1229
  %v1231 = vpop.f32.mrf.mxu0
  %v1232 = vadd.f32 %v1218, %v1231
  %1233 = vdwg.mxu0
  %1234 = vmatpush.bf16.msra.mxu0 %v949
  %1235 = vmatpush.bf16.msra.mxu0 %v948
  %1236 = vmatpush.bf16.msra.mxu0 %v947
  %1237 = vmatpush.bf16.msra.mxu0 %v946
  %1238 = vmatpush.bf16.msra.mxu0 %v945
  %1239 = vmatpush.bf16.msra.mxu0 %v944
  %1240 = vmatpush.bf16.msra.mxu0 %v943
  %1241 = vmatpush.bf16.msra.mxu0 %v942
  %1242 = vmatmul.bf16.gmra.mxu0 %v356
  %v1243 = vpop.f32.mrf.mxu0
  %v1244 = vadd.f32 %v1230, %v1243
  %v1245 = vpop.f32.mrf.mxu0
  %v1246 = vadd.f32 %v1232, %v1245
  %1247 = vdwg.mxu0
  %1248 = vmatpush.bf16.msra.mxu0 %v957
  %1249 = vmatpush.bf16.msra.mxu0 %v956
  %1250 = vmatpush.bf16.msra.mxu0 %v955
  %1251 = vmatpush.bf16.msra.mxu0 %v954
  %1252 = vmatpush.bf16.msra.mxu0 %v953
  %1253 = vmatpush.bf16.msra.mxu0 %v952
  %1254 = vmatpush.bf16.msra.mxu0 %v951
  %1255 = vmatpush.bf16.msra.mxu0 %v950
  %1256 = vmatmul.bf16.gmra.mxu0 %v357
  %v1257 = vpop.f32.mrf.mxu0
  %v1258 = vadd.f32 %v1244, %v1257
  %v1259 = vpop.f32.mrf.mxu0
  %v1260 = vadd.f32 %v1246, %v1259
  %1261 = vdwg.mxu0
  %1262 = vmatpush.bf16.msra.mxu0 %v965
  %1263 = vmatpush.bf16.msra.mxu0 %v964
  %1264 = vmatpush.bf16.msra.mxu0 %v963
  %1265 = vmatpush.bf16.msra.mxu0 %v962
  %1266 = vmatpush.bf16.msra.mxu0 %v961
  %1267 = vmatpush.bf16.msra.mxu0 %v960
  %1268 = vmatpush.bf16.msra.mxu0 %v959
  %1269 = vmatpush.bf16.msra.mxu0 %v958
  %1270 = vmatmul.bf16.gmra.mxu0 %v358
  %v1271 = vpop.f32.mrf.mxu0
  %v1272 = vadd.f32 %v1258, %v1271
  %v1273 = vpop.f32.mrf.mxu0
  %v1274 = vadd.f32 %v1260, %v1273
  %1275 = vdwg.mxu0
  %1276 = vmatpush.bf16.msra.mxu0 %v973
  %1277 = vmatpush.bf16.msra.mxu0 %v972
  %1278 = vmatpush.bf16.msra.mxu0 %v971
  %1279 = vmatpush.bf16.msra.mxu0 %v970
  %1280 = vmatpush.bf16.msra.mxu0 %v969
  %1281 = vmatpush.bf16.msra.mxu0 %v968
  %1282 = vmatpush.bf16.msra.mxu0 %v967
  %1283 = vmatpush.bf16.msra.mxu0 %v966
  %1284 = vmatmul.bf16.gmra.mxu0 %v359
  %v1285 = vpop.f32.mrf.mxu0
  %v1286 = vadd.f32 %v1272, %v1285
  %v1287 = vpop.f32.mrf.mxu0
  %v1288 = vadd.f32 %v1274, %v1287
  %1289 = vdwg.mxu0
  %1290 = vmatpush.bf16.msra.mxu0 %v981
  %1291 = vmatpush.bf16.msra.mxu0 %v980
  %1292 = vmatpush.bf16.msra.mxu0 %v979
  %1293 = vmatpush.bf16.msra.mxu0 %v978
  %1294 = vmatpush.bf16.msra.mxu0 %v977
  %1295 = vmatpush.bf16.msra.mxu0 %v976
  %1296 = vmatpush.bf16.msra.mxu0 %v975
  %1297 = vmatpush.bf16.msra.mxu0 %v974
  %1298 = vmatmul.bf16.gmra.mxu0 %v360
  %v1299 = vpop.f32.mrf.mxu0
  %v1300 = vadd.f32 %v1286, %v1299
  %v1301 = vpop.f32.mrf.mxu0
  %v1302 = vadd.f32 %v1288, %v1301
  %1303 = vdwg.mxu0
  %1304 = vmatpush.bf16.msra.mxu0 %v989
  %1305 = vmatpush.bf16.msra.mxu0 %v988
  %1306 = vmatpush.bf16.msra.mxu0 %v987
  %1307 = vmatpush.bf16.msra.mxu0 %v986
  %1308 = vmatpush.bf16.msra.mxu0 %v985
  %1309 = vmatpush.bf16.msra.mxu0 %v984
  %1310 = vmatpush.bf16.msra.mxu0 %v983
  %1311 = vmatpush.bf16.msra.mxu0 %v982
  %1312 = vmatmul.bf16.gmra.mxu0 %v361
  %v1313 = vpop.f32.mrf.mxu0
  %v1314 = vadd.f32 %v1300, %v1313
  %v1315 = vpop.f32.mrf.mxu0
  %v1316 = vadd.f32 %v1302, %v1315
  %1317 = vdwg.mxu0
  %1318 = vmatpush.bf16.msra.mxu0 %v997
  %1319 = vmatpush.bf16.msra.mxu0 %v996
  %1320 = vmatpush.bf16.msra.mxu0 %v995
  %1321 = vmatpush.bf16.msra.mxu0 %v994
  %1322 = vmatpush.bf16.msra.mxu0 %v993
  %1323 = vmatpush.bf16.msra.mxu0 %v992
  %1324 = vmatpush.bf16.msra.mxu0 %v991
  %1325 = vmatpush.bf16.msra.mxu0 %v990
  %1326 = vmatmul.bf16.gmra.mxu0 %v362
  %v1327 = vpop.f32.mrf.mxu0
  %v1328 = vadd.f32 %v1314, %v1327
  %v1329 = vpop.f32.mrf.mxu0
  %v1330 = vadd.f32 %v1316, %v1329
  %1331 = vdwg.mxu0
  %1332 = vmatpush.bf16.msra.mxu0 %v1005
  %1333 = vmatpush.bf16.msra.mxu0 %v1004
  %1334 = vmatpush.bf16.msra.mxu0 %v1003
  %1335 = vmatpush.bf16.msra.mxu0 %v1002
  %1336 = vmatpush.bf16.msra.mxu0 %v1001
  %1337 = vmatpush.bf16.msra.mxu0 %v1000
  %1338 = vmatpush.bf16.msra.mxu0 %v999
  %1339 = vmatpush.bf16.msra.mxu0 %v998
  %1340 = vmatmul.bf16.gmra.mxu0 %v363
  %v1341 = vpop.f32.mrf.mxu0
  %v1342 = vadd.f32 %v1328, %v1341
  %v1343 = vpop.f32.mrf.mxu0
  %v1344 = vadd.f32 %v1330, %v1343
  %1345 = vdwg.mxu0
  %1346 = vmatpush.bf16.msra.mxu0 %v1013
  %1347 = vmatpush.bf16.msra.mxu0 %v1012
  %1348 = vmatpush.bf16.msra.mxu0 %v1011
  %1349 = vmatpush.bf16.msra.mxu0 %v1010
  %1350 = vmatpush.bf16.msra.mxu0 %v1009
  %1351 = vmatpush.bf16.msra.mxu0 %v1008
  %1352 = vmatpush.bf16.msra.mxu0 %v1007
  %1353 = vmatpush.bf16.msra.mxu0 %v1006
  %1354 = vmatmul.bf16.gmra.mxu0 %v364
  %v1355 = vpop.f32.mrf.mxu0
  %v1356 = vadd.f32 %v1342, %v1355
  %v1357 = vpop.f32.mrf.mxu0
  %v1358 = vadd.f32 %v1344, %v1357
  %1359 = vdwg.mxu0
  %1360 = vmatpush.bf16.msra.mxu0 %v1021
  %1361 = vmatpush.bf16.msra.mxu0 %v1020
  %1362 = vmatpush.bf16.msra.mxu0 %v1019
  %1363 = vmatpush.bf16.msra.mxu0 %v1018
  %1364 = vmatpush.bf16.msra.mxu0 %v1017
  %1365 = vmatpush.bf16.msra.mxu0 %v1016
  %1366 = vmatpush.bf16.msra.mxu0 %v1015
  %1367 = vmatpush.bf16.msra.mxu0 %v1014
  %1368 = vmatmul.bf16.gmra.mxu0 %v365
  %v1369 = vpop.f32.mrf.mxu0
  %v1370 = vadd.f32 %v1356, %v1369
  %v1371 = vpop.f32.mrf.mxu0
  %v1372 = vadd.f32 %v1358, %v1371
  %1373 = vdwg.mxu0
  %v1374 = vmax.f32 %v1370, 0.0
  %v1375 = vmax.f32 %v1372, 0.0
  %v1376 = vpack.c.bf16 %v1375, %v1374
  %v1377 = vld [vmem:[%s3] sm:$0xf]
  %v1378 = vld [vmem:[%s3 + $0x4] sm:$0xf]
  %v1379 = vld [vmem:[%s3 + $0x8] sm:$0xf]
  %v1380 = vld [vmem:[%s3 + $0xc] sm:$0xf]
  %v1381 = vld [vmem:[%s3 + $0x10] sm:$0xf]
  %v1382 = vld [vmem:[%s3 + $0x14] sm:$0xf]
  %v1383 = vld [vmem:[%s3 + $0x18] sm:$0xf]
  %v1384 = vld [vmem:[%s3 + $0x1c] sm:$0xf]
  %v1385 = vld [vmem:[%s3 + $0x20] sm:$0xf]
  %v1386 = vld [vmem:[%s3 + $0x24] sm:$0xf]
  %v1387 = vld [vmem:[%s3 + $0x28] sm:$0xf]
  %v1388 = vld [vmem:[%s3 + $0x2c] sm:$0xf]
  %v1389 = vld [vmem:[%s3 + $0x30] sm:$0xf]
  %v1390 = vld [vmem:[%s3 + $0x34] sm:$0xf]
  %v1391 = vld [vmem:[%s3 + $0x38] sm:$0xf]
  %v1392 = vld [vmem:[%s3 + $0x3c] sm:$0xf]
  %v1393 = vld [vmem:[%s4] sm:$0x1]
  %v1395 = vperm.slane %v1393, 0
  %v1413 = vunpack.c.l.b16 %v1377
  %v1414 = vunpack.c.l.b16 %v1378
  %v1415 = vunpack.c.l.b16 %v1379
  %v1416 = vunpack.c.l.b16 %v1380
  %v1417 = vunpack.c.l.b16 %v1381
  %v1418 = vunpack.c.l.b16 %v1382
  %v1419 = vunpack.c.l.b16 %v1383
  %v1420 = vunpack.c.l.b16 %v1384
  %v1421 = vunpack.c.l.b16 %v1385
  %v1422 = vunpack.c.l.b16 %v1386
  %v1423 = vunpack.c.l.b16 %v1387
  %v1424 = vunpack.c.l.b16 %v1388
  %v1425 = vunpack.c.l.b16 %v1389
  %v1426 = vunpack.c.l.b16 %v1390
  %v1427 = vunpack.c.l.b16 %v1391
  %v1428 = vunpack.c.l.b16 %v1392
  %v1429 = vpack.c.b16 %v1414, %v1413
  %v1430 = vpack.c.b16 %v1416, %v1415
  %v1431 = vpack.c.b16 %v1418, %v1417
  %v1432 = vpack.c.b16 %v1420, %v1419
  %v1433 = vpack.c.b16 %v1422, %v1421
  %v1434 = vpack.c.b16 %v1424, %v1423
  %v1435 = vpack.c.b16 %v1426, %v1425
  %v1436 = vpack.c.b16 %v1428, %v1427
  %1445 = vmatpush.bf16.msra.mxu0 %v1436
  %1446 = vmatpush.bf16.msra.mxu0 %v1435
  %1447 = vmatpush.bf16.msra.mxu0 %v1434
  %1448 = vmatpush.bf16.msra.mxu0 %v1433
  %1449 = vmatpush.bf16.msra.mxu0 %v1432
  %1450 = vmatpush.bf16.msra.mxu0 %v1431
  %1451 = vmatpush.bf16.msra.mxu0 %v1430
  %1452 = vmatpush.bf16.msra.mxu0 %v1429
  %1453 = vmatmul.bf16.gmra.mxu0 %v1376
  %v1454 = vpop.f32.mrf.mxu0
  %v1455 = vadd.f32 %v1395, %v1454
  %v1456 = vpop.f32.mrf.mxu0
  %v1457 = vadd.f32 %v1395, %v1456
  %1458 = vdwg.mxu0
  %v1459 = vmax.f32 %v1455, 0.0
  %v1460 = vmax.f32 %v1457, 0.0
  %v1461 = vpack.c.bf16 %v1460, %v1459
  %v1462 = vld [vmem:[%s5] sm:$0xf]
  %v1463 = vld [vmem:[%s5 + $0x4] sm:$0xf]
  %v1464 = vld [vmem:[%s5 + $0x8] sm:$0xf]
  %v1465 = vld [vmem:[%s5 + $0xc] sm:$0xf]
  %v1466 = vld [vmem:[%s5 + $0x10] sm:$0xf]
  %v1467 = vld [vmem:[%s5 + $0x14] sm:$0xf]
  %v1468 = vld [vmem:[%s5 + $0x18] sm:$0xf]
  %v1469 = vld [vmem:[%s5 + $0x1c] sm:$0xf]
  %v1470 = vld [vmem:[%s5 + $0x20] sm:$0xf]
  %v1471 = vld [vmem:[%s5 + $0x24] sm:$0xf]
  %v1472 = vld [vmem:[%s5 + $0x28] sm:$0xf]
  %v1473 = vld [vmem:[%s5 + $0x2c] sm:$0xf]
  %v1474 = vld [vmem:[%s5 + $0x30] sm:$0xf]
  %v1475 = vld [vmem:[%s5 + $0x34] sm:$0xf]
  %v1476 = vld [vmem:[%s5 + $0x38] sm:$0xf]
  %v1477 = vld [vmem:[%s5 + $0x3c] sm:$0xf]
  %v1478 = vld [vmem:[%s6] sm:$0x1]
  %v1480 = vperm.slane %v1478, 0
  %v1498 = vunpack.c.l.b16 %v1462
  %v1499 = vunpack.c.l.b16 %v1463
  %v1500 = vunpack.c.l.b16 %v1464
  %v1501 = vunpack.c.l.b16 %v1465
  %v1502 = vunpack.c.l.b16 %v1466
  %v1503 = vunpack.c.l.b16 %v1467
  %v1504 = vunpack.c.l.b16 %v1468
  %v1505 = vunpack.c.l.b16 %v1469
  %v1506 = vunpack.c.l.b16 %v1470
  %v1507 = vunpack.c.l.b16 %v1471
  %v1508 = vunpack.c.l.b16 %v1472
  %v1509 = vunpack.c.l.b16 %v1473
  %v1510 = vunpack.c.l.b16 %v1474
  %v1511 = vunpack.c.l.b16 %v1475
  %v1512 = vunpack.c.l.b16 %v1476
  %v1513 = vunpack.c.l.b16 %v1477
  %v1514 = vpack.c.b16 %v1499, %v1498
  %v1515 = vpack.c.b16 %v1501, %v1500
  %v1516 = vpack.c.b16 %v1503, %v1502
  %v1517 = vpack.c.b16 %v1505, %v1504
  %v1518 = vpack.c.b16 %v1507, %v1506
  %v1519 = vpack.c.b16 %v1509, %v1508
  %v1520 = vpack.c.b16 %v1511, %v1510
  %v1521 = vpack.c.b16 %v1513, %v1512
  %1530 = vmatpush.bf16.msra.mxu0 %v1521
  %1531 = vmatpush.bf16.msra.mxu0 %v1520
  %1532 = vmatpush.bf16.msra.mxu0 %v1519
  %1533 = vmatpush.bf16.msra.mxu0 %v1518
  %1534 = vmatpush.bf16.msra.mxu0 %v1517
  %1535 = vmatpush.bf16.msra.mxu0 %v1516
  %1536 = vmatpush.bf16.msra.mxu0 %v1515
  %1537 = vmatpush.bf16.msra.mxu0 %v1514
  %1538 = vmatmul.bf16.gmra.mxu0 %v1461
  %v1539 = vpop.f32.mrf.mxu0
  %v1540 = vadd.f32 %v1480, %v1539
  %v1541 = vpop.f32.mrf.mxu0
  %v1542 = vadd.f32 %v1480, %v1541
  %1543 = vdwg.mxu0
  %1544 = vst [vmem:[%s7] sm:$0xff] %v1540
  %1545 = vst [vmem:[%s7 + $0x8] sm:$0xff] %v1542
  // Predicated region
  $region30: #{cust_lenet_forward.5} parent=0 // pred_check
    _
  $region31: #{cust_lenet_forward.5} parent=0 // pred_check_branch
    %1547 = sbr.rel (0) target = $region33
  $region32: #{cust_lenet_forward.5} parent=0 // pred_region
    _
  $region33: #{cust_lenet_forward.5} parent=0 // pred_fallthru
    _
  // Predicated region
  $region34: #{cust_lenet_forward.5} parent=0 // pred_check
    _
  $region35: #{cust_lenet_forward.5} parent=0 // pred_check_branch
    %1549 = sbr.rel (0) target = $region37
  $region36: #{cust_lenet_forward.5} parent=0 // pred_region
    _
  $region37: #{cust_lenet_forward.5} parent=0 // pred_fallthru
    _

</llo_original>
